<compile_context>
chip_gen: v7x
topology: tpu7x:2x2x1
jax: 0.10.0
libtpu: 0.0.40
codegen_flags: <defaults>
</compile_context>

<pallas_src>
import math

import jax
import jax.numpy as jnp
from jax.experimental import pallas as pl
from jax.experimental.pallas import tpu as pltpu

# ---- small synthetic config (real DNABERT-2: H=768, 12 heads, 12 layers, FFN=3072) ----
VOCAB = 32
SEQ = 16
HIDDEN = 128                      # lane-dense (multiple of 128)
N_HEADS = 2
HEAD_DIM = HIDDEN // N_HEADS      # 64 — same head_dim as the real model
FFN = 4 * HIDDEN
N_LAYERS = 2
BLOCK_B = 4                       # batch rows folded into each grid step (M = BLOCK_B*SEQ)


def _vmem_limit_bytes():
    """Generation-aware VMEM ceiling: ~3/4 of physical, capped at 100 MiB."""
    try:
        cap = pltpu.get_tpu_info().vmem_capacity_bytes
    except Exception:            # noqa: BLE001 — fall back to a safe universal value
        cap = 64 * 1024 * 1024
    return min(int(cap * 3 // 4), 100 * 1024 * 1024)


# ----------------------------- fused encoder kernel --------------------------
def _make_encoder_kernel(bt, pooling):
    """bt: batch rows per grid step; pooling: 'mean' | 'max'."""

    def kernel(x_ref, alibi_ref,
               w_qkv, b_qkv, wo, bo, g1, be1, w1, bf1, w2, bf2, g2, be2,
               out_ref, pool_ref):
        l = pl.program_id(1)
        n_layers = pl.num_programs(1)

        # Hidden-state carry lives in the constant-index output block across the
        # inner ("arbitrary") layer axis: initialize from the embeddings on layer 0.
        @pl.when(l == 0)
        def _():
            out_ref[...] = x_ref[...]

        x2 = out_ref[...].reshape(bt * SEQ, HIDDEN)           # [M, H] f32
        xm = x2.astype(jnp.bfloat16)

        # ---- fused QKV: ONE lane-dense [M, 3H] matmul (1/sqrt(dh) folded into Wq) ----
        qkv = jnp.dot(xm, w_qkv[0], preferred_element_type=jnp.float32) + b_qkv[0]
        qkv = qkv.reshape(bt, SEQ, 3 * HIDDEN)                # leading-dim split only

        # ---- per-head ALiBi attention (static unroll; heads are lane views of qkv) ----
        alibi = alibi_ref[...]                                # [n_heads, S, S] f32
        ctx_heads = []
        for h in range(N_HEADS):
            qo = h * HEAD_DIM
            ko = HIDDEN + h * HEAD_DIM
            vo = 2 * HIDDEN + h * HEAD_DIM
            q_h = qkv[:, :, qo:qo + HEAD_DIM].astype(jnp.bfloat16)   # [bt, S, dh]
            k_h = qkv[:, :, ko:ko + HEAD_DIM].astype(jnp.bfloat16)
            v_h = qkv[:, :, vo:vo + HEAD_DIM].astype(jnp.bfloat16)
            s = jnp.einsum('bqd,bkd->bqk', q_h, k_h,
                           preferred_element_type=jnp.float32)       # scale already in Wq
            s = s + alibi[h][None]
            s = s - jnp.max(s, axis=-1, keepdims=True)
            p = jnp.exp(s)
            # approx reciprocal -> EUP slot (near-free); ~1e-3 rel error vs exact softmax.
            p = p * pl.reciprocal(jnp.sum(p, axis=-1, keepdims=True), approx=True)
            ctx_heads.append(
                jnp.einsum('bqk,bkd->bqd', p.astype(jnp.bfloat16), v_h,
                           preferred_element_type=jnp.float32))
        ctx = jnp.concatenate(ctx_heads, axis=-1)             # [bt, S, H]

        # ---- output projection: ONE [M,H] @ [H,H] dot (K = H = 128) ----
        attn = jnp.dot(ctx.reshape(bt * SEQ, HIDDEN).astype(jnp.bfloat16), wo[0],
                       preferred_element_type=jnp.float32) + bo[0]

        def layernorm(y, gamma, beta):
            mu = jnp.mean(y, axis=-1, keepdims=True)
            var = jnp.mean((y - mu) ** 2, axis=-1, keepdims=True)
            return (y - mu) * jax.lax.rsqrt(var + 1e-12) * gamma + beta

        h1 = layernorm(x2 + attn, g1[0], be1[0])              # f32 (v5e: no bf16 VPU)

        # ---- FFN: two lane-dense dots over all M = bt*SEQ rows ----
        ff = jnp.dot(h1.astype(jnp.bfloat16), w1[0],
                     preferred_element_type=jnp.float32) + bf1[0]
        # TODO(synk): HF DNABERT-2 uses exact erf GELU; tanh approximation used here.
        ff = jax.nn.gelu(ff, approximate=True)
        ff = jnp.dot(ff.astype(jnp.bfloat16), w2[0],
                     preferred_element_type=jnp.float32) + bf2[0]

        out2 = layernorm(h1 + ff, g2[0], be2[0])              # [M, H] f32
        out3 = out2.reshape(bt, SEQ, HIDDEN)
        out_ref[...] = out3                                   # layer carry / final states

        # ---- pooling fused into the last layer's epilogue (no extra HBM round-trip) ----
        @pl.when(l == n_layers - 1)
        def _():
            # TODO(synk): no padding mask — real model pools only non-pad tokens.
            if pooling == "mean":
                pool_ref[...] = jnp.mean(out3, axis=1, keepdims=True)
            else:
                pool_ref[...] = jnp.max(out3, axis=1, keepdims=True)

    return kernel


def encoder_forward(x, alibi, layer_params, pooling="mean", block_batch=BLOCK_B):
    """x: [B,S,H] f32 embeddings; alibi: [n_heads,S,S]; layer_params: 12 stacked arrays."""
    B, S, H = x.shape
    bt = min(block_batch, B)
    assert B % bt == 0, "batch must be divisible by the batch block"
    n_layers = layer_params[0].shape[0]

    in_specs = [
        pl.BlockSpec((bt, S, H), lambda b, l: (b, 0, 0)),       # x: constant over layer axis
        pl.BlockSpec(alibi.shape, lambda b, l: (0, 0, 0)),      # ALiBi: constant block
    ]
    for p in layer_params:                                      # per-layer weights: stream by l
        in_specs.append(pl.BlockSpec(
            (1,) + p.shape[1:],
            lambda b, l, _nd=p.ndim: (l,) + (0,) * (_nd - 1)))

    out_shape = [jax.ShapeDtypeStruct((B, S, H), jnp.float32),
                 jax.ShapeDtypeStruct((B, 1, H), jnp.float32)]
    out_specs = [pl.BlockSpec((bt, S, H), lambda b, l: (b, 0, 0)),
                 pl.BlockSpec((bt, 1, H), lambda b, l: (b, 0, 0))]

    states, pooled = pl.pallas_call(
        _make_encoder_kernel(bt, pooling),
        out_shape=out_shape,
        grid=(B // bt, n_layers),                               # layers = inner reduction axis
        in_specs=in_specs,
        out_specs=out_specs,
        compiler_params=pltpu.CompilerParams(
            dimension_semantics=("parallel", "arbitrary"),      # v7x: batch blocks split over 2 TCs
            vmem_limit_bytes=_vmem_limit_bytes()),
    )(x, alibi, *layer_params)

    return states, pooled[:, 0, :]


# ------------------------------ parameter setup -------------------------------
def _init_layer_params(key):
    ks = jax.random.split(key, 6)
    std = 0.02

    def w(k, shape):
        return std * jax.random.normal(k, shape, jnp.float32)

    # Fused QKV weight kept 2-D [H, 3H] (nn.Linear [in,out] layout; columns are
    # naturally head-major / head_dim-minor).  1/sqrt(head_dim) folded into Wq / bq.
    # NOTE: real HF DNABERT-2 checkpoints store Linear weights as [out, in] (and a
    # fused Wqkv of shape [3H, H]) — transpose before packing when loading them.
    scale = 1.0 / math.sqrt(HEAD_DIM)
    wq = w(ks[0], (HIDDEN, HIDDEN)) * scale
    wk = w(ks[1], (HIDDEN, HIDDEN))
    wv = w(ks[2], (HIDDEN, HIDDEN))
    w_qkv = jnp.concatenate([wq, wk, wv], axis=1).astype(jnp.bfloat16)   # [H, 3H]
    bq = jnp.zeros((HIDDEN,), jnp.float32) * scale
    bk = jnp.zeros((HIDDEN,), jnp.float32)
    bv = jnp.zeros((HIDDEN,), jnp.float32)
    b_qkv = jnp.concatenate([bq, bk, bv])[None, :]                       # [1, 3H] f32

    wo = w(ks[3], (HIDDEN, HIDDEN)).astype(jnp.bfloat16)                 # [H, H]
    bo = jnp.zeros((1, HIDDEN), jnp.float32)

    g1 = jnp.ones((1, HIDDEN), jnp.float32)
    be1 = jnp.zeros((1, HIDDEN), jnp.float32)
    w1 = w(ks[4], (HIDDEN, FFN)).astype(jnp.bfloat16)
    bf1 = jnp.zeros((1, FFN), jnp.float32)
    w2 = w(ks[5], (FFN, HIDDEN)).astype(jnp.bfloat16)
    bf2 = jnp.zeros((1, HIDDEN), jnp.float32)
    g2 = jnp.ones((1, HIDDEN), jnp.float32)
    be2 = jnp.zeros((1, HIDDEN), jnp.float32)
    return [w_qkv, b_qkv, wo, bo, g1, be1, w1, bf1, w2, bf2, g2, be2]


def _make_alibi_bias(n_heads, seq):
    """bias[h, i, j] = -slope_h * |i - j| (symmetric ALiBi, DNA-BERT2 style)."""
    pos = jnp.arange(seq, dtype=jnp.float32)
    dist = jnp.abs(pos[:, None] - pos[None, :])                          # [S, S]
    slopes = 2.0 ** (-8.0 * jnp.arange(1, n_heads + 1, dtype=jnp.float32) / n_heads)
    return -slopes[:, None, None] * dist[None]                           # [n_heads, S, S]


def init_dnabert2_params(key):
    keys = jax.random.split(key, N_LAYERS + 1)
    emb = 0.02 * jax.random.normal(keys[0], (VOCAB, HIDDEN), jnp.float32)
    per_layer = [_init_layer_params(keys[i + 1]) for i in range(N_LAYERS)]
    # Stack each of the 12 parameter arrays with a leading layer axis so the single
    # fused pallas_call can stream layer l's weights via its index_map.
    stacked = [jnp.stack([lp[j] for lp in per_layer], axis=0)
               for j in range(len(per_layer[0]))]
    alibi = _make_alibi_bias(N_HEADS, SEQ)            # hoisted out of the kernel
    return {"embedding": emb, "layers": stacked, "alibi": alibi}


# --------------------------------- forward ------------------------------------
def dnabert2_forward(input_ids, params, pooling="mean"):
    """input_ids: [B, S] int32 -> {'embedding_dna': [B,H], 'dna_states': [B,S,H]}."""
    # TODO(synk): HF AutoTokenizer (string -> input_ids) has no Pallas equivalent.
    x = jnp.take(params["embedding"], input_ids, axis=0)   # glue: embedding lookup
    states, pooled = encoder_forward(x, params["alibi"], params["layers"],
                                     pooling=pooling)
    return {"embedding_dna": pooled, "dna_states": states}


if __name__ == "__main__":
    key = jax.random.PRNGKey(0)
    k_ids, k_params = jax.random.split(key)

    batch = 8
    input_ids = jax.random.randint(k_ids, (batch, SEQ), 0, VOCAB, dtype=jnp.int32)
    params = init_dnabert2_params(k_params)

    out = dnabert2_forward(input_ids, params, pooling="mean")
    jax.block_until_ready(out["embedding_dna"])
    jax.block_until_ready(out["dna_states"])

    assert out["dna_states"].shape == (batch, SEQ, HIDDEN)
    assert out["embedding_dna"].shape == (batch, HIDDEN)
    print("KERNEL_OK")
</pallas_src>

<mosaic_0001>
module attributes {stable_mosaic.version = 11 : i64} {
  func.func @kernel(%arg0: i32, %arg1: i32, %arg2: memref<4x16x128xf32, #tpu.memory_space<vmem>>, %arg3: memref<2x16x16xf32, #tpu.memory_space<vmem>>, %arg4: memref<1x128x384xbf16, #tpu.memory_space<vmem>>, %arg5: memref<1x1x384xf32, #tpu.memory_space<vmem>>, %arg6: memref<1x128x128xbf16, #tpu.memory_space<vmem>>, %arg7: memref<1x1x128xf32, #tpu.memory_space<vmem>>, %arg8: memref<1x1x128xf32, #tpu.memory_space<vmem>>, %arg9: memref<1x1x128xf32, #tpu.memory_space<vmem>>, %arg10: memref<1x128x512xbf16, #tpu.memory_space<vmem>>, %arg11: memref<1x1x512xf32, #tpu.memory_space<vmem>>, %arg12: memref<1x512x128xbf16, #tpu.memory_space<vmem>>, %arg13: memref<1x1x128xf32, #tpu.memory_space<vmem>>, %arg14: memref<1x1x128xf32, #tpu.memory_space<vmem>>, %arg15: memref<1x1x128xf32, #tpu.memory_space<vmem>>, %arg16: memref<4x16x128xf32, #tpu.memory_space<vmem>>, %arg17: memref<4x1x128xf32, #tpu.memory_space<vmem>>) attributes {dimension_semantics = [#tpu.dimension_semantics<parallel>, #tpu.dimension_semantics<arbitrary>], iteration_bounds = array<i64: 2, 2>, scalar_prefetch = 0 : i64, scratch_operands = 0 : i64, tpu.core_type = #tpu.core_type<tc>, window_params = [{transform_indices = @transform_0, window_bounds = array<i64: 4, 16, 128>}, {pipeline_mode = #tpu.pipeline_mode<synchronous>, transform_indices = @transform_1, window_bounds = array<i64: 2, 16, 16>}, {transform_indices = @transform_2, window_bounds = array<i64: 1, 128, 384>}, {transform_indices = @transform_3, window_bounds = array<i64: 1, 1, 384>}, {transform_indices = @transform_4, window_bounds = array<i64: 1, 128, 128>}, {transform_indices = @transform_5, window_bounds = array<i64: 1, 1, 128>}, {transform_indices = @transform_6, window_bounds = array<i64: 1, 1, 128>}, {transform_indices = @transform_7, window_bounds = array<i64: 1, 1, 128>}, {transform_indices = @transform_8, window_bounds = array<i64: 1, 128, 512>}, {transform_indices = @transform_9, window_bounds = array<i64: 1, 1, 512>}, {transform_indices = @transform_10, window_bounds = array<i64: 1, 512, 128>}, {transform_indices = @transform_11, window_bounds = array<i64: 1, 1, 128>}, {transform_indices = @transform_12, window_bounds = array<i64: 1, 1, 128>}, {transform_indices = @transform_13, window_bounds = array<i64: 1, 1, 128>}, {transform_indices = @transform_14, window_bounds = array<i64: 4, 16, 128>}, {transform_indices = @transform_15, window_bounds = array<i64: 4, 1, 128>}]} {
    %c0_i32 = arith.constant 0 : i32
    %0 = arith.cmpi eq, %arg1, %c0_i32 : i32
    %1 = arith.extui %0 : i1 to i32
    %c0_i32_0 = arith.constant 0 : i32
    %2 = arith.cmpi ne, %1, %c0_i32_0 : i32
    scf.if %2 {
      %c0_71 = arith.constant 0 : index
      %c0_72 = arith.constant 0 : index
      %c0_73 = arith.constant 0 : index
      %161 = vector.load %arg2[%c0_71, %c0_72, %c0_73] : memref<4x16x128xf32, #tpu.memory_space<vmem>>, vector<4x16x128xf32>
      %c0_74 = arith.constant 0 : index
      %c0_75 = arith.constant 0 : index
      %c0_76 = arith.constant 0 : index
      %162 = vector.load %arg16[%c0_74, %c0_75, %c0_76] : memref<4x16x128xf32, #tpu.memory_space<vmem>>, vector<4x16x128xf32>
      tpu.vector_store %arg16[%c0_74, %c0_75, %c0_76], %161 {strides = array<i32>} : memref<4x16x128xf32, #tpu.memory_space<vmem>>, vector<4x16x128xf32>,
    } else {
    }
    %c0 = arith.constant 0 : index
    %c0_1 = arith.constant 0 : index
    %c0_2 = arith.constant 0 : index
    %3 = vector.load %arg16[%c0, %c0_1, %c0_2] : memref<4x16x128xf32, #tpu.memory_space<vmem>>, vector<4x16x128xf32>
    %4 = vector.shape_cast %3 : vector<4x16x128xf32> to vector<64x128xf32>
    %5 = arith.truncf %4 : vector<64x128xf32> to vector<64x128xbf16>
    %c0_3 = arith.constant 0 : index
    %c0_4 = arith.constant 0 : index
    %c0_5 = arith.constant 0 : index
    %6 = vector.load %arg4[%c0_3, %c0_4, %c0_5] : memref<1x128x384xbf16, #tpu.memory_space<vmem>>, vector<1x128x384xbf16>
    %7 = vector.shape_cast %6 : vector<1x128x384xbf16> to vector<128x384xbf16>
    %cst = arith.constant dense<0.000000e+00> : vector<64x384xf32>
    %8 = tpu.matmul %5, %7, %cst {dimension_numbers = #tpu.dot_dimension_numbers<[1], [0], [0], [1], [0, 0, 1, 1], [], []>} : vector<64x128xbf16>, vector<128x384xbf16>, vector<64x384xf32> -> vector<64x384xf32>
    %c0_6 = arith.constant 0 : index
    %c0_7 = arith.constant 0 : index
    %c0_8 = arith.constant 0 : index
    %9 = vector.load %arg5[%c0_6, %c0_7, %c0_8] : memref<1x1x384xf32, #tpu.memory_space<vmem>>, vector<1x1x384xf32>
    %10 = vector.shape_cast %9 : vector<1x1x384xf32> to vector<1x384xf32>
    %11 = vector.broadcast %10 : vector<1x384xf32> to vector<64x384xf32>
    %12 = arith.addf %8, %11 : vector<64x384xf32>
    %13 = vector.shape_cast %12 : vector<64x384xf32> to vector<4x16x384xf32>
    %c0_9 = arith.constant 0 : index
    %c0_10 = arith.constant 0 : index
    %c0_11 = arith.constant 0 : index
    %14 = vector.load %arg3[%c0_9, %c0_10, %c0_11] : memref<2x16x16xf32, #tpu.memory_space<vmem>>, vector<2x16x16xf32>
    %15 = vector.extract_strided_slice %13 {offsets = [0, 0, 0], sizes = [4, 16, 64], strides = [1, 1, 1]} : vector<4x16x384xf32> to vector<4x16x64xf32>
    %16 = arith.truncf %15 : vector<4x16x64xf32> to vector<4x16x64xbf16>
    %17 = vector.extract_strided_slice %13 {offsets = [0, 0, 128], sizes = [4, 16, 64], strides = [1, 1, 1]} : vector<4x16x384xf32> to vector<4x16x64xf32>
    %18 = arith.truncf %17 : vector<4x16x64xf32> to vector<4x16x64xbf16>
    %19 = vector.extract_strided_slice %13 {offsets = [0, 0, 256], sizes = [4, 16, 64], strides = [1, 1, 1]} : vector<4x16x384xf32> to vector<4x16x64xf32>
    %20 = arith.truncf %19 : vector<4x16x64xf32> to vector<4x16x64xbf16>
    "tpu.trace_start"() <{level = 10 : i32, message = "bqd,bkd->bqk"}> : () -> ()
    %cst_12 = arith.constant dense<0.000000e+00> : vector<4x16x16xf32>
    %21 = tpu.matmul %16, %18, %cst_12 {dimension_numbers = #tpu.dot_dimension_numbers<[2], [2], [1], [1], [0, 0, 0, 1, 1, 1], [0], [0]>} : vector<4x16x64xbf16>, vector<4x16x64xbf16>, vector<4x16x16xf32> -> vector<4x16x16xf32>
    "tpu.trace_stop"() : () -> ()
    %22 = vector.extract_strided_slice %14 {offsets = [0, 0, 0], sizes = [1, 16, 16], strides = [1, 1, 1]} : vector<2x16x16xf32> to vector<1x16x16xf32>
    %23 = vector.shape_cast %22 : vector<1x16x16xf32> to vector<16x16xf32>
    %24 = vector.shape_cast %23 : vector<16x16xf32> to vector<1x16x16xf32>
    %25 = vector.broadcast %24 : vector<1x16x16xf32> to vector<4x16x16xf32>
    %26 = arith.addf %21, %25 : vector<4x16x16xf32>
    %cst_13 = arith.constant dense<0xFF800000> : vector<4x16xf32>
    %27 = vector.multi_reduction <maximumf>, %26, %cst_13 [2] : vector<4x16x16xf32> to vector<4x16xf32>
    %28 = vector.shape_cast %27 : vector<4x16xf32> to vector<4x16x1xf32>
    %29 = vector.broadcast %28 : vector<4x16x1xf32> to vector<4x16x16xf32>
    %30 = arith.subf %26, %29 : vector<4x16x16xf32>
    %31 = math.exp %30 : vector<4x16x16xf32>
    %cst_14 = arith.constant dense<0.000000e+00> : vector<4x16xf32>
    %32 = vector.multi_reduction <add>, %31, %cst_14 [2] : vector<4x16x16xf32> to vector<4x16xf32>
    %33 = vector.shape_cast %32 : vector<4x16xf32> to vector<4x16x1xf32>
    %34 = tpu.reciprocal %33 {approx = true} : vector<4x16x1xf32> -> vector<4x16x1xf32>
    %35 = vector.broadcast %34 : vector<4x16x1xf32> to vector<4x16x16xf32>
    %36 = arith.mulf %31, %35 : vector<4x16x16xf32>
    %37 = arith.truncf %36 : vector<4x16x16xf32> to vector<4x16x16xbf16>
    "tpu.trace_start"() <{level = 10 : i32, message = "bqk,bkd->bqd"}> : () -> ()
    %cst_15 = arith.constant dense<0.000000e+00> : vector<4x16x64xf32>
    %38 = tpu.matmul %37, %20, %cst_15 {dimension_numbers = #tpu.dot_dimension_numbers<[2], [1], [1], [2], [0, 0, 0, 1, 1, 2], [0], [0]>} : vector<4x16x16xbf16>, vector<4x16x64xbf16>, vector<4x16x64xf32> -> vector<4x16x64xf32>
    "tpu.trace_stop"() : () -> ()
    %39 = vector.extract_strided_slice %13 {offsets = [0, 0, 64], sizes = [4, 16, 64], strides = [1, 1, 1]} : vector<4x16x384xf32> to vector<4x16x64xf32>
    %40 = arith.truncf %39 : vector<4x16x64xf32> to vector<4x16x64xbf16>
    %41 = vector.extract_strided_slice %13 {offsets = [0, 0, 192], sizes = [4, 16, 64], strides = [1, 1, 1]} : vector<4x16x384xf32> to vector<4x16x64xf32>
    %42 = arith.truncf %41 : vector<4x16x64xf32> to vector<4x16x64xbf16>
    %43 = vector.extract_strided_slice %13 {offsets = [0, 0, 320], sizes = [4, 16, 64], strides = [1, 1, 1]} : vector<4x16x384xf32> to vector<4x16x64xf32>
    %44 = arith.truncf %43 : vector<4x16x64xf32> to vector<4x16x64xbf16>
    "tpu.trace_start"() <{level = 10 : i32, message = "bqd,bkd->bqk"}> : () -> ()
    %cst_16 = arith.constant dense<0.000000e+00> : vector<4x16x16xf32>
    %45 = tpu.matmul %40, %42, %cst_16 {dimension_numbers = #tpu.dot_dimension_numbers<[2], [2], [1], [1], [0, 0, 0, 1, 1, 1], [0], [0]>} : vector<4x16x64xbf16>, vector<4x16x64xbf16>, vector<4x16x16xf32> -> vector<4x16x16xf32>
    "tpu.trace_stop"() : () -> ()
    %46 = vector.extract_strided_slice %14 {offsets = [1, 0, 0], sizes = [1, 16, 16], strides = [1, 1, 1]} : vector<2x16x16xf32> to vector<1x16x16xf32>
    %47 = vector.shape_cast %46 : vector<1x16x16xf32> to vector<16x16xf32>
    %48 = vector.shape_cast %47 : vector<16x16xf32> to vector<1x16x16xf32>
    %49 = vector.broadcast %48 : vector<1x16x16xf32> to vector<4x16x16xf32>
    %50 = arith.addf %45, %49 : vector<4x16x16xf32>
    %cst_17 = arith.constant dense<0xFF800000> : vector<4x16xf32>
    %51 = vector.multi_reduction <maximumf>, %50, %cst_17 [2] : vector<4x16x16xf32> to vector<4x16xf32>
    %52 = vector.shape_cast %51 : vector<4x16xf32> to vector<4x16x1xf32>
    %53 = vector.broadcast %52 : vector<4x16x1xf32> to vector<4x16x16xf32>
    %54 = arith.subf %50, %53 : vector<4x16x16xf32>
    %55 = math.exp %54 : vector<4x16x16xf32>
    %cst_18 = arith.constant dense<0.000000e+00> : vector<4x16xf32>
    %56 = vector.multi_reduction <add>, %55, %cst_18 [2] : vector<4x16x16xf32> to vector<4x16xf32>
    %57 = vector.shape_cast %56 : vector<4x16xf32> to vector<4x16x1xf32>
    %58 = tpu.reciprocal %57 {approx = true} : vector<4x16x1xf32> -> vector<4x16x1xf32>
    %59 = vector.broadcast %58 : vector<4x16x1xf32> to vector<4x16x16xf32>
    %60 = arith.mulf %55, %59 : vector<4x16x16xf32>
    %61 = arith.truncf %60 : vector<4x16x16xf32> to vector<4x16x16xbf16>
    "tpu.trace_start"() <{level = 10 : i32, message = "bqk,bkd->bqd"}> : () -> ()
    %cst_19 = arith.constant dense<0.000000e+00> : vector<4x16x64xf32>
    %62 = tpu.matmul %61, %44, %cst_19 {dimension_numbers = #tpu.dot_dimension_numbers<[2], [1], [1], [2], [0, 0, 0, 1, 1, 2], [0], [0]>} : vector<4x16x16xbf16>, vector<4x16x64xbf16>, vector<4x16x64xf32> -> vector<4x16x64xf32>
    "tpu.trace_stop"() : () -> ()
    %63 = tpu.concatenate %38, %62 in 2 : vector<4x16x64xf32>, vector<4x16x64xf32> -> vector<4x16x128xf32>
    %64 = vector.shape_cast %63 : vector<4x16x128xf32> to vector<64x128xf32>
    %65 = arith.truncf %64 : vector<64x128xf32> to vector<64x128xbf16>
    %c0_20 = arith.constant 0 : index
    %c0_21 = arith.constant 0 : index
    %c0_22 = arith.constant 0 : index
    %66 = vector.load %arg6[%c0_20, %c0_21, %c0_22] : memref<1x128x128xbf16, #tpu.memory_space<vmem>>, vector<1x128x128xbf16>
    %67 = vector.shape_cast %66 : vector<1x128x128xbf16> to vector<128x128xbf16>
    %cst_23 = arith.constant dense<0.000000e+00> : vector<64x128xf32>
    %68 = tpu.matmul %65, %67, %cst_23 {dimension_numbers = #tpu.dot_dimension_numbers<[1], [0], [0], [1], [0, 0, 1, 1], [], []>} : vector<64x128xbf16>, vector<128x128xbf16>, vector<64x128xf32> -> vector<64x128xf32>
    %c0_24 = arith.constant 0 : index
    %c0_25 = arith.constant 0 : index
    %c0_26 = arith.constant 0 : index
    %69 = vector.load %arg7[%c0_24, %c0_25, %c0_26] : memref<1x1x128xf32, #tpu.memory_space<vmem>>, vector<1x1x128xf32>
    %70 = vector.shape_cast %69 : vector<1x1x128xf32> to vector<1x128xf32>
    %71 = vector.broadcast %70 : vector<1x128xf32> to vector<64x128xf32>
    %72 = arith.addf %68, %71 : vector<64x128xf32>
    %73 = arith.addf %4, %72 : vector<64x128xf32>
    %c0_27 = arith.constant 0 : index
    %c0_28 = arith.constant 0 : index
    %c0_29 = arith.constant 0 : index
    %74 = vector.load %arg8[%c0_27, %c0_28, %c0_29] : memref<1x1x128xf32, #tpu.memory_space<vmem>>, vector<1x1x128xf32>
    %75 = vector.shape_cast %74 : vector<1x1x128xf32> to vector<1x128xf32>
    %c0_30 = arith.constant 0 : index
    %c0_31 = arith.constant 0 : index
    %c0_32 = arith.constant 0 : index
    %76 = vector.load %arg9[%c0_30, %c0_31, %c0_32] : memref<1x1x128xf32, #tpu.memory_space<vmem>>, vector<1x1x128xf32>
    %77 = vector.shape_cast %76 : vector<1x1x128xf32> to vector<1x128xf32>
    %cst_33 = arith.constant dense<0.000000e+00> : vector<64xf32>
    %78 = vector.multi_reduction <add>, %73, %cst_33 [1] : vector<64x128xf32> to vector<64xf32>
    %79 = vector.shape_cast %78 : vector<64xf32> to vector<64x1xf32>
    %cst_34 = arith.constant 1.280000e+02 : f32
    %80 = vector.broadcast %cst_34 : f32 to vector<64x1xf32>
    %81 = arith.divf %79, %80 : vector<64x1xf32>
    %82 = vector.broadcast %81 : vector<64x1xf32> to vector<64x128xf32>
    %83 = arith.subf %73, %82 : vector<64x128xf32>
    %84 = arith.mulf %83, %83 : vector<64x128xf32>
    %cst_35 = arith.constant dense<0.000000e+00> : vector<64xf32>
    %85 = vector.multi_reduction <add>, %84, %cst_35 [1] : vector<64x128xf32> to vector<64xf32>
    %86 = vector.shape_cast %85 : vector<64xf32> to vector<64x1xf32>
    %cst_36 = arith.constant 1.280000e+02 : f32
    %87 = vector.broadcast %cst_36 : f32 to vector<64x1xf32>
    %88 = arith.divf %86, %87 : vector<64x1xf32>
    %89 = vector.broadcast %81 : vector<64x1xf32> to vector<64x128xf32>
    %90 = arith.subf %73, %89 : vector<64x128xf32>
    %cst_37 = arith.constant 9.99999996E-13 : f32
    %91 = vector.broadcast %cst_37 : f32 to vector<64x1xf32>
    %92 = arith.addf %88, %91 : vector<64x1xf32>
    %93 = math.rsqrt %92 : vector<64x1xf32>
    %94 = vector.broadcast %93 : vector<64x1xf32> to vector<64x128xf32>
    %95 = arith.mulf %90, %94 : vector<64x128xf32>
    %96 = vector.broadcast %75 : vector<1x128xf32> to vector<64x128xf32>
    %97 = arith.mulf %95, %96 : vector<64x128xf32>
    %98 = vector.broadcast %77 : vector<1x128xf32> to vector<64x128xf32>
    %99 = arith.addf %97, %98 : vector<64x128xf32>
    %100 = arith.truncf %99 : vector<64x128xf32> to vector<64x128xbf16>
    %c0_38 = arith.constant 0 : index
    %c0_39 = arith.constant 0 : index
    %c0_40 = arith.constant 0 : index
    %101 = vector.load %arg10[%c0_38, %c0_39, %c0_40] : memref<1x128x512xbf16, #tpu.memory_space<vmem>>, vector<1x128x512xbf16>
    %102 = vector.shape_cast %101 : vector<1x128x512xbf16> to vector<128x512xbf16>
    %cst_41 = arith.constant dense<0.000000e+00> : vector<64x512xf32>
    %103 = tpu.matmul %100, %102, %cst_41 {dimension_numbers = #tpu.dot_dimension_numbers<[1], [0], [0], [1], [0, 0, 1, 1], [], []>} : vector<64x128xbf16>, vector<128x512xbf16>, vector<64x512xf32> -> vector<64x512xf32>
    %c0_42 = arith.constant 0 : index
    %c0_43 = arith.constant 0 : index
    %c0_44 = arith.constant 0 : index
    %104 = vector.load %arg11[%c0_42, %c0_43, %c0_44] : memref<1x1x512xf32, #tpu.memory_space<vmem>>, vector<1x1x512xf32>
    %105 = vector.shape_cast %104 : vector<1x1x512xf32> to vector<1x512xf32>
    %106 = vector.broadcast %105 : vector<1x512xf32> to vector<64x512xf32>
    %107 = arith.addf %103, %106 : vector<64x512xf32>
    %108 = arith.mulf %107, %107 : vector<64x512xf32>
    %109 = arith.mulf %107, %108 : vector<64x512xf32>
    %cst_45 = arith.constant 4.471500e-02 : f32
    %110 = vector.broadcast %cst_45 : f32 to vector<64x512xf32>
    %111 = arith.mulf %110, %109 : vector<64x512xf32>
    %112 = arith.addf %107, %111 : vector<64x512xf32>
    %cst_46 = arith.constant 0.797884583 : f32
    %113 = vector.broadcast %cst_46 : f32 to vector<64x512xf32>
    %114 = arith.mulf %113, %112 : vector<64x512xf32>
    %115 = math.tanh %114 : vector<64x512xf32>
    %cst_47 = arith.constant 1.000000e+00 : f32
    %116 = vector.broadcast %cst_47 : f32 to vector<64x512xf32>
    %117 = arith.addf %116, %115 : vector<64x512xf32>
    %cst_48 = arith.constant 5.000000e-01 : f32
    %118 = vector.broadcast %cst_48 : f32 to vector<64x512xf32>
    %119 = arith.mulf %118, %117 : vector<64x512xf32>
    %120 = arith.mulf %107, %119 : vector<64x512xf32>
    %121 = arith.truncf %120 : vector<64x512xf32> to vector<64x512xbf16>
    %c0_49 = arith.constant 0 : index
    %c0_50 = arith.constant 0 : index
    %c0_51 = arith.constant 0 : index
    %122 = vector.load %arg12[%c0_49, %c0_50, %c0_51] : memref<1x512x128xbf16, #tpu.memory_space<vmem>>, vector<1x512x128xbf16>
    %123 = vector.shape_cast %122 : vector<1x512x128xbf16> to vector<512x128xbf16>
    %cst_52 = arith.constant dense<0.000000e+00> : vector<64x128xf32>
    %124 = tpu.matmul %121, %123, %cst_52 {dimension_numbers = #tpu.dot_dimension_numbers<[1], [0], [0], [1], [0, 0, 1, 1], [], []>} : vector<64x512xbf16>, vector<512x128xbf16>, vector<64x128xf32> -> vector<64x128xf32>
    %c0_53 = arith.constant 0 : index
    %c0_54 = arith.constant 0 : index
    %c0_55 = arith.constant 0 : index
    %125 = vector.load %arg13[%c0_53, %c0_54, %c0_55] : memref<1x1x128xf32, #tpu.memory_space<vmem>>, vector<1x1x128xf32>
    %126 = vector.shape_cast %125 : vector<1x1x128xf32> to vector<1x128xf32>
    %127 = vector.broadcast %126 : vector<1x128xf32> to vector<64x128xf32>
    %128 = arith.addf %124, %127 : vector<64x128xf32>
    %129 = arith.addf %99, %128 : vector<64x128xf32>
    %c0_56 = arith.constant 0 : index
    %c0_57 = arith.constant 0 : index
    %c0_58 = arith.constant 0 : index
    %130 = vector.load %arg14[%c0_56, %c0_57, %c0_58] : memref<1x1x128xf32, #tpu.memory_space<vmem>>, vector<1x1x128xf32>
    %131 = vector.shape_cast %130 : vector<1x1x128xf32> to vector<1x128xf32>
    %c0_59 = arith.constant 0 : index
    %c0_60 = arith.constant 0 : index
    %c0_61 = arith.constant 0 : index
    %132 = vector.load %arg15[%c0_59, %c0_60, %c0_61] : memref<1x1x128xf32, #tpu.memory_space<vmem>>, vector<1x1x128xf32>
    %133 = vector.shape_cast %132 : vector<1x1x128xf32> to vector<1x128xf32>
    %cst_62 = arith.constant dense<0.000000e+00> : vector<64xf32>
    %134 = vector.multi_reduction <add>, %129, %cst_62 [1] : vector<64x128xf32> to vector<64xf32>
    %135 = vector.shape_cast %134 : vector<64xf32> to vector<64x1xf32>
    %cst_63 = arith.constant 1.280000e+02 : f32
    %136 = vector.broadcast %cst_63 : f32 to vector<64x1xf32>
    %137 = arith.divf %135, %136 : vector<64x1xf32>
    %138 = vector.broadcast %137 : vector<64x1xf32> to vector<64x128xf32>
    %139 = arith.subf %129, %138 : vector<64x128xf32>
    %140 = arith.mulf %139, %139 : vector<64x128xf32>
    %cst_64 = arith.constant dense<0.000000e+00> : vector<64xf32>
    %141 = vector.multi_reduction <add>, %140, %cst_64 [1] : vector<64x128xf32> to vector<64xf32>
    %142 = vector.shape_cast %141 : vector<64xf32> to vector<64x1xf32>
    %cst_65 = arith.constant 1.280000e+02 : f32
    %143 = vector.broadcast %cst_65 : f32 to vector<64x1xf32>
    %144 = arith.divf %142, %143 : vector<64x1xf32>
    %145 = vector.broadcast %137 : vector<64x1xf32> to vector<64x128xf32>
    %146 = arith.subf %129, %145 : vector<64x128xf32>
    %cst_66 = arith.constant 9.99999996E-13 : f32
    %147 = vector.broadcast %cst_66 : f32 to vector<64x1xf32>
    %148 = arith.addf %144, %147 : vector<64x1xf32>
    %149 = math.rsqrt %148 : vector<64x1xf32>
    %150 = vector.broadcast %149 : vector<64x1xf32> to vector<64x128xf32>
    %151 = arith.mulf %146, %150 : vector<64x128xf32>
    %152 = vector.broadcast %131 : vector<1x128xf32> to vector<64x128xf32>
    %153 = arith.mulf %151, %152 : vector<64x128xf32>
    %154 = vector.broadcast %133 : vector<1x128xf32> to vector<64x128xf32>
    %155 = arith.addf %153, %154 : vector<64x128xf32>
    %156 = vector.shape_cast %155 : vector<64x128xf32> to vector<4x16x128xf32>
    %c0_67 = arith.constant 0 : index
    %c0_68 = arith.constant 0 : index
    %c0_69 = arith.constant 0 : index
    %157 = vector.load %arg16[%c0_67, %c0_68, %c0_69] : memref<4x16x128xf32, #tpu.memory_space<vmem>>, vector<4x16x128xf32>
    tpu.vector_store %arg16[%c0_67, %c0_68, %c0_69], %156 {strides = array<i32>} : memref<4x16x128xf32, #tpu.memory_space<vmem>>, vector<4x16x128xf32>,
    %c1_i32 = arith.constant 1 : i32
    %158 = arith.cmpi eq, %arg1, %c1_i32 : i32
    %159 = arith.extui %158 : i1 to i32
    %c0_i32_70 = arith.constant 0 : i32
    %160 = arith.cmpi ne, %159, %c0_i32_70 : i32
    scf.if %160 {
      %cst_71 = arith.constant dense<0.000000e+00> : vector<4x128xf32>
      %161 = vector.multi_reduction <add>, %156, %cst_71 [1] : vector<4x16x128xf32> to vector<4x128xf32>
      %162 = vector.shape_cast %161 : vector<4x128xf32> to vector<4x1x128xf32>
      %cst_72 = arith.constant 1.600000e+01 : f32
      %163 = vector.broadcast %cst_72 : f32 to vector<4x1x128xf32>
      %164 = arith.divf %162, %163 : vector<4x1x128xf32>
      %c0_73 = arith.constant 0 : index
      %c0_74 = arith.constant 0 : index
      %c0_75 = arith.constant 0 : index
      %165 = vector.load %arg17[%c0_73, %c0_74, %c0_75] : memref<4x1x128xf32, #tpu.memory_space<vmem>>, vector<4x1x128xf32>
      tpu.vector_store %arg17[%c0_73, %c0_74, %c0_75], %164 {strides = array<i32>} : memref<4x1x128xf32, #tpu.memory_space<vmem>>, vector<4x1x128xf32>,
    } else {
    }
    return
  }
  func.func @transform_0(%arg0: i32, %arg1: i32) -> (i32, i32, i32) {
    %c0_i32 = arith.constant 0 : i32
    %c0_i32_0 = arith.constant 0 : i32
    %c0_i32_1 = arith.constant 0 : i32
    return %arg0, %c0_i32, %c0_i32_0 : i32, i32, i32
  }
  func.func @transform_1(%arg0: i32, %arg1: i32) -> (i32, i32, i32) {
    %c0_i32 = arith.constant 0 : i32
    %c0_i32_0 = arith.constant 0 : i32
    %c0_i32_1 = arith.constant 0 : i32
    %c0_i32_2 = arith.constant 0 : i32
    return %c0_i32, %c0_i32_0, %c0_i32_1 : i32, i32, i32
  }
  func.func @transform_2(%arg0: i32, %arg1: i32) -> (i32, i32, i32) {
    %c0_i32 = arith.constant 0 : i32
    %c0_i32_0 = arith.constant 0 : i32
    %c0_i32_1 = arith.constant 0 : i32
    return %arg1, %c0_i32, %c0_i32_0 : i32, i32, i32
  }
  func.func @transform_3(%arg0: i32, %arg1: i32) -> (i32, i32, i32) {
    %c0_i32 = arith.constant 0 : i32
    %c0_i32_0 = arith.constant 0 : i32
    %c0_i32_1 = arith.constant 0 : i32
    return %arg1, %c0_i32, %c0_i32_0 : i32, i32, i32
  }
  func.func @transform_4(%arg0: i32, %arg1: i32) -> (i32, i32, i32) {
    %c0_i32 = arith.constant 0 : i32
    %c0_i32_0 = arith.constant 0 : i32
    %c0_i32_1 = arith.constant 0 : i32
    return %arg1, %c0_i32, %c0_i32_0 : i32, i32, i32
  }
  func.func @transform_5(%arg0: i32, %arg1: i32) -> (i32, i32, i32) {
    %c0_i32 = arith.constant 0 : i32
    %c0_i32_0 = arith.constant 0 : i32
    %c0_i32_1 = arith.constant 0 : i32
    return %arg1, %c0_i32, %c0_i32_0 : i32, i32, i32
  }
  func.func @transform_6(%arg0: i32, %arg1: i32) -> (i32, i32, i32) {
    %c0_i32 = arith.constant 0 : i32
    %c0_i32_0 = arith.constant 0 : i32
    %c0_i32_1 = arith.constant 0 : i32
    return %arg1, %c0_i32, %c0_i32_0 : i32, i32, i32
  }
  func.func @transform_7(%arg0: i32, %arg1: i32) -> (i32, i32, i32) {
    %c0_i32 = arith.constant 0 : i32
    %c0_i32_0 = arith.constant 0 : i32
    %c0_i32_1 = arith.constant 0 : i32
    return %arg1, %c0_i32, %c0_i32_0 : i32, i32, i32
  }
  func.func @transform_8(%arg0: i32, %arg1: i32) -> (i32, i32, i32) {
    %c0_i32 = arith.constant 0 : i32
    %c0_i32_0 = arith.constant 0 : i32
    %c0_i32_1 = arith.constant 0 : i32
    return %arg1, %c0_i32, %c0_i32_0 : i32, i32, i32
  }
  func.func @transform_9(%arg0: i32, %arg1: i32) -> (i32, i32, i32) {
    %c0_i32 = arith.constant 0 : i32
    %c0_i32_0 = arith.constant 0 : i32
    %c0_i32_1 = arith.constant 0 : i32
    return %arg1, %c0_i32, %c0_i32_0 : i32, i32, i32
  }
  func.func @transform_10(%arg0: i32, %arg1: i32) -> (i32, i32, i32) {
    %c0_i32 = arith.constant 0 : i32
    %c0_i32_0 = arith.constant 0 : i32
    %c0_i32_1 = arith.constant 0 : i32
    return %arg1, %c0_i32, %c0_i32_0 : i32, i32, i32
  }
  func.func @transform_11(%arg0: i32, %arg1: i32) -> (i32, i32, i32) {
    %c0_i32 = arith.constant 0 : i32
    %c0_i32_0 = arith.constant 0 : i32
    %c0_i32_1 = arith.constant 0 : i32
    return %arg1, %c0_i32, %c0_i32_0 : i32, i32, i32
  }
  func.func @transform_12(%arg0: i32, %arg1: i32) -> (i32, i32, i32) {
    %c0_i32 = arith.constant 0 : i32
    %c0_i32_0 = arith.constant 0 : i32
    %c0_i32_1 = arith.constant 0 : i32
    return %arg1, %c0_i32, %c0_i32_0 : i32, i32, i32
  }
  func.func @transform_13(%arg0: i32, %arg1: i32) -> (i32, i32, i32) {
    %c0_i32 = arith.constant 0 : i32
    %c0_i32_0 = arith.constant 0 : i32
    %c0_i32_1 = arith.constant 0 : i32
    return %arg1, %c0_i32, %c0_i32_0 : i32, i32, i32
  }
  func.func @transform_14(%arg0: i32, %arg1: i32) -> (i32, i32, i32) {
    %c0_i32 = arith.constant 0 : i32
    %c0_i32_0 = arith.constant 0 : i32
    %c0_i32_1 = arith.constant 0 : i32
    return %arg0, %c0_i32, %c0_i32_0 : i32, i32, i32
  }
  func.func @transform_15(%arg0: i32, %arg1: i32) -> (i32, i32, i32) {
    %c0_i32 = arith.constant 0 : i32
    %c0_i32_0 = arith.constant 0 : i32
    %c0_i32_1 = arith.constant 0 : i32
    return %arg0, %c0_i32, %c0_i32_0 : i32, i32, i32
  }
}

</mosaic_0001>

<llo_original>
// kernel: tpu_custom_call.1
$region0: #{tpu_custom_call.1}
  #allocation0 [shape = 'u32[]', space=smem, size = 0x4, offset = 0x4, fixed_abs, tag = 'smem constant byte address 0x4 - core index']
  #allocation1 [shape = 'u32[144,128]{1,0:T(1,128)}', space=vmem, size = 0x12000, scoped, tag = 'internal scratch']
  %s0 = inlined_call_operand.hbm [shape: f32[8,16,128], index: 0, kind: input, shape index: {}]
  %s1 = inlined_call_operand.hbm [shape: f32[2,16,16], index: 1, kind: input, shape index: {}]
  %s2 = inlined_call_operand.hbm [shape: bf16[2,128,384], index: 2, kind: input, shape index: {}]
  %s3 = inlined_call_operand.vmem [shape: f32[2,1,384], index: 3, kind: input, shape index: {}]
  %s4 = inlined_call_operand.hbm [shape: bf16[2,128,128], index: 4, kind: input, shape index: {}]
  %s5 = inlined_call_operand.vmem [shape: f32[2,1,128], index: 5, kind: input, shape index: {}]
  %s6 = inlined_call_operand.vmem [shape: f32[2,1,128], index: 6, kind: input, shape index: {}]
  %s7 = inlined_call_operand.vmem [shape: f32[2,1,128], index: 7, kind: input, shape index: {}]
  %s8 = inlined_call_operand.hbm [shape: bf16[2,128,512], index: 8, kind: input, shape index: {}]
  %s9 = inlined_call_operand.vmem [shape: f32[2,1,512], index: 9, kind: input, shape index: {}]
  %s10 = inlined_call_operand.hbm [shape: bf16[2,512,128], index: 10, kind: input, shape index: {}]
  %s11 = inlined_call_operand.vmem [shape: f32[2,1,128], index: 11, kind: input, shape index: {}]
  %s12 = inlined_call_operand.vmem [shape: f32[2,1,128], index: 12, kind: input, shape index: {}]
  %s13 = inlined_call_operand.vmem [shape: f32[2,1,128], index: 13, kind: input, shape index: {}]
  %s14 = inlined_call_operand.hbm [shape: f32[8,16,128], index: 14, kind: output, shape index: {0}]
  %s15 = inlined_call_operand.hbm [shape: f32[8,1,128], index: 15, kind: output, shape index: {1}]
  %16 = xla_tuple %s14, %s15
  %s17 = sld [smem:[#allocation0]]
  $region129: #{tpu_custom_call.1} parent=0
    _
  %s19 = ssub.s32 1, %s17
  %s20 = scalar_select 0, %s19, %s17
  $region1: #{tpu_custom_call.1} parent=0
    #allocation2 [shape = 'u8[65536]{0}', space=vmem, size = 0x10000, scoped, tag = 'input window, operand 0']
    #allocation3 [shape = 's32[2]{0}', space=sflag, size = 0x8, scoped, tag = 'scoped memory for tpu_custom_call.1']
    #allocation4 [shape = 's32[2]{0}', space=sflag, size = 0x8, scoped, tag = 'scoped memory for tpu_custom_call.1']
    #allocation5 [shape = 'u8[16384]{0}', space=vmem, size = 0x4000, scoped, tag = 'input window, operand 1, single buffered']
    #allocation6 [shape = 's32[1]{0}', space=sflag, size = 0x4, scoped, tag = 'scoped memory for tpu_custom_call.1']
    #allocation7 [shape = 'u8[196608]{0}', space=vmem, size = 0x30000, scoped, tag = 'input window, operand 2']
    #allocation8 [shape = 'u8[65536]{0}', space=vmem, size = 0x10000, scoped, tag = 'input window, operand 4']
    #allocation9 [shape = 'u8[262144]{0}', space=vmem, size = 0x40000, scoped, tag = 'input window, operand 8']
    #allocation10 [shape = 'u8[262144]{0}', space=vmem, size = 0x40000, scoped, tag = 'input window, operand 10']
    #allocation11 [shape = 'u8[65536]{0}', space=vmem, size = 0x10000, scoped, tag = 'output window, operand 0']
    #allocation12 [shape = 'u8[4096]{0}', space=vmem, size = 0x1000, scoped, tag = 'output window, operand 1']
    #allocation13 [shape = 's32[2]{0}', space=sflag, size = 0x8, scoped, tag = 'scoped memory for tpu_custom_call.1']
    %21 = vsyncpa [#allocation3], 0
    %s22 = scalar_lea.sflag [#allocation3], 1
    %23 = vsyncpa %s22, 0
    %24 = vsyncpa [#allocation6], 0
    %25 = vsyncpa [#allocation4], 0
    %s26 = scalar_lea.sflag [#allocation4], 1
    %27 = vsyncpa %s26, 0
    %28 = vsyncpa [#allocation13], 0
    %s29 = scalar_lea.sflag [#allocation13], 1
    %30 = vsyncpa %s29, 0
    loop: start=0, step=1, limit=6
    $region2: #{tpu_custom_call.1} parent=1 // loop_pre_header
      _
    $region3: #{tpu_custom_call.1} parent=1 // loop_header
      %s32 = sphi 0, %s36
      %p33 = scmp.ge.s32.totalorder %s32, 6
      %s39 = sphi 0, %s51
      %s40 = sphi 0, %s47
      %s41 = sphi 0, %s39
      %s42 = sphi 0, %s40
      %s43 = sphi 0, %s41
      %s44 = sphi 0, %s42
      %s54 = sphi 0, %s56
      %s57 = sphi 0, %s54
      %s58 = sphi 0, %s57
      %s74 = sphi 0, %s58
      %s78 = sphi 0, %s78
      %s80 = sphi 0, %s78
      %s81 = sphi 0, %s80
      %s95 = sphi 0, %s81
      %s101 = sphi 0, %s103
      %s104 = sphi 0, %s101
      %s105 = sphi 0, %s104
      %s121 = sphi 0, %s105
      %s127 = sphi 0, %s129
      %s130 = sphi 0, %s127
      %s131 = sphi 0, %s130
      %s147 = sphi 0, %s131
      %s153 = sphi 0, %s155
      %s156 = sphi 0, %s153
      %s157 = sphi 0, %s156
      %s173 = sphi 0, %s157
      %s179 = sphi 0, %s181
      %s182 = sphi 0, %s179
      %s183 = sphi 0, %s182
      %s199 = sphi 0, %s183
      %s205 = sphi 0, %s207
      %s208 = sphi 0, %s205
      %s209 = sphi 0, %s208
      %s225 = sphi 0, %s209
      %s231 = sphi 0, %s233
      %s234 = sphi 0, %s231
      %s235 = sphi 0, %s234
      %s251 = sphi 0, %s235
      %s257 = sphi 0, %s259
      %s260 = sphi 0, %s257
      %s261 = sphi 0, %s260
      %s277 = sphi 0, %s261
      %s283 = sphi 0, %s285
      %s286 = sphi 0, %s283
      %s287 = sphi 0, %s286
      %s303 = sphi 0, %s287
      %s309 = sphi 0, %s311
      %s312 = sphi 0, %s309
      %s313 = sphi 0, %s312
      %s329 = sphi 0, %s313
      %s335 = sphi 0, %s337
      %s338 = sphi 0, %s335
      %s339 = sphi 0, %s338
      %s355 = sphi 0, %s339
      %s361 = sphi 0, %s363
      %s364 = sphi 0, %s361
      %s365 = sphi 0, %s364
      %s381 = sphi 0, %s365
      %s387 = sphi 0, %s389
      %s390 = sphi 0, %s387
      %s391 = sphi 0, %s390
      %s407 = sphi 0, %s391
      %s413 = sphi 0, %s415
      %s416 = sphi 0, %s413
      %s417 = sphi 0, %s416
      %s433 = sphi 0, %s417
      %s439 = sphi 0, %s441
      %s442 = sphi 0, %s439
      %s443 = sphi 0, %s442
      %s459 = sphi 0, %s443
    $region4: #{tpu_custom_call.1} parent=1 // loop_header_branch
      %35 = sbr.rel (%p33) target = $region8
    $region5: #{tpu_custom_call.1} parent=1 // loop_body
      %s37 = ssub.s32 %s32, 1
      %s38 = ssub.s32 %s32, 2
      %s45 = sadd.s32 1, %s40
      %p46 = scmp.ge.s32.totalorder %s45, 2
      %s47 = scalar_select %p46, 0, %s45
      %s48 = sadd.s32 1, %s39
      %s49 = scalar_select %p46, %s48, %s39
      %p50 = scmp.ge.s32.totalorder %s49, 2
      %s51 = scalar_select %p50, 0, %s49
      %s52 = ssub.s32 %s39, %s51
      %p53 = scmp.eq.s32.totalorder %s52, 0
      %s55 = sadd.s32 %s54, 1
      %s56 = scalar_select %p53, %s54, %s55
      %p59 = pneg %p53
      %p60 = scmp.eq.s32.totalorder %s32, 3
      %p61 = por %p59, %p60
      %p62 = scmp.ne.s32.totalorder %s54, %s57
      %p63 = scmp.eq.s32.totalorder %s32, 0
      %p64 = por %p62, %p63
      %p65 = scmp.ne.s32.totalorder %s54, %s57
      %p66 = scmp.eq.s32.totalorder %s37, 3
      %p67 = por %p65, %p66
      %p68 = scmp.ne.s32.totalorder %s57, %s58
      %p69 = scmp.eq.s32.totalorder %s37, 0
      %p70 = por %p68, %p69
      %p71 = scmp.ne.s32.totalorder %s57, %s58
      %p72 = scmp.eq.s32.totalorder %s38, 3
      %p73 = por %p71, %p72
      %p75 = scmp.ne.s32.totalorder %s58, %s74
      %p76 = scmp.eq.s32.totalorder %s38, 0
      %p77 = por %p75, %p76
      %s79 = sadd.s32 %s78, 1
      %p82 = scmp.eq.s32.totalorder %s32, 3
      %p83 = scmp.ne.s32.totalorder %s78, %s80
      %p84 = scmp.eq.s32.totalorder %s32, 0
      %p85 = por %p83, %p84
      %p86 = scmp.ne.s32.totalorder %s78, %s80
      %p87 = scmp.eq.s32.totalorder %s37, 3
      %p88 = por %p86, %p87
      %p89 = scmp.ne.s32.totalorder %s80, %s81
      %p90 = scmp.eq.s32.totalorder %s37, 0
      %p91 = por %p89, %p90
      %p92 = scmp.ne.s32.totalorder %s80, %s81
      %p93 = scmp.eq.s32.totalorder %s38, 3
      %p94 = por %p92, %p93
      %p96 = scmp.ne.s32.totalorder %s81, %s95
      %p97 = scmp.eq.s32.totalorder %s38, 0
      %p98 = por %p96, %p97
      %s99 = ssub.s32 %s40, %s47
      %p100 = scmp.eq.s32.totalorder %s99, 0
      %s102 = sadd.s32 %s101, 1
      %s103 = scalar_select %p100, %s101, %s102
      %p106 = pneg %p100
      %p107 = scmp.eq.s32.totalorder %s32, 3
      %p108 = por %p106, %p107
      %p109 = scmp.ne.s32.totalorder %s101, %s104
      %p110 = scmp.eq.s32.totalorder %s32, 0
      %p111 = por %p109, %p110
      %p112 = scmp.ne.s32.totalorder %s101, %s104
      %p113 = scmp.eq.s32.totalorder %s37, 3
      %p114 = por %p112, %p113
      %p115 = scmp.ne.s32.totalorder %s104, %s105
      %p116 = scmp.eq.s32.totalorder %s37, 0
      %p117 = por %p115, %p116
      %p118 = scmp.ne.s32.totalorder %s104, %s105
      %p119 = scmp.eq.s32.totalorder %s38, 3
      %p120 = por %p118, %p119
      %p122 = scmp.ne.s32.totalorder %s105, %s121
      %p123 = scmp.eq.s32.totalorder %s38, 0
      %p124 = por %p122, %p123
      %s125 = ssub.s32 %s40, %s47
      %p126 = scmp.eq.s32.totalorder %s125, 0
      %s128 = sadd.s32 %s127, 1
      %s129 = scalar_select %p126, %s127, %s128
      %p132 = pneg %p126
      %p133 = scmp.eq.s32.totalorder %s32, 3
      %p134 = por %p132, %p133
      %p135 = scmp.ne.s32.totalorder %s127, %s130
      %p136 = scmp.eq.s32.totalorder %s32, 0
      %p137 = por %p135, %p136
      %p138 = scmp.ne.s32.totalorder %s127, %s130
      %p139 = scmp.eq.s32.totalorder %s37, 3
      %p140 = por %p138, %p139
      %p141 = scmp.ne.s32.totalorder %s130, %s131
      %p142 = scmp.eq.s32.totalorder %s37, 0
      %p143 = por %p141, %p142
      %p144 = scmp.ne.s32.totalorder %s130, %s131
      %p145 = scmp.eq.s32.totalorder %s38, 3
      %p146 = por %p144, %p145
      %p148 = scmp.ne.s32.totalorder %s131, %s147
      %p149 = scmp.eq.s32.totalorder %s38, 0
      %p150 = por %p148, %p149
      %s151 = ssub.s32 %s40, %s47
      %p152 = scmp.eq.s32.totalorder %s151, 0
      %s154 = sadd.s32 %s153, 1
      %s155 = scalar_select %p152, %s153, %s154
      %p158 = pneg %p152
      %p159 = scmp.eq.s32.totalorder %s32, 3
      %p160 = por %p158, %p159
      %p161 = scmp.ne.s32.totalorder %s153, %s156
      %p162 = scmp.eq.s32.totalorder %s32, 0
      %p163 = por %p161, %p162
      %p164 = scmp.ne.s32.totalorder %s153, %s156
      %p165 = scmp.eq.s32.totalorder %s37, 3
      %p166 = por %p164, %p165
      %p167 = scmp.ne.s32.totalorder %s156, %s157
      %p168 = scmp.eq.s32.totalorder %s37, 0
      %p169 = por %p167, %p168
      %p170 = scmp.ne.s32.totalorder %s156, %s157
      %p171 = scmp.eq.s32.totalorder %s38, 3
      %p172 = por %p170, %p171
      %p174 = scmp.ne.s32.totalorder %s157, %s173
      %p175 = scmp.eq.s32.totalorder %s38, 0
      %p176 = por %p174, %p175
      %s177 = ssub.s32 %s40, %s47
      %p178 = scmp.eq.s32.totalorder %s177, 0
      %s180 = sadd.s32 %s179, 1
      %s181 = scalar_select %p178, %s179, %s180
      %p184 = pneg %p178
      %p185 = scmp.eq.s32.totalorder %s32, 3
      %p186 = por %p184, %p185
      %p187 = scmp.ne.s32.totalorder %s179, %s182
      %p188 = scmp.eq.s32.totalorder %s32, 0
      %p189 = por %p187, %p188
      %p190 = scmp.ne.s32.totalorder %s179, %s182
      %p191 = scmp.eq.s32.totalorder %s37, 3
      %p192 = por %p190, %p191
      %p193 = scmp.ne.s32.totalorder %s182, %s183
      %p194 = scmp.eq.s32.totalorder %s37, 0
      %p195 = por %p193, %p194
      %p196 = scmp.ne.s32.totalorder %s182, %s183
      %p197 = scmp.eq.s32.totalorder %s38, 3
      %p198 = por %p196, %p197
      %p200 = scmp.ne.s32.totalorder %s183, %s199
      %p201 = scmp.eq.s32.totalorder %s38, 0
      %p202 = por %p200, %p201
      %s203 = ssub.s32 %s40, %s47
      %p204 = scmp.eq.s32.totalorder %s203, 0
      %s206 = sadd.s32 %s205, 1
      %s207 = scalar_select %p204, %s205, %s206
      %p210 = pneg %p204
      %p211 = scmp.eq.s32.totalorder %s32, 3
      %p212 = por %p210, %p211
      %p213 = scmp.ne.s32.totalorder %s205, %s208
      %p214 = scmp.eq.s32.totalorder %s32, 0
      %p215 = por %p213, %p214
      %p216 = scmp.ne.s32.totalorder %s205, %s208
      %p217 = scmp.eq.s32.totalorder %s37, 3
      %p218 = por %p216, %p217
      %p219 = scmp.ne.s32.totalorder %s208, %s209
      %p220 = scmp.eq.s32.totalorder %s37, 0
      %p221 = por %p219, %p220
      %p222 = scmp.ne.s32.totalorder %s208, %s209
      %p223 = scmp.eq.s32.totalorder %s38, 3
      %p224 = por %p222, %p223
      %p226 = scmp.ne.s32.totalorder %s209, %s225
      %p227 = scmp.eq.s32.totalorder %s38, 0
      %p228 = por %p226, %p227
      %s229 = ssub.s32 %s40, %s47
      %p230 = scmp.eq.s32.totalorder %s229, 0
      %s232 = sadd.s32 %s231, 1
      %s233 = scalar_select %p230, %s231, %s232
      %p236 = pneg %p230
      %p237 = scmp.eq.s32.totalorder %s32, 3
      %p238 = por %p236, %p237
      %p239 = scmp.ne.s32.totalorder %s231, %s234
      %p240 = scmp.eq.s32.totalorder %s32, 0
      %p241 = por %p239, %p240
      %p242 = scmp.ne.s32.totalorder %s231, %s234
      %p243 = scmp.eq.s32.totalorder %s37, 3
      %p244 = por %p242, %p243
      %p245 = scmp.ne.s32.totalorder %s234, %s235
      %p246 = scmp.eq.s32.totalorder %s37, 0
      %p247 = por %p245, %p246
      %p248 = scmp.ne.s32.totalorder %s234, %s235
      %p249 = scmp.eq.s32.totalorder %s38, 3
      %p250 = por %p248, %p249
      %p252 = scmp.ne.s32.totalorder %s235, %s251
      %p253 = scmp.eq.s32.totalorder %s38, 0
      %p254 = por %p252, %p253
      %s255 = ssub.s32 %s40, %s47
      %p256 = scmp.eq.s32.totalorder %s255, 0
      %s258 = sadd.s32 %s257, 1
      %s259 = scalar_select %p256, %s257, %s258
      %p262 = pneg %p256
      %p263 = scmp.eq.s32.totalorder %s32, 3
      %p264 = por %p262, %p263
      %p265 = scmp.ne.s32.totalorder %s257, %s260
      %p266 = scmp.eq.s32.totalorder %s32, 0
      %p267 = por %p265, %p266
      %p268 = scmp.ne.s32.totalorder %s257, %s260
      %p269 = scmp.eq.s32.totalorder %s37, 3
      %p270 = por %p268, %p269
      %p271 = scmp.ne.s32.totalorder %s260, %s261
      %p272 = scmp.eq.s32.totalorder %s37, 0
      %p273 = por %p271, %p272
      %p274 = scmp.ne.s32.totalorder %s260, %s261
      %p275 = scmp.eq.s32.totalorder %s38, 3
      %p276 = por %p274, %p275
      %p278 = scmp.ne.s32.totalorder %s261, %s277
      %p279 = scmp.eq.s32.totalorder %s38, 0
      %p280 = por %p278, %p279
      %s281 = ssub.s32 %s40, %s47
      %p282 = scmp.eq.s32.totalorder %s281, 0
      %s284 = sadd.s32 %s283, 1
      %s285 = scalar_select %p282, %s283, %s284
      %p288 = pneg %p282
      %p289 = scmp.eq.s32.totalorder %s32, 3
      %p290 = por %p288, %p289
      %p291 = scmp.ne.s32.totalorder %s283, %s286
      %p292 = scmp.eq.s32.totalorder %s32, 0
      %p293 = por %p291, %p292
      %p294 = scmp.ne.s32.totalorder %s283, %s286
      %p295 = scmp.eq.s32.totalorder %s37, 3
      %p296 = por %p294, %p295
      %p297 = scmp.ne.s32.totalorder %s286, %s287
      %p298 = scmp.eq.s32.totalorder %s37, 0
      %p299 = por %p297, %p298
      %p300 = scmp.ne.s32.totalorder %s286, %s287
      %p301 = scmp.eq.s32.totalorder %s38, 3
      %p302 = por %p300, %p301
      %p304 = scmp.ne.s32.totalorder %s287, %s303
      %p305 = scmp.eq.s32.totalorder %s38, 0
      %p306 = por %p304, %p305
      %s307 = ssub.s32 %s40, %s47
      %p308 = scmp.eq.s32.totalorder %s307, 0
      %s310 = sadd.s32 %s309, 1
      %s311 = scalar_select %p308, %s309, %s310
      %p314 = pneg %p308
      %p315 = scmp.eq.s32.totalorder %s32, 3
      %p316 = por %p314, %p315
      %p317 = scmp.ne.s32.totalorder %s309, %s312
      %p318 = scmp.eq.s32.totalorder %s32, 0
      %p319 = por %p317, %p318
      %p320 = scmp.ne.s32.totalorder %s309, %s312
      %p321 = scmp.eq.s32.totalorder %s37, 3
      %p322 = por %p320, %p321
      %p323 = scmp.ne.s32.totalorder %s312, %s313
      %p324 = scmp.eq.s32.totalorder %s37, 0
      %p325 = por %p323, %p324
      %p326 = scmp.ne.s32.totalorder %s312, %s313
      %p327 = scmp.eq.s32.totalorder %s38, 3
      %p328 = por %p326, %p327
      %p330 = scmp.ne.s32.totalorder %s313, %s329
      %p331 = scmp.eq.s32.totalorder %s38, 0
      %p332 = por %p330, %p331
      %s333 = ssub.s32 %s40, %s47
      %p334 = scmp.eq.s32.totalorder %s333, 0
      %s336 = sadd.s32 %s335, 1
      %s337 = scalar_select %p334, %s335, %s336
      %p340 = pneg %p334
      %p341 = scmp.eq.s32.totalorder %s32, 3
      %p342 = por %p340, %p341
      %p343 = scmp.ne.s32.totalorder %s335, %s338
      %p344 = scmp.eq.s32.totalorder %s32, 0
      %p345 = por %p343, %p344
      %p346 = scmp.ne.s32.totalorder %s335, %s338
      %p347 = scmp.eq.s32.totalorder %s37, 3
      %p348 = por %p346, %p347
      %p349 = scmp.ne.s32.totalorder %s338, %s339
      %p350 = scmp.eq.s32.totalorder %s37, 0
      %p351 = por %p349, %p350
      %p352 = scmp.ne.s32.totalorder %s338, %s339
      %p353 = scmp.eq.s32.totalorder %s38, 3
      %p354 = por %p352, %p353
      %p356 = scmp.ne.s32.totalorder %s339, %s355
      %p357 = scmp.eq.s32.totalorder %s38, 0
      %p358 = por %p356, %p357
      %s359 = ssub.s32 %s40, %s47
      %p360 = scmp.eq.s32.totalorder %s359, 0
      %s362 = sadd.s32 %s361, 1
      %s363 = scalar_select %p360, %s361, %s362
      %p366 = pneg %p360
      %p367 = scmp.eq.s32.totalorder %s32, 3
      %p368 = por %p366, %p367
      %p369 = scmp.ne.s32.totalorder %s361, %s364
      %p370 = scmp.eq.s32.totalorder %s32, 0
      %p371 = por %p369, %p370
      %p372 = scmp.ne.s32.totalorder %s361, %s364
      %p373 = scmp.eq.s32.totalorder %s37, 3
      %p374 = por %p372, %p373
      %p375 = scmp.ne.s32.totalorder %s364, %s365
      %p376 = scmp.eq.s32.totalorder %s37, 0
      %p377 = por %p375, %p376
      %p378 = scmp.ne.s32.totalorder %s364, %s365
      %p379 = scmp.eq.s32.totalorder %s38, 3
      %p380 = por %p378, %p379
      %p382 = scmp.ne.s32.totalorder %s365, %s381
      %p383 = scmp.eq.s32.totalorder %s38, 0
      %p384 = por %p382, %p383
      %s385 = ssub.s32 %s40, %s47
      %p386 = scmp.eq.s32.totalorder %s385, 0
      %s388 = sadd.s32 %s387, 1
      %s389 = scalar_select %p386, %s387, %s388
      %p392 = pneg %p386
      %p393 = scmp.eq.s32.totalorder %s32, 3
      %p394 = por %p392, %p393
      %p395 = scmp.ne.s32.totalorder %s387, %s390
      %p396 = scmp.eq.s32.totalorder %s32, 0
      %p397 = por %p395, %p396
      %p398 = scmp.ne.s32.totalorder %s387, %s390
      %p399 = scmp.eq.s32.totalorder %s37, 3
      %p400 = por %p398, %p399
      %p401 = scmp.ne.s32.totalorder %s390, %s391
      %p402 = scmp.eq.s32.totalorder %s37, 0
      %p403 = por %p401, %p402
      %p404 = scmp.ne.s32.totalorder %s390, %s391
      %p405 = scmp.eq.s32.totalorder %s38, 3
      %p406 = por %p404, %p405
      %p408 = scmp.ne.s32.totalorder %s391, %s407
      %p409 = scmp.eq.s32.totalorder %s38, 0
      %p410 = por %p408, %p409
      %s411 = ssub.s32 %s39, %s51
      %p412 = scmp.eq.s32.totalorder %s411, 0
      %s414 = sadd.s32 %s413, 1
      %s415 = scalar_select %p412, %s413, %s414
      %p418 = pneg %p412
      %p419 = scmp.eq.s32.totalorder %s32, 3
      %p420 = por %p418, %p419
      %p421 = scmp.ne.s32.totalorder %s413, %s416
      %p422 = scmp.eq.s32.totalorder %s32, 0
      %p423 = por %p421, %p422
      %p424 = scmp.ne.s32.totalorder %s413, %s416
      %p425 = scmp.eq.s32.totalorder %s37, 3
      %p426 = por %p424, %p425
      %p427 = scmp.ne.s32.totalorder %s416, %s417
      %p428 = scmp.eq.s32.totalorder %s37, 0
      %p429 = por %p427, %p428
      %p430 = scmp.ne.s32.totalorder %s416, %s417
      %p431 = scmp.eq.s32.totalorder %s38, 3
      %p432 = por %p430, %p431
      %p434 = scmp.ne.s32.totalorder %s417, %s433
      %p435 = scmp.eq.s32.totalorder %s38, 0
      %p436 = por %p434, %p435
      %s437 = ssub.s32 %s39, %s51
      %p438 = scmp.eq.s32.totalorder %s437, 0
      %s440 = sadd.s32 %s439, 1
      %s441 = scalar_select %p438, %s439, %s440
      %p444 = pneg %p438
      %p445 = scmp.eq.s32.totalorder %s32, 3
      %p446 = por %p444, %p445
      %p447 = scmp.ne.s32.totalorder %s439, %s442
      %p448 = scmp.eq.s32.totalorder %s32, 0
      %p449 = por %p447, %p448
      %p450 = scmp.ne.s32.totalorder %s439, %s442
      %p451 = scmp.eq.s32.totalorder %s37, 3
      %p452 = por %p450, %p451
      %p453 = scmp.ne.s32.totalorder %s442, %s443
      %p454 = scmp.eq.s32.totalorder %s37, 0
      %p455 = por %p453, %p454
      %p456 = scmp.ne.s32.totalorder %s442, %s443
      %p457 = scmp.eq.s32.totalorder %s38, 3
      %p458 = por %p456, %p457
      %p460 = scmp.ne.s32.totalorder %s443, %s459
      %p461 = scmp.eq.s32.totalorder %s38, 0
      %p462 = por %p460, %p461
      %p463 = scmp.le.s32.totalorder 1, %s32
      %p464 = scmp.lt.s32.totalorder %s32, 5
      %p465 = pnand %p463, %p464
      %p466 = pneg %p465
      // Predicated region
      $region9: #{tpu_custom_call.1} parent=5 // pred_check
        _
      $region10: #{tpu_custom_call.1} parent=5 // pred_check_branch
        %468 = sbr.rel (%p465) target = $region12
      $region11: #{tpu_custom_call.1} parent=5 // pred_region
        %s469 = ssub.s32 %s32, 1
        // Predicated region
        $region13: #{tpu_custom_call.1} parent=11 // pred_check
          %p470 = pneg %p91
        $region14: #{tpu_custom_call.1} parent=11 // pred_check_branch
          %472 = sbr.rel (%p470) target = $region16
        $region15: #{tpu_custom_call.1} parent=11 // pred_region
          %s474 = ssub.s32 512, 512
          %475 = vsyncadd [#allocation6], %s474
          %s476 = sshll.u32 [#allocation5], 4
          %s477 = int_to_ptr.vmem [resolvable:$true] %s476
          %482 = dma.hbm_to_vmem [thread:$0]  %s1, 512, %s477, [#allocation6], 128, 128, 8
        $region16: #{tpu_custom_call.1} parent=11 // pred_fallthru
          _
      $region12: #{tpu_custom_call.1} parent=5 // pred_fallthru
        _
      %p483 = scmp.lt.s32.totalorder %s32, 4
      // Predicated region
      $region17: #{tpu_custom_call.1} parent=5 // pred_check
        %p484 = pneg %p483
      $region18: #{tpu_custom_call.1} parent=5 // pred_check_branch
        %486 = sbr.rel (%p484) target = $region20
      $region19: #{tpu_custom_call.1} parent=5 // pred_region
        // Predicated region
        $region21: #{tpu_custom_call.1} parent=19 // pred_check
          %p487 = pneg %p64
        $region22: #{tpu_custom_call.1} parent=19 // pred_check_branch
          %489 = sbr.rel (%p487) target = $region24
        $region23: #{tpu_custom_call.1} parent=19 // pred_region
          %s490 = sand.u32 %s32, 1
          %s491 = scalar_lea.sflag [#allocation3], %s490
          %s492 = sand.u32 %s54, 1
          %s493 = smul.addr %s492, 64
          %s494 = scalar_lea.vmem [#allocation2], %s493
          %s495 = smul.u32 4, %s39
          %s497 = ssub.s32 1024, 1024
          %498 = vsyncadd %s491, %s497
          %s499 = smul.addr %s495, 2
          %s500 = smul.addr %s499, 128
          %s501 = scalar_lea.hbm %s0, %s500
          %s502 = sshll.u32 %s494, 4
          %s503 = int_to_ptr.vmem [resolvable:$true] %s502
          %508 = dma.hbm_to_vmem [thread:$0]  %s501, 1024, %s503, %s491, 128, 128, 8
        $region24: #{tpu_custom_call.1} parent=19 // pred_fallthru
          _
        // Predicated region
        $region25: #{tpu_custom_call.1} parent=19 // pred_check
          %p509 = pneg %p111
        $region26: #{tpu_custom_call.1} parent=19 // pred_check_branch
          %511 = sbr.rel (%p509) target = $region28
        $region27: #{tpu_custom_call.1} parent=19 // pred_region
          %s512 = sand.u32 %s32, 1
          %s513 = scalar_lea.sflag [#allocation3], %s512
          %s514 = sand.u32 %s101, 1
          %s515 = smul.addr %s514, 192
          %s516 = scalar_lea.vmem [#allocation7], %s515
          %s518 = ssub.s32 3072, 3072
          %519 = vsyncadd %s513, %s518
          %s520 = smul.addr %s40, 48
          %s521 = smul.addr %s520, 64
          %s522 = scalar_lea.hbm %s2, %s521
          %s523 = sshll.u32 %s516, 4
          %s524 = int_to_ptr.vmem [resolvable:$true] %s523
          %529 = dma.hbm_to_vmem [thread:$0]  %s522, 3072, %s524, %s513, 192, 192, 12
        $region28: #{tpu_custom_call.1} parent=19 // pred_fallthru
          _
        // Predicated region
        $region29: #{tpu_custom_call.1} parent=19 // pred_check
          %p530 = pneg %p137
        $region30: #{tpu_custom_call.1} parent=19 // pred_check_branch
          %532 = sbr.rel (%p530) target = $region32
        $region31: #{tpu_custom_call.1} parent=19 // pred_region
          %p533 = scmp.lt.s32.totalorder %s40, 1
          %s534 = scalar_select %p533, %s40, 1
          %s535 = smul.addr %s534, 3
          %s536 = scalar_lea.vmem %s3, %s535
        $region32: #{tpu_custom_call.1} parent=19 // pred_fallthru
          _
        // Predicated region
        $region33: #{tpu_custom_call.1} parent=19 // pred_check
          %p537 = pneg %p163
        $region34: #{tpu_custom_call.1} parent=19 // pred_check_branch
          %539 = sbr.rel (%p537) target = $region36
        $region35: #{tpu_custom_call.1} parent=19 // pred_region
          %s540 = sand.u32 %s32, 1
          %s541 = scalar_lea.sflag [#allocation3], %s540
          %s542 = sand.u32 %s153, 1
          %s543 = smul.addr %s542, 64
          %s544 = scalar_lea.vmem [#allocation8], %s543
          %s546 = ssub.s32 1024, 1024
          %547 = vsyncadd %s541, %s546
          %s548 = smul.addr %s40, 16
          %s549 = smul.addr %s548, 64
          %s550 = scalar_lea.hbm %s4, %s549
          %s551 = sshll.u32 %s544, 4
          %s552 = int_to_ptr.vmem [resolvable:$true] %s551
          %557 = dma.hbm_to_vmem [thread:$0]  %s550, 1024, %s552, %s541, 64, 64, 4
        $region36: #{tpu_custom_call.1} parent=19 // pred_fallthru
          _
        // Predicated region
        $region37: #{tpu_custom_call.1} parent=19 // pred_check
          %p558 = pneg %p189
        $region38: #{tpu_custom_call.1} parent=19 // pred_check_branch
          %560 = sbr.rel (%p558) target = $region40
        $region39: #{tpu_custom_call.1} parent=19 // pred_region
          %p561 = scmp.lt.s32.totalorder %s40, 1
          %s562 = scalar_select %p561, %s40, 1
          %s563 = scalar_lea.vmem %s5, %s562
        $region40: #{tpu_custom_call.1} parent=19 // pred_fallthru
          _
        // Predicated region
        $region41: #{tpu_custom_call.1} parent=19 // pred_check
          %p564 = pneg %p215
        $region42: #{tpu_custom_call.1} parent=19 // pred_check_branch
          %566 = sbr.rel (%p564) target = $region44
        $region43: #{tpu_custom_call.1} parent=19 // pred_region
          %p567 = scmp.lt.s32.totalorder %s40, 1
          %s568 = scalar_select %p567, %s40, 1
          %s569 = scalar_lea.vmem %s6, %s568
        $region44: #{tpu_custom_call.1} parent=19 // pred_fallthru
          _
        // Predicated region
        $region45: #{tpu_custom_call.1} parent=19 // pred_check
          %p570 = pneg %p241
        $region46: #{tpu_custom_call.1} parent=19 // pred_check_branch
          %572 = sbr.rel (%p570) target = $region48
        $region47: #{tpu_custom_call.1} parent=19 // pred_region
          %p573 = scmp.lt.s32.totalorder %s40, 1
          %s574 = scalar_select %p573, %s40, 1
          %s575 = scalar_lea.vmem %s7, %s574
        $region48: #{tpu_custom_call.1} parent=19 // pred_fallthru
          _
        // Predicated region
        $region49: #{tpu_custom_call.1} parent=19 // pred_check
          %p576 = pneg %p267
        $region50: #{tpu_custom_call.1} parent=19 // pred_check_branch
          %578 = sbr.rel (%p576) target = $region52
        $region51: #{tpu_custom_call.1} parent=19 // pred_region
          %s579 = sand.u32 %s32, 1
          %s580 = scalar_lea.sflag [#allocation3], %s579
          %s581 = sand.u32 %s257, 1
          %s582 = smul.addr %s581, 256
          %s583 = scalar_lea.vmem [#allocation9], %s582
          %s585 = ssub.s32 4096, 4096
          %586 = vsyncadd %s580, %s585
          %s587 = smul.addr %s40, 64
          %s588 = smul.addr %s587, 64
          %s589 = scalar_lea.hbm %s8, %s588
          %s590 = sshll.u32 %s583, 4
          %s591 = int_to_ptr.vmem [resolvable:$true] %s590
          %596 = dma.hbm_to_vmem [thread:$0]  %s589, 4096, %s591, %s580, 256, 256, 16
        $region52: #{tpu_custom_call.1} parent=19 // pred_fallthru
          _
        // Predicated region
        $region53: #{tpu_custom_call.1} parent=19 // pred_check
          %p597 = pneg %p293
        $region54: #{tpu_custom_call.1} parent=19 // pred_check_branch
          %599 = sbr.rel (%p597) target = $region56
        $region55: #{tpu_custom_call.1} parent=19 // pred_region
          %p600 = scmp.lt.s32.totalorder %s40, 1
          %s601 = scalar_select %p600, %s40, 1
          %s602 = smul.addr %s601, 4
          %s603 = scalar_lea.vmem %s9, %s602
        $region56: #{tpu_custom_call.1} parent=19 // pred_fallthru
          _
        // Predicated region
        $region57: #{tpu_custom_call.1} parent=19 // pred_check
          %p604 = pneg %p319
        $region58: #{tpu_custom_call.1} parent=19 // pred_check_branch
          %606 = sbr.rel (%p604) target = $region60
        $region59: #{tpu_custom_call.1} parent=19 // pred_region
          %s607 = sand.u32 %s32, 1
          %s608 = scalar_lea.sflag [#allocation3], %s607
          %s609 = sand.u32 %s309, 1
          %s610 = smul.addr %s609, 256
          %s611 = scalar_lea.vmem [#allocation10], %s610
          %s613 = ssub.s32 4096, 4096
          %614 = vsyncadd %s608, %s613
          %s615 = smul.addr %s40, 64
          %s616 = smul.addr %s615, 64
          %s617 = scalar_lea.hbm %s10, %s616
          %s618 = sshll.u32 %s611, 4
          %s619 = int_to_ptr.vmem [resolvable:$true] %s618
          %624 = dma.hbm_to_vmem [thread:$0]  %s617, 4096, %s619, %s608, 64, 64, 4
        $region60: #{tpu_custom_call.1} parent=19 // pred_fallthru
          _
        // Predicated region
        $region61: #{tpu_custom_call.1} parent=19 // pred_check
          %p625 = pneg %p345
        $region62: #{tpu_custom_call.1} parent=19 // pred_check_branch
          %627 = sbr.rel (%p625) target = $region64
        $region63: #{tpu_custom_call.1} parent=19 // pred_region
          %p628 = scmp.lt.s32.totalorder %s40, 1
          %s629 = scalar_select %p628, %s40, 1
          %s630 = scalar_lea.vmem %s11, %s629
        $region64: #{tpu_custom_call.1} parent=19 // pred_fallthru
          _
        // Predicated region
        $region65: #{tpu_custom_call.1} parent=19 // pred_check
          %p631 = pneg %p371
        $region66: #{tpu_custom_call.1} parent=19 // pred_check_branch
          %633 = sbr.rel (%p631) target = $region68
        $region67: #{tpu_custom_call.1} parent=19 // pred_region
          %p634 = scmp.lt.s32.totalorder %s40, 1
          %s635 = scalar_select %p634, %s40, 1
          %s636 = scalar_lea.vmem %s12, %s635
        $region68: #{tpu_custom_call.1} parent=19 // pred_fallthru
          _
        // Predicated region
        $region69: #{tpu_custom_call.1} parent=19 // pred_check
          %p637 = pneg %p397
        $region70: #{tpu_custom_call.1} parent=19 // pred_check_branch
          %639 = sbr.rel (%p637) target = $region72
        $region71: #{tpu_custom_call.1} parent=19 // pred_region
          %p640 = scmp.lt.s32.totalorder %s40, 1
          %s641 = scalar_select %p640, %s40, 1
          %s642 = scalar_lea.vmem %s13, %s641
        $region72: #{tpu_custom_call.1} parent=19 // pred_fallthru
          _
      $region20: #{tpu_custom_call.1} parent=5 // pred_fallthru
        _
      %p643 = scmp.le.s32.totalorder 1, %s32
      %p644 = scmp.lt.s32.totalorder %s32, 5
      %p645 = pnand %p643, %p644
      %p646 = pneg %p645
      // Predicated region
      $region73: #{tpu_custom_call.1} parent=5 // pred_check
        _
      $region74: #{tpu_custom_call.1} parent=5 // pred_check_branch
        %648 = sbr.rel (%p645) target = $region76
      $region75: #{tpu_custom_call.1} parent=5 // pred_region
        %s649 = ssub.s32 %s32, 1
        %s650 = sand.u32 %s37, 1
        %s651 = scalar_lea.sflag [#allocation3], %s650
        %s652 = sand.u32 %s57, 1
        %s653 = smul.addr %s652, 64
        %s654 = scalar_lea.vmem [#allocation2], %s653
        // Predicated region
        $region77: #{tpu_custom_call.1} parent=75 // pred_check
          %p655 = pneg %p70
        $region78: #{tpu_custom_call.1} parent=75 // pred_check_branch
          %657 = sbr.rel (%p655) target = $region80
        $region79: #{tpu_custom_call.1} parent=75 // pred_region
          %658 = dma.done %s651, 1024
        $region80: #{tpu_custom_call.1} parent=75 // pred_fallthru
          _
        // Predicated region
        $region81: #{tpu_custom_call.1} parent=75 // pred_check
          %p659 = pneg %p91
        $region82: #{tpu_custom_call.1} parent=75 // pred_check_branch
          %661 = sbr.rel (%p659) target = $region84
        $region83: #{tpu_custom_call.1} parent=75 // pred_region
          %662 = dma.done [#allocation6], 512
        $region84: #{tpu_custom_call.1} parent=75 // pred_fallthru
          _
        %s663 = sand.u32 %s37, 1
        %s664 = scalar_lea.sflag [#allocation3], %s663
        %s665 = sand.u32 %s104, 1
        %s666 = smul.addr %s665, 192
        %s667 = scalar_lea.vmem [#allocation7], %s666
        // Predicated region
        $region85: #{tpu_custom_call.1} parent=75 // pred_check
          %p668 = pneg %p117
        $region86: #{tpu_custom_call.1} parent=75 // pred_check_branch
          %670 = sbr.rel (%p668) target = $region88
        $region87: #{tpu_custom_call.1} parent=75 // pred_region
          %671 = dma.done %s664, 3072
        $region88: #{tpu_custom_call.1} parent=75 // pred_fallthru
          _
        %s672 = sand.u32 %s37, 1
        %s673 = scalar_lea.sflag [#allocation3], %s672
        %s674 = sand.u32 %s156, 1
        %s675 = smul.addr %s674, 64
        %s676 = scalar_lea.vmem [#allocation8], %s675
        // Predicated region
        $region89: #{tpu_custom_call.1} parent=75 // pred_check
          %p677 = pneg %p169
        $region90: #{tpu_custom_call.1} parent=75 // pred_check_branch
          %679 = sbr.rel (%p677) target = $region92
        $region91: #{tpu_custom_call.1} parent=75 // pred_region
          %680 = dma.done %s673, 1024
        $region92: #{tpu_custom_call.1} parent=75 // pred_fallthru
          _
        %s681 = sand.u32 %s37, 1
        %s682 = scalar_lea.sflag [#allocation3], %s681
        %s683 = sand.u32 %s260, 1
        %s684 = smul.addr %s683, 256
        %s685 = scalar_lea.vmem [#allocation9], %s684
        // Predicated region
        $region93: #{tpu_custom_call.1} parent=75 // pred_check
          %p686 = pneg %p273
        $region94: #{tpu_custom_call.1} parent=75 // pred_check_branch
          %688 = sbr.rel (%p686) target = $region96
        $region95: #{tpu_custom_call.1} parent=75 // pred_region
          %689 = dma.done %s682, 4096
        $region96: #{tpu_custom_call.1} parent=75 // pred_fallthru
          _
        %s690 = sand.u32 %s37, 1
        %s691 = scalar_lea.sflag [#allocation3], %s690
        %s692 = sand.u32 %s312, 1
        %s693 = smul.addr %s692, 256
        %s694 = scalar_lea.vmem [#allocation10], %s693
        // Predicated region
        $region97: #{tpu_custom_call.1} parent=75 // pred_check
          %p695 = pneg %p325
        $region98: #{tpu_custom_call.1} parent=75 // pred_check_branch
          %697 = sbr.rel (%p695) target = $region100
        $region99: #{tpu_custom_call.1} parent=75 // pred_region
          %698 = dma.done %s691, 4096
        $region100: #{tpu_custom_call.1} parent=75 // pred_fallthru
          _
        %s699 = sand.u32 %s37, 1
        %s700 = scalar_lea.sflag [#allocation3], %s699
        %s701 = sand.u32 %s57, 1
        %s702 = smul.addr %s701, 64
        %s703 = scalar_lea.vmem [#allocation2], %s702
        %p704 = pneg %p70
        %p705 = pneg %p67
        %p706 = pneg %p91
        %p707 = pneg %p88
        %s708 = sand.u32 %s37, 1
        %s709 = scalar_lea.sflag [#allocation3], %s708
        %s710 = sand.u32 %s104, 1
        %s711 = smul.addr %s710, 192
        %s712 = scalar_lea.vmem [#allocation7], %s711
        %p713 = pneg %p117
        %p714 = pneg %p114
        %p715 = scmp.lt.s32.totalorder %s42, 1
        %s716 = scalar_select %p715, %s42, 1
        %s717 = smul.addr %s716, 3
        %s718 = scalar_lea.vmem %s3, %s717
        %p719 = pneg %p143
        %p720 = pneg %p140
        %s721 = sand.u32 %s37, 1
        %s722 = scalar_lea.sflag [#allocation3], %s721
        %s723 = sand.u32 %s156, 1
        %s724 = smul.addr %s723, 64
        %s725 = scalar_lea.vmem [#allocation8], %s724
        %p726 = pneg %p169
        %p727 = pneg %p166
        %p728 = scmp.lt.s32.totalorder %s42, 1
        %s729 = scalar_select %p728, %s42, 1
        %s730 = scalar_lea.vmem %s5, %s729
        %p731 = pneg %p195
        %p732 = pneg %p192
        %p733 = scmp.lt.s32.totalorder %s42, 1
        %s734 = scalar_select %p733, %s42, 1
        %s735 = scalar_lea.vmem %s6, %s734
        %p736 = pneg %p221
        %p737 = pneg %p218
        %p738 = scmp.lt.s32.totalorder %s42, 1
        %s739 = scalar_select %p738, %s42, 1
        %s740 = scalar_lea.vmem %s7, %s739
        %p741 = pneg %p247
        %p742 = pneg %p244
        %s743 = sand.u32 %s37, 1
        %s744 = scalar_lea.sflag [#allocation3], %s743
        %s745 = sand.u32 %s260, 1
        %s746 = smul.addr %s745, 256
        %s747 = scalar_lea.vmem [#allocation9], %s746
        %p748 = pneg %p273
        %p749 = pneg %p270
        %p750 = scmp.lt.s32.totalorder %s42, 1
        %s751 = scalar_select %p750, %s42, 1
        %s752 = smul.addr %s751, 4
        %s753 = scalar_lea.vmem %s9, %s752
        %p754 = pneg %p299
        %p755 = pneg %p296
        %s756 = sand.u32 %s37, 1
        %s757 = scalar_lea.sflag [#allocation3], %s756
        %s758 = sand.u32 %s312, 1
        %s759 = smul.addr %s758, 256
        %s760 = scalar_lea.vmem [#allocation10], %s759
        %p761 = pneg %p325
        %p762 = pneg %p322
        %p763 = scmp.lt.s32.totalorder %s42, 1
        %s764 = scalar_select %p763, %s42, 1
        %s765 = scalar_lea.vmem %s11, %s764
        %p766 = pneg %p351
        %p767 = pneg %p348
        %p768 = scmp.lt.s32.totalorder %s42, 1
        %s769 = scalar_select %p768, %s42, 1
        %s770 = scalar_lea.vmem %s12, %s769
        %p771 = pneg %p377
        %p772 = pneg %p374
        %p773 = scmp.lt.s32.totalorder %s42, 1
        %s774 = scalar_select %p773, %s42, 1
        %s775 = scalar_lea.vmem %s13, %s774
        %p776 = pneg %p403
        %p777 = pneg %p400
        %p778 = pneg %p429
        %p779 = pneg %p426
        %s780 = sand.u32 %s416, 1
        %s781 = scalar_lea.sflag [#allocation4], %s780
        %s782 = sand.u32 %s416, 1
        %s783 = smul.addr %s782, 64
        %s784 = scalar_lea.vmem [#allocation11], %s783
        %p785 = pneg %p455
        %p786 = pneg %p452
        %s787 = sand.u32 %s442, 1
        %s788 = scalar_lea.sflag [#allocation13], %s787
        %s789 = sand.u32 %s442, 1
        %s790 = smul.addr %s789, 4
        %s791 = scalar_lea.vmem [#allocation12], %s790
        %s792 = smul.u32 4, %s41
        %p793 = scmp.lt.s32.totalorder %s42, 1
        %s794 = scalar_select %p793, %s42, 1
        %s795 = smul.addr %s794, 3
        %s796 = scalar_lea.vmem %s3, %s795
        %p797 = scmp.lt.s32.totalorder %s42, 1
        %s798 = scalar_select %p797, %s42, 1
        %s799 = scalar_lea.vmem %s5, %s798
        %p800 = scmp.lt.s32.totalorder %s42, 1
        %s801 = scalar_select %p800, %s42, 1
        %s802 = scalar_lea.vmem %s6, %s801
        %p803 = scmp.lt.s32.totalorder %s42, 1
        %s804 = scalar_select %p803, %s42, 1
        %s805 = scalar_lea.vmem %s7, %s804
        %p806 = scmp.lt.s32.totalorder %s42, 1
        %s807 = scalar_select %p806, %s42, 1
        %s808 = smul.addr %s807, 4
        %s809 = scalar_lea.vmem %s9, %s808
        %p810 = scmp.lt.s32.totalorder %s42, 1
        %s811 = scalar_select %p810, %s42, 1
        %s812 = scalar_lea.vmem %s11, %s811
        %p813 = scmp.lt.s32.totalorder %s42, 1
        %s814 = scalar_select %p813, %s42, 1
        %s815 = scalar_lea.vmem %s12, %s814
        %p816 = scmp.lt.s32.totalorder %s42, 1
        %s817 = scalar_select %p816, %s42, 1
        %s818 = scalar_lea.vmem %s13, %s817
        %s819 = smul.u32 4, %s41
        %s820 = smul.u32 4, %s41
        %p822 = scmp.eq.s32.totalorder %s42, 0
        // Predicated region
        $region101: #{tpu_custom_call.1} parent=75 // pred_check
          %p823 = pneg %p822
        $region102: #{tpu_custom_call.1} parent=75 // pred_check_branch
          %825 = sbr.rel (%p823) target = $region104
        $region103: #{tpu_custom_call.1} parent=75 // pred_region
          %v826 = vld [vmem:[%s654] sm:$0xff]
          %v827 = vld [vmem:[%s654 + $0x8] sm:$0xff]
          %v828 = vld [vmem:[%s654 + $0x10] sm:$0xff]
          %v829 = vld [vmem:[%s654 + $0x18] sm:$0xff]
          %v830 = vld [vmem:[%s654 + $0x20] sm:$0xff]
          %v831 = vld [vmem:[%s654 + $0x28] sm:$0xff]
          %v832 = vld [vmem:[%s654 + $0x30] sm:$0xff]
          %v833 = vld [vmem:[%s654 + $0x38] sm:$0xff]
          %834 = vst [vmem:[%s784] sm:$0xff] %v826
          %835 = vst [vmem:[%s784 + $0x8] sm:$0xff] %v827
          %836 = vst [vmem:[%s784 + $0x10] sm:$0xff] %v828
          %837 = vst [vmem:[%s784 + $0x18] sm:$0xff] %v829
          %838 = vst [vmem:[%s784 + $0x20] sm:$0xff] %v830
          %839 = vst [vmem:[%s784 + $0x28] sm:$0xff] %v831
          %840 = vst [vmem:[%s784 + $0x30] sm:$0xff] %v832
          %841 = vst [vmem:[%s784 + $0x38] sm:$0xff] %v833
        $region104: #{tpu_custom_call.1} parent=75 // pred_fallthru
          _
        %v842 = vld [vmem:[%s784] sm:$0xff]
        %v843 = vld [vmem:[%s784 + $0x8] sm:$0xff]
        %v844 = vld [vmem:[%s784 + $0x10] sm:$0xff]
        %v845 = vld [vmem:[%s784 + $0x18] sm:$0xff]
        %v846 = vld [vmem:[%s784 + $0x20] sm:$0xff]
        %v847 = vld [vmem:[%s784 + $0x28] sm:$0xff]
        %v848 = vld [vmem:[%s784 + $0x30] sm:$0xff]
        %v849 = vld [vmem:[%s784 + $0x38] sm:$0xff]
        %v850 = vpack.c.bf16 %v843, %v842
        %v851 = vpack.c.bf16 %v845, %v844
        %v852 = vpack.c.bf16 %v847, %v846
        %v853 = vpack.c.bf16 %v849, %v848
        %v854 = vld [vmem:[%s667] sm:$0xff]
        %v855 = vld [vmem:[%s667 + $0x8] sm:$0xf]
        %v856 = vld [vmem:[%s667 + $0xc] sm:$0xff]
        %v857 = vld [vmem:[%s667 + $0x14] sm:$0xf]
        %v858 = vld [vmem:[%s667 + $0x18] sm:$0xff]
        %v859 = vld [vmem:[%s667 + $0x20] sm:$0xf]
        %v860 = vld [vmem:[%s667 + $0x24] sm:$0xff]
        %v861 = vld [vmem:[%s667 + $0x2c] sm:$0xf]
        %v862 = vld [vmem:[%s667 + $0x30] sm:$0xff]
        %v863 = vld [vmem:[%s667 + $0x38] sm:$0xf]
        %v864 = vld [vmem:[%s667 + $0x3c] sm:$0xff]
        %v865 = vld [vmem:[%s667 + $0x44] sm:$0xf]
        %v866 = vld [vmem:[%s667 + $0x48] sm:$0xff]
        %v867 = vld [vmem:[%s667 + $0x50] sm:$0xf]
        %v868 = vld [vmem:[%s667 + $0x54] sm:$0xff]
        %v869 = vld [vmem:[%s667 + $0x5c] sm:$0xf]
        %v870 = vld [vmem:[%s667 + $0x60] sm:$0xff]
        %v871 = vld [vmem:[%s667 + $0x68] sm:$0xf]
        %v872 = vld [vmem:[%s667 + $0x6c] sm:$0xff]
        %v873 = vld [vmem:[%s667 + $0x74] sm:$0xf]
        %v874 = vld [vmem:[%s667 + $0x78] sm:$0xff]
        %v875 = vld [vmem:[%s667 + $0x80] sm:$0xf]
        %v876 = vld [vmem:[%s667 + $0x84] sm:$0xff]
        %v877 = vld [vmem:[%s667 + $0x8c] sm:$0xf]
        %v878 = vld [vmem:[%s667 + $0x90] sm:$0xff]
        %v879 = vld [vmem:[%s667 + $0x98] sm:$0xf]
        %v880 = vld [vmem:[%s667 + $0x9c] sm:$0xff]
        %v881 = vld [vmem:[%s667 + $0xa4] sm:$0xf]
        %v882 = vld [vmem:[%s667 + $0xa8] sm:$0xff]
        %v883 = vld [vmem:[%s667 + $0xb0] sm:$0xf]
        %v884 = vld [vmem:[%s667 + $0xb4] sm:$0xff]
        %v885 = vld [vmem:[%s667 + $0xbc] sm:$0xf]
        %v886 = vld [vmem:[%s796] sm:$0x7]
        %v888 = vlaneseq
        %v889 = vshrl.u32 %v888, 7
        %v890 = vsub.s32 0, %v889
        %v891 = vrot.slane %v886, %v890
        %v892 = vlaneseq
        %v893 = vshrl.u32 %v892, 7
        %v894 = vsub.s32 1, %v893
        %v895 = vrot.slane %v886, %v894
        %v896 = vlaneseq
        %v897 = vshrl.u32 %v896, 7
        %v898 = vsub.s32 2, %v897
        %v899 = vrot.slane %v886, %v898
        %v935 = vunpack.c.l.b16 %v854
        %v936 = vunpack.c.h.b16 %v854
        %v937 = vunpack.c.l.b16 %v855
        %v938 = vunpack.c.l.b16 %v856
        %v939 = vunpack.c.h.b16 %v856
        %v940 = vunpack.c.l.b16 %v857
        %v941 = vunpack.c.l.b16 %v858
        %v942 = vunpack.c.h.b16 %v858
        %v943 = vunpack.c.l.b16 %v859
        %v944 = vunpack.c.l.b16 %v860
        %v945 = vunpack.c.h.b16 %v860
        %v946 = vunpack.c.l.b16 %v861
        %v947 = vunpack.c.l.b16 %v862
        %v948 = vunpack.c.h.b16 %v862
        %v949 = vunpack.c.l.b16 %v863
        %v950 = vunpack.c.l.b16 %v864
        %v951 = vunpack.c.h.b16 %v864
        %v952 = vunpack.c.l.b16 %v865
        %v953 = vunpack.c.l.b16 %v866
        %v954 = vunpack.c.h.b16 %v866
        %v955 = vunpack.c.l.b16 %v867
        %v956 = vunpack.c.l.b16 %v868
        %v957 = vunpack.c.h.b16 %v868
        %v958 = vunpack.c.l.b16 %v869
        %v959 = vunpack.c.l.b16 %v870
        %v960 = vunpack.c.h.b16 %v870
        %v961 = vunpack.c.l.b16 %v871
        %v962 = vunpack.c.l.b16 %v872
        %v963 = vunpack.c.h.b16 %v872
        %v964 = vunpack.c.l.b16 %v873
        %v965 = vunpack.c.l.b16 %v874
        %v966 = vunpack.c.h.b16 %v874
        %v967 = vunpack.c.l.b16 %v875
        %v968 = vunpack.c.l.b16 %v876
        %v969 = vunpack.c.h.b16 %v876
        %v970 = vunpack.c.l.b16 %v877
        %v971 = vunpack.c.l.b16 %v878
        %v972 = vunpack.c.h.b16 %v878
        %v973 = vunpack.c.l.b16 %v879
        %v974 = vunpack.c.l.b16 %v880
        %v975 = vunpack.c.h.b16 %v880
        %v976 = vunpack.c.l.b16 %v881
        %v977 = vunpack.c.l.b16 %v882
        %v978 = vunpack.c.h.b16 %v882
        %v979 = vunpack.c.l.b16 %v883
        %v980 = vunpack.c.l.b16 %v884
        %v981 = vunpack.c.h.b16 %v884
        %v982 = vunpack.c.l.b16 %v885
        %v983 = vpack.c.b16 %v938, %v935
        %v984 = vpack.c.b16 %v939, %v936
        %v985 = vpack.c.b16 %v940, %v937
        %v986 = vpack.c.b16 %v944, %v941
        %v987 = vpack.c.b16 %v945, %v942
        %v988 = vpack.c.b16 %v946, %v943
        %v989 = vpack.c.b16 %v950, %v947
        %v990 = vpack.c.b16 %v951, %v948
        %v991 = vpack.c.b16 %v952, %v949
        %v992 = vpack.c.b16 %v956, %v953
        %v993 = vpack.c.b16 %v957, %v954
        %v994 = vpack.c.b16 %v958, %v955
        %v995 = vpack.c.b16 %v962, %v959
        %v996 = vpack.c.b16 %v963, %v960
        %v997 = vpack.c.b16 %v964, %v961
        %v998 = vpack.c.b16 %v968, %v965
        %v999 = vpack.c.b16 %v969, %v966
        %v1000 = vpack.c.b16 %v970, %v967
        %v1001 = vpack.c.b16 %v974, %v971
        %v1002 = vpack.c.b16 %v975, %v972
        %v1003 = vpack.c.b16 %v976, %v973
        %v1004 = vpack.c.b16 %v980, %v977
        %v1005 = vpack.c.b16 %v981, %v978
        %v1006 = vpack.c.b16 %v982, %v979
        %1031 = vmatprep.subr.bf16.mxu0 %v984
        %1032 = vmatpush1.bf16.msra.mxu0 %v983
        %1033 = vmatprep.subr.bf16.mxu0 %v987
        %1034 = vmatpush1.bf16.msra.mxu0 %v986
        %1035 = vmatprep.subr.bf16.mxu0 %v990
        %1036 = vmatpush1.bf16.msra.mxu0 %v989
        %1037 = vmatprep.subr.bf16.mxu0 %v993
        %1038 = vmatpush1.bf16.msra.mxu0 %v992
        %1039 = vmatprep.subr.bf16.mxu0 %v996
        %1040 = vmatpush1.bf16.msra.mxu0 %v995
        %1041 = vmatprep.subr.bf16.mxu0 %v999
        %1042 = vmatpush1.bf16.msra.mxu0 %v998
        %1043 = vmatprep.subr.bf16.mxu0 %v1002
        %1044 = vmatpush1.bf16.msra.mxu0 %v1001
        %1045 = vmatprep.subr.bf16.mxu0 %v1005
        %1046 = vmatpush1.bf16.msra.mxu0 %v1004
        %1047 = vmatprep.subr.bf16.mxu0 0
        %1048 = vmatpush1.bf16.msra.mxu0 0
        %1049 = vmatprep.subr.bf16.mxu0 0
        %1050 = vmatpush1.bf16.msra.mxu0 0
        %1051 = vmatprep.subr.bf16.mxu0 0
        %1052 = vmatpush1.bf16.msra.mxu0 0
        %1053 = vmatprep.subr.bf16.mxu0 0
        %1054 = vmatpush1.bf16.msra.mxu0 0
        %1055 = vmatprep.subr.bf16.mxu0 0
        %1056 = vmatpush1.bf16.msra.mxu0 0
        %1057 = vmatprep.subr.bf16.mxu0 0
        %1058 = vmatpush1.bf16.msra.mxu0 0
        %1059 = vmatprep.subr.bf16.mxu0 0
        %1060 = vmatpush1.bf16.msra.mxu0 0
        %1061 = vmatprep.subr.bf16.mxu0 0
        %1062 = vmatpush1.bf16.msra.mxu0 0
        %1063 = vmatprep.mubr.bf16.mxu0 0
        %1064 = vmatmul.mubr.bf16.gmra.mrb[0].mxu0 %v850
        %v1065 = vpop.f32.mrb[0].mxu0
        %v1066 = vadd.f32 %v891, %v1065
        %v1067 = vpop.f32.mrb[0].mxu0
        %v1068 = vadd.f32 %v895, %v1067
        %v1069 = vpop.f32.mrb[0].mxu0
        %v1070 = vadd.f32 %v891, %v1069
        %v1071 = vpop.f32.mrb[0].mxu0
        %v1072 = vadd.f32 %v895, %v1071
        %1073 = vmatprep.mubr.bf16.mxu0 0
        %1074 = vmatmul.mubr.bf16.gmra.mrb[0].mxu0 %v851
        %v1075 = vpop.f32.mrb[0].mxu0
        %v1076 = vadd.f32 %v891, %v1075
        %v1077 = vpop.f32.mrb[0].mxu0
        %v1078 = vadd.f32 %v895, %v1077
        %v1079 = vpop.f32.mrb[0].mxu0
        %v1080 = vadd.f32 %v891, %v1079
        %v1081 = vpop.f32.mrb[0].mxu0
        %v1082 = vadd.f32 %v895, %v1081
        %1083 = vmatprep.mubr.bf16.mxu0 0
        %1084 = vmatmul.mubr.bf16.gmra.mrb[0].mxu0 %v852
        %v1085 = vpop.f32.mrb[0].mxu0
        %v1086 = vadd.f32 %v891, %v1085
        %v1087 = vpop.f32.mrb[0].mxu0
        %v1088 = vadd.f32 %v895, %v1087
        %v1089 = vpop.f32.mrb[0].mxu0
        %v1090 = vadd.f32 %v891, %v1089
        %v1091 = vpop.f32.mrb[0].mxu0
        %v1092 = vadd.f32 %v895, %v1091
        %1093 = vmatprep.mubr.bf16.mxu0 0
        %1094 = vmatmul.mubr.bf16.gmra.mrb[0].mxu0 %v853
        %v1095 = vpop.f32.mrb[0].mxu0
        %v1096 = vadd.f32 %v891, %v1095
        %v1097 = vpop.f32.mrb[0].mxu0
        %v1098 = vadd.f32 %v895, %v1097
        %v1099 = vpop.f32.mrb[0].mxu0
        %v1100 = vadd.f32 %v891, %v1099
        %v1101 = vpop.f32.mrb[0].mxu0
        %v1102 = vadd.f32 %v895, %v1101
        %1103 = vdwg.mxu0
        %1104 = vmatprep.subr.bf16.mxu0 0
        %1105 = vmatpush1.bf16.msra.mxu0 %v985
        %1106 = vmatprep.subr.bf16.mxu0 0
        %1107 = vmatpush1.bf16.msra.mxu0 %v988
        %1108 = vmatprep.subr.bf16.mxu0 0
        %1109 = vmatpush1.bf16.msra.mxu0 %v991
        %1110 = vmatprep.subr.bf16.mxu0 0
        %1111 = vmatpush1.bf16.msra.mxu0 %v994
        %1112 = vmatprep.subr.bf16.mxu0 0
        %1113 = vmatpush1.bf16.msra.mxu0 %v997
        %1114 = vmatprep.subr.bf16.mxu0 0
        %1115 = vmatpush1.bf16.msra.mxu0 %v1000
        %1116 = vmatprep.subr.bf16.mxu0 0
        %1117 = vmatpush1.bf16.msra.mxu0 %v1003
        %1118 = vmatprep.subr.bf16.mxu0 0
        %1119 = vmatpush1.bf16.msra.mxu0 %v1006
        %1120 = vmatprep.subr.bf16.mxu0 0
        %1121 = vmatpush1.bf16.msra.mxu0 0
        %1122 = vmatprep.subr.bf16.mxu0 0
        %1123 = vmatpush1.bf16.msra.mxu0 0
        %1124 = vmatprep.subr.bf16.mxu0 0
        %1125 = vmatpush1.bf16.msra.mxu0 0
        %1126 = vmatprep.subr.bf16.mxu0 0
        %1127 = vmatpush1.bf16.msra.mxu0 0
        %1128 = vmatprep.subr.bf16.mxu0 0
        %1129 = vmatpush1.bf16.msra.mxu0 0
        %1130 = vmatprep.subr.bf16.mxu0 0
        %1131 = vmatpush1.bf16.msra.mxu0 0
        %1132 = vmatprep.subr.bf16.mxu0 0
        %1133 = vmatpush1.bf16.msra.mxu0 0
        %1134 = vmatprep.subr.bf16.mxu0 0
        %1135 = vmatpush1.bf16.msra.mxu0 0
        %1136 = vmatprep.mubr.bf16.mxu0 0
        %1137 = vmatmul.mubr.bf16.gmra.mrb[0].mxu0 %v850
        %v1138 = vpop.f32.mrb[0].mxu0
        %v1139 = vadd.f32 %v899, %v1138
        %v1140 = vpop.f32.mrb[0].mxu0
        %v1141 = vpop.f32.mrb[0].mxu0
        %v1142 = vadd.f32 %v899, %v1141
        %v1143 = vpop.f32.mrb[0].mxu0
        %1144 = vmatprep.mubr.bf16.mxu0 0
        %1145 = vmatmul.mubr.bf16.gmra.mrb[0].mxu0 %v851
        %v1146 = vpop.f32.mrb[0].mxu0
        %v1147 = vadd.f32 %v899, %v1146
        %v1148 = vpop.f32.mrb[0].mxu0
        %v1149 = vpop.f32.mrb[0].mxu0
        %v1150 = vadd.f32 %v899, %v1149
        %v1151 = vpop.f32.mrb[0].mxu0
        %1152 = vmatprep.mubr.bf16.mxu0 0
        %1153 = vmatmul.mubr.bf16.gmra.mrb[0].mxu0 %v852
        %v1154 = vpop.f32.mrb[0].mxu0
        %v1155 = vadd.f32 %v899, %v1154
        %v1156 = vpop.f32.mrb[0].mxu0
        %v1157 = vpop.f32.mrb[0].mxu0
        %v1158 = vadd.f32 %v899, %v1157
        %v1159 = vpop.f32.mrb[0].mxu0
        %1160 = vmatprep.mubr.bf16.mxu0 0
        %1161 = vmatmul.mubr.bf16.gmra.mrb[0].mxu0 %v853
        %v1162 = vpop.f32.mrb[0].mxu0
        %v1163 = vadd.f32 %v899, %v1162
        %v1164 = vpop.f32.mrb[0].mxu0
        %v1165 = vpop.f32.mrb[0].mxu0
        %v1166 = vadd.f32 %v899, %v1165
        %v1167 = vpop.f32.mrb[0].mxu0
        %1168 = vdwg.mxu0
        %v1169 = vld [vmem:[#allocation5] sm:$0xff]
        %v1170 = vld [vmem:[#allocation5 + $0x8] sm:$0xff]
        %v1171 = vld [vmem:[#allocation5 + $0x10] sm:$0xff]
        %v1172 = vld [vmem:[#allocation5 + $0x18] sm:$0xff]
        %v1173 = vpack.c.bf16 %v1070, %v1066
        %v1174 = vpack.c.bf16 %v1080, %v1076
        %v1175 = vpack.c.bf16 %v1090, %v1086
        %v1176 = vpack.c.bf16 %v1100, %v1096
        %v1177 = vpack.c.bf16 %v1072, %v1068
        %v1178 = vpack.c.bf16 %v1082, %v1078
        %v1179 = vpack.c.bf16 %v1092, %v1088
        %v1180 = vpack.c.bf16 %v1102, %v1098
        %v1181 = vpack.c.bf16 %v1142, %v1139
        %v1182 = vpack.c.bf16 %v1150, %v1147
        %v1183 = vpack.c.bf16 %v1158, %v1155
        %v1184 = vpack.c.bf16 %v1166, %v1163
        %vm1185 = vcmask 523264
        %v1187 = vsel %vm1185, %v1173, 0
        %v1190 = vsel %vm1185, %v1177, 0
        %1192 = vmatprep.subr.bf16.mxu0 0
        %1193 = vmatpush1.bf16.xpose.msra.mxu0 %v1190
        %1194 = vmatprep.subr.bf16.mxu0 0
        %1195 = vmatpush1.bf16.xpose.msra.mxu0 0
        %1196 = vmatprep.subr.bf16.mxu0 0
        %1197 = vmatpush1.bf16.xpose.msra.mxu0 0
        %1198 = vmatprep.subr.bf16.mxu0 0
        %1199 = vmatpush1.bf16.xpose.msra.mxu0 0
        %1200 = vmatprep.subr.bf16.mxu0 0
        %1201 = vmatpush1.bf16.xpose.msra.mxu0 0
        %1202 = vmatprep.subr.bf16.mxu0 0
        %1203 = vmatpush1.bf16.xpose.msra.mxu0 0
        %1204 = vmatprep.subr.bf16.mxu0 0
        %1205 = vmatpush1.bf16.xpose.msra.mxu0 0
        %1206 = vmatprep.subr.bf16.mxu0 0
        %1207 = vmatpush1.bf16.xpose.msra.mxu0 0
        %1208 = vmatprep.subr.bf16.mxu0 0
        %1209 = vmatpush1.bf16.xpose.msra.mxu0 0
        %1210 = vmatprep.subr.bf16.mxu0 0
        %1211 = vmatpush1.bf16.xpose.msra.mxu0 0
        %1212 = vmatprep.subr.bf16.mxu0 0
        %1213 = vmatpush1.bf16.xpose.msra.mxu0 0
        %1214 = vmatprep.subr.bf16.mxu0 0
        %1215 = vmatpush1.bf16.xpose.msra.mxu0 0
        %1216 = vmatprep.subr.bf16.mxu0 0
        %1217 = vmatpush1.bf16.xpose.msra.mxu0 0
        %1218 = vmatprep.subr.bf16.mxu0 0
        %1219 = vmatpush1.bf16.xpose.msra.mxu0 0
        %1220 = vmatprep.subr.bf16.mxu0 0
        %1221 = vmatpush1.bf16.xpose.msra.mxu0 0
        %1222 = vmatprep.subr.bf16.mxu0 0
        %1223 = vmatpush1.bf16.xpose.msra.mxu0 0
        %1224 = vmatprep.mubr.bf16.mxu0 0
        %1225 = vmatmul.mubr.bf16.gmra.mrb[0].mxu0 %v1187
        %v1226 = vpop.f32.mrb[0].mxu0
        %v1227 = vadd.f32 %v1169, %v1226
        %v1228 = vpop.f32.mrb[0].mxu0
        %v1229 = vpop.f32.mrb[0].mxu0
        %v1230 = vadd.f32 %v1170, %v1229
        %v1231 = vpop.f32.mrb[0].mxu0
        %1232 = vdwg.mxu0
        %v1234 = vsel %vm1185, %v1174, 0
        %v1237 = vsel %vm1185, %v1178, 0
        %1239 = vmatprep.subr.bf16.mxu0 0
        %1240 = vmatpush1.bf16.xpose.msra.mxu0 %v1237
        %1241 = vmatprep.subr.bf16.mxu0 0
        %1242 = vmatpush1.bf16.xpose.msra.mxu0 0
        %1243 = vmatprep.subr.bf16.mxu0 0
        %1244 = vmatpush1.bf16.xpose.msra.mxu0 0
        %1245 = vmatprep.subr.bf16.mxu0 0
        %1246 = vmatpush1.bf16.xpose.msra.mxu0 0
        %1247 = vmatprep.subr.bf16.mxu0 0
        %1248 = vmatpush1.bf16.xpose.msra.mxu0 0
        %1249 = vmatprep.subr.bf16.mxu0 0
        %1250 = vmatpush1.bf16.xpose.msra.mxu0 0
        %1251 = vmatprep.subr.bf16.mxu0 0
        %1252 = vmatpush1.bf16.xpose.msra.mxu0 0
        %1253 = vmatprep.subr.bf16.mxu0 0
        %1254 = vmatpush1.bf16.xpose.msra.mxu0 0
        %1255 = vmatprep.subr.bf16.mxu0 0
        %1256 = vmatpush1.bf16.xpose.msra.mxu0 0
        %1257 = vmatprep.subr.bf16.mxu0 0
        %1258 = vmatpush1.bf16.xpose.msra.mxu0 0
        %1259 = vmatprep.subr.bf16.mxu0 0
        %1260 = vmatpush1.bf16.xpose.msra.mxu0 0
        %1261 = vmatprep.subr.bf16.mxu0 0
        %1262 = vmatpush1.bf16.xpose.msra.mxu0 0
        %1263 = vmatprep.subr.bf16.mxu0 0
        %1264 = vmatpush1.bf16.xpose.msra.mxu0 0
        %1265 = vmatprep.subr.bf16.mxu0 0
        %1266 = vmatpush1.bf16.xpose.msra.mxu0 0
        %1267 = vmatprep.subr.bf16.mxu0 0
        %1268 = vmatpush1.bf16.xpose.msra.mxu0 0
        %1269 = vmatprep.subr.bf16.mxu0 0
        %1270 = vmatpush1.bf16.xpose.msra.mxu0 0
        %1271 = vmatprep.mubr.bf16.mxu0 0
        %1272 = vmatmul.mubr.bf16.gmra.mrb[0].mxu0 %v1234
        %v1273 = vpop.f32.mrb[0].mxu0
        %v1274 = vadd.f32 %v1169, %v1273
        %v1275 = vpop.f32.mrb[0].mxu0
        %v1276 = vpop.f32.mrb[0].mxu0
        %v1277 = vadd.f32 %v1170, %v1276
        %v1278 = vpop.f32.mrb[0].mxu0
        %1279 = vdwg.mxu0
        %v1281 = vsel %vm1185, %v1175, 0
        %v1284 = vsel %vm1185, %v1179, 0
        %1286 = vmatprep.subr.bf16.mxu0 0
        %1287 = vmatpush1.bf16.xpose.msra.mxu0 %v1284
        %1288 = vmatprep.subr.bf16.mxu0 0
        %1289 = vmatpush1.bf16.xpose.msra.mxu0 0
        %1290 = vmatprep.subr.bf16.mxu0 0
        %1291 = vmatpush1.bf16.xpose.msra.mxu0 0
        %1292 = vmatprep.subr.bf16.mxu0 0
        %1293 = vmatpush1.bf16.xpose.msra.mxu0 0
        %1294 = vmatprep.subr.bf16.mxu0 0
        %1295 = vmatpush1.bf16.xpose.msra.mxu0 0
        %1296 = vmatprep.subr.bf16.mxu0 0
        %1297 = vmatpush1.bf16.xpose.msra.mxu0 0
        %1298 = vmatprep.subr.bf16.mxu0 0
        %1299 = vmatpush1.bf16.xpose.msra.mxu0 0
        %1300 = vmatprep.subr.bf16.mxu0 0
        %1301 = vmatpush1.bf16.xpose.msra.mxu0 0
        %1302 = vmatprep.subr.bf16.mxu0 0
        %1303 = vmatpush1.bf16.xpose.msra.mxu0 0
        %1304 = vmatprep.subr.bf16.mxu0 0
        %1305 = vmatpush1.bf16.xpose.msra.mxu0 0
        %1306 = vmatprep.subr.bf16.mxu0 0
        %1307 = vmatpush1.bf16.xpose.msra.mxu0 0
        %1308 = vmatprep.subr.bf16.mxu0 0
        %1309 = vmatpush1.bf16.xpose.msra.mxu0 0
        %1310 = vmatprep.subr.bf16.mxu0 0
        %1311 = vmatpush1.bf16.xpose.msra.mxu0 0
        %1312 = vmatprep.subr.bf16.mxu0 0
        %1313 = vmatpush1.bf16.xpose.msra.mxu0 0
        %1314 = vmatprep.subr.bf16.mxu0 0
        %1315 = vmatpush1.bf16.xpose.msra.mxu0 0
        %1316 = vmatprep.subr.bf16.mxu0 0
        %1317 = vmatpush1.bf16.xpose.msra.mxu0 0
        %1318 = vmatprep.mubr.bf16.mxu0 0
        %1319 = vmatmul.mubr.bf16.gmra.mrb[0].mxu0 %v1281
        %v1320 = vpop.f32.mrb[0].mxu0
        %v1321 = vadd.f32 %v1169, %v1320
        %v1322 = vpop.f32.mrb[0].mxu0
        %v1323 = vpop.f32.mrb[0].mxu0
        %v1324 = vadd.f32 %v1170, %v1323
        %v1325 = vpop.f32.mrb[0].mxu0
        %1326 = vdwg.mxu0
        %v1328 = vsel %vm1185, %v1176, 0
        %v1331 = vsel %vm1185, %v1180, 0
        %1333 = vmatprep.subr.bf16.mxu0 0
        %1334 = vmatpush1.bf16.xpose.msra.mxu0 %v1331
        %1335 = vmatprep.subr.bf16.mxu0 0
        %1336 = vmatpush1.bf16.xpose.msra.mxu0 0
        %1337 = vmatprep.subr.bf16.mxu0 0
        %1338 = vmatpush1.bf16.xpose.msra.mxu0 0
        %1339 = vmatprep.subr.bf16.mxu0 0
        %1340 = vmatpush1.bf16.xpose.msra.mxu0 0
        %1341 = vmatprep.subr.bf16.mxu0 0
        %1342 = vmatpush1.bf16.xpose.msra.mxu0 0
        %1343 = vmatprep.subr.bf16.mxu0 0
        %1344 = vmatpush1.bf16.xpose.msra.mxu0 0
        %1345 = vmatprep.subr.bf16.mxu0 0
        %1346 = vmatpush1.bf16.xpose.msra.mxu0 0
        %1347 = vmatprep.subr.bf16.mxu0 0
        %1348 = vmatpush1.bf16.xpose.msra.mxu0 0
        %1349 = vmatprep.subr.bf16.mxu0 0
        %1350 = vmatpush1.bf16.xpose.msra.mxu0 0
        %1351 = vmatprep.subr.bf16.mxu0 0
        %1352 = vmatpush1.bf16.xpose.msra.mxu0 0
        %1353 = vmatprep.subr.bf16.mxu0 0
        %1354 = vmatpush1.bf16.xpose.msra.mxu0 0
        %1355 = vmatprep.subr.bf16.mxu0 0
        %1356 = vmatpush1.bf16.xpose.msra.mxu0 0
        %1357 = vmatprep.subr.bf16.mxu0 0
        %1358 = vmatpush1.bf16.xpose.msra.mxu0 0
        %1359 = vmatprep.subr.bf16.mxu0 0
        %1360 = vmatpush1.bf16.xpose.msra.mxu0 0
        %1361 = vmatprep.subr.bf16.mxu0 0
        %1362 = vmatpush1.bf16.xpose.msra.mxu0 0
        %1363 = vmatprep.subr.bf16.mxu0 0
        %1364 = vmatpush1.bf16.xpose.msra.mxu0 0
        %1365 = vmatprep.mubr.bf16.mxu0 0
        %1366 = vmatmul.mubr.bf16.gmra.mrb[0].mxu0 %v1328
        %v1367 = vpop.f32.mrb[0].mxu0
        %v1368 = vadd.f32 %v1169, %v1367
        %v1369 = vpop.f32.mrb[0].mxu0
        %v1370 = vpop.f32.mrb[0].mxu0
        %v1371 = vadd.f32 %v1170, %v1370
        %v1372 = vpop.f32.mrb[0].mxu0
        %1373 = vdwg.mxu0
        %vm1374 = vcmask 130048
        %v1375 = vsel %vm1374, %v1227, -inf
        %1376 = vmax.xlane.f32.xlu0 %v1375
        %v1377 = vpop.xlane.xlu0 %1376
        %v1378 = vsel %vm1374, %v1230, -inf
        %1379 = vmax.xlane.f32.xlu0 %v1378
        %v1380 = vpop.xlane.xlu0 %1379
        %v1381 = vsel %vm1374, %v1274, -inf
        %1382 = vmax.xlane.f32.xlu0 %v1381
        %v1383 = vpop.xlane.xlu0 %1382
        %v1384 = vsel %vm1374, %v1277, -inf
        %1385 = vmax.xlane.f32.xlu0 %v1384
        %v1386 = vpop.xlane.xlu0 %1385
        %v1387 = vsel %vm1374, %v1321, -inf
        %1388 = vmax.xlane.f32.xlu0 %v1387
        %v1389 = vpop.xlane.xlu0 %1388
        %v1390 = vsel %vm1374, %v1324, -inf
        %1391 = vmax.xlane.f32.xlu0 %v1390
        %v1392 = vpop.xlane.xlu0 %1391
        %v1393 = vsel %vm1374, %v1368, -inf
        %1394 = vmax.xlane.f32.xlu0 %v1393
        %v1395 = vpop.xlane.xlu0 %1394
        %v1396 = vsel %vm1374, %v1371, -inf
        %1397 = vmax.xlane.f32.xlu0 %v1396
        %v1398 = vpop.xlane.xlu0 %1397
        %v1399 = vsub.f32 %v1227, %v1377
        %v1400 = vsub.f32 %v1230, %v1380
        %v1401 = vsub.f32 %v1274, %v1383
        %v1402 = vsub.f32 %v1277, %v1386
        %v1403 = vsub.f32 %v1321, %v1389
        %v1404 = vsub.f32 %v1324, %v1392
        %v1405 = vsub.f32 %v1368, %v1395
        %v1406 = vsub.f32 %v1371, %v1398
        %v1407 = vmul.f32 %v1399, 1.442695
        %v1408 = vpow.pop %v1407
        %v1409 = vmul.f32 %v1400, 1.442695
        %v1410 = vpow.pop %v1409
        %v1411 = vmul.f32 %v1401, 1.442695
        %v1412 = vpow.pop %v1411
        %v1413 = vmul.f32 %v1402, 1.442695
        %v1414 = vpow.pop %v1413
        %v1415 = vmul.f32 %v1403, 1.442695
        %v1416 = vpow.pop %v1415
        %v1417 = vmul.f32 %v1404, 1.442695
        %v1418 = vpow.pop %v1417
        %v1419 = vmul.f32 %v1405, 1.442695
        %v1420 = vpow.pop %v1419
        %v1421 = vmul.f32 %v1406, 1.442695
        %v1422 = vpow.pop %v1421
        %v1423 = vsel %vm1374, %v1408, 0.0
        %1424 = vadd.xlane.f32.xlu0 %v1423
        %v1425 = vpop.xlane.xlu0 %1424
        %v1426 = vsel %vm1374, %v1410, 0.0
        %1427 = vadd.xlane.f32.xlu0 %v1426
        %v1428 = vpop.xlane.xlu0 %1427
        %v1429 = vsel %vm1374, %v1412, 0.0
        %1430 = vadd.xlane.f32.xlu0 %v1429
        %v1431 = vpop.xlane.xlu0 %1430
        %v1432 = vsel %vm1374, %v1414, 0.0
        %1433 = vadd.xlane.f32.xlu0 %v1432
        %v1434 = vpop.xlane.xlu0 %1433
        %v1435 = vsel %vm1374, %v1416, 0.0
        %1436 = vadd.xlane.f32.xlu0 %v1435
        %v1437 = vpop.xlane.xlu0 %1436
        %v1438 = vsel %vm1374, %v1418, 0.0
        %1439 = vadd.xlane.f32.xlu0 %v1438
        %v1440 = vpop.xlane.xlu0 %1439
        %v1441 = vsel %vm1374, %v1420, 0.0
        %1442 = vadd.xlane.f32.xlu0 %v1441
        %v1443 = vpop.xlane.xlu0 %1442
        %v1444 = vsel %vm1374, %v1422, 0.0
        %1445 = vadd.xlane.f32.xlu0 %v1444
        %v1446 = vpop.xlane.xlu0 %1445
        %v1447 = vrcp.pop %v1425
        %v1448 = vrcp.pop %v1428
        %v1449 = vrcp.pop %v1431
        %v1450 = vrcp.pop %v1434
        %v1451 = vrcp.pop %v1437
        %v1452 = vrcp.pop %v1440
        %v1453 = vrcp.pop %v1443
        %v1454 = vrcp.pop %v1446
        %v1455 = vmul.f32 %v1408, %v1447
        %v1456 = vmul.f32 %v1410, %v1448
        %v1457 = vmul.f32 %v1412, %v1449
        %v1458 = vmul.f32 %v1414, %v1450
        %v1459 = vmul.f32 %v1416, %v1451
        %v1460 = vmul.f32 %v1418, %v1452
        %v1461 = vmul.f32 %v1420, %v1453
        %v1462 = vmul.f32 %v1422, %v1454
        %v1463 = vpack.c.bf16 %v1456, %v1455
        %v1464 = vpack.c.bf16 %v1458, %v1457
        %v1465 = vpack.c.bf16 %v1460, %v1459
        %v1466 = vpack.c.bf16 %v1462, %v1461
        %v1468 = vsel %vm1374, %v1463, 0
        %1470 = vmatprep.subr.bf16.mxu0 0
        %1471 = vmatpush1.bf16.msra.mxu0 %v1181
        %1472 = vmatprep.subr.bf16.mxu0 0
        %1473 = vmatpush1.bf16.msra.mxu0 0
        %1474 = vmatprep.subr.bf16.mxu0 0
        %1475 = vmatpush1.bf16.msra.mxu0 0
        %1476 = vmatprep.subr.bf16.mxu0 0
        %1477 = vmatpush1.bf16.msra.mxu0 0
        %1478 = vmatprep.subr.bf16.mxu0 0
        %1479 = vmatpush1.bf16.msra.mxu0 0
        %1480 = vmatprep.subr.bf16.mxu0 0
        %1481 = vmatpush1.bf16.msra.mxu0 0
        %1482 = vmatprep.subr.bf16.mxu0 0
        %1483 = vmatpush1.bf16.msra.mxu0 0
        %1484 = vmatprep.subr.bf16.mxu0 0
        %1485 = vmatpush1.bf16.msra.mxu0 0
        %1486 = vmatprep.subr.bf16.mxu0 0
        %1487 = vmatpush1.bf16.msra.mxu0 0
        %1488 = vmatprep.subr.bf16.mxu0 0
        %1489 = vmatpush1.bf16.msra.mxu0 0
        %1490 = vmatprep.subr.bf16.mxu0 0
        %1491 = vmatpush1.bf16.msra.mxu0 0
        %1492 = vmatprep.subr.bf16.mxu0 0
        %1493 = vmatpush1.bf16.msra.mxu0 0
        %1494 = vmatprep.subr.bf16.mxu0 0
        %1495 = vmatpush1.bf16.msra.mxu0 0
        %1496 = vmatprep.subr.bf16.mxu0 0
        %1497 = vmatpush1.bf16.msra.mxu0 0
        %1498 = vmatprep.subr.bf16.mxu0 0
        %1499 = vmatpush1.bf16.msra.mxu0 0
        %1500 = vmatprep.subr.bf16.mxu0 0
        %1501 = vmatpush1.bf16.msra.mxu0 0
        %1502 = vmatprep.mubr.bf16.mxu0 0
        %1503 = vmatmul.mubr.bf16.gmra.mrb[0].mxu0 %v1468
        %v1504 = vpop.f32.mrb[0].mxu0
        %v1505 = vadd.f32 0.0, %v1504
        %v1506 = vpop.f32.mrb[0].mxu0
        %v1507 = vpop.f32.mrb[0].mxu0
        %v1508 = vadd.f32 0.0, %v1507
        %v1509 = vpop.f32.mrb[0].mxu0
        %1510 = vdwg.mxu0
        %v1512 = vsel %vm1374, %v1464, 0
        %1514 = vmatprep.subr.bf16.mxu0 0
        %1515 = vmatpush1.bf16.msra.mxu0 %v1182
        %1516 = vmatprep.subr.bf16.mxu0 0
        %1517 = vmatpush1.bf16.msra.mxu0 0
        %1518 = vmatprep.subr.bf16.mxu0 0
        %1519 = vmatpush1.bf16.msra.mxu0 0
        %1520 = vmatprep.subr.bf16.mxu0 0
        %1521 = vmatpush1.bf16.msra.mxu0 0
        %1522 = vmatprep.subr.bf16.mxu0 0
        %1523 = vmatpush1.bf16.msra.mxu0 0
        %1524 = vmatprep.subr.bf16.mxu0 0
        %1525 = vmatpush1.bf16.msra.mxu0 0
        %1526 = vmatprep.subr.bf16.mxu0 0
        %1527 = vmatpush1.bf16.msra.mxu0 0
        %1528 = vmatprep.subr.bf16.mxu0 0
        %1529 = vmatpush1.bf16.msra.mxu0 0
        %1530 = vmatprep.subr.bf16.mxu0 0
        %1531 = vmatpush1.bf16.msra.mxu0 0
        %1532 = vmatprep.subr.bf16.mxu0 0
        %1533 = vmatpush1.bf16.msra.mxu0 0
        %1534 = vmatprep.subr.bf16.mxu0 0
        %1535 = vmatpush1.bf16.msra.mxu0 0
        %1536 = vmatprep.subr.bf16.mxu0 0
        %1537 = vmatpush1.bf16.msra.mxu0 0
        %1538 = vmatprep.subr.bf16.mxu0 0
        %1539 = vmatpush1.bf16.msra.mxu0 0
        %1540 = vmatprep.subr.bf16.mxu0 0
        %1541 = vmatpush1.bf16.msra.mxu0 0
        %1542 = vmatprep.subr.bf16.mxu0 0
        %1543 = vmatpush1.bf16.msra.mxu0 0
        %1544 = vmatprep.subr.bf16.mxu0 0
        %1545 = vmatpush1.bf16.msra.mxu0 0
        %1546 = vmatprep.mubr.bf16.mxu0 0
        %1547 = vmatmul.mubr.bf16.gmra.mrb[0].mxu0 %v1512
        %v1548 = vpop.f32.mrb[0].mxu0
        %v1549 = vadd.f32 0.0, %v1548
        %v1550 = vpop.f32.mrb[0].mxu0
        %v1551 = vpop.f32.mrb[0].mxu0
        %v1552 = vadd.f32 0.0, %v1551
        %v1553 = vpop.f32.mrb[0].mxu0
        %1554 = vdwg.mxu0
        %v1556 = vsel %vm1374, %v1465, 0
        %1558 = vmatprep.subr.bf16.mxu0 0
        %1559 = vmatpush1.bf16.msra.mxu0 %v1183
        %1560 = vmatprep.subr.bf16.mxu0 0
        %1561 = vmatpush1.bf16.msra.mxu0 0
        %1562 = vmatprep.subr.bf16.mxu0 0
        %1563 = vmatpush1.bf16.msra.mxu0 0
        %1564 = vmatprep.subr.bf16.mxu0 0
        %1565 = vmatpush1.bf16.msra.mxu0 0
        %1566 = vmatprep.subr.bf16.mxu0 0
        %1567 = vmatpush1.bf16.msra.mxu0 0
        %1568 = vmatprep.subr.bf16.mxu0 0
        %1569 = vmatpush1.bf16.msra.mxu0 0
        %1570 = vmatprep.subr.bf16.mxu0 0
        %1571 = vmatpush1.bf16.msra.mxu0 0
        %1572 = vmatprep.subr.bf16.mxu0 0
        %1573 = vmatpush1.bf16.msra.mxu0 0
        %1574 = vmatprep.subr.bf16.mxu0 0
        %1575 = vmatpush1.bf16.msra.mxu0 0
        %1576 = vmatprep.subr.bf16.mxu0 0
        %1577 = vmatpush1.bf16.msra.mxu0 0
        %1578 = vmatprep.subr.bf16.mxu0 0
        %1579 = vmatpush1.bf16.msra.mxu0 0
        %1580 = vmatprep.subr.bf16.mxu0 0
        %1581 = vmatpush1.bf16.msra.mxu0 0
        %1582 = vmatprep.subr.bf16.mxu0 0
        %1583 = vmatpush1.bf16.msra.mxu0 0
        %1584 = vmatprep.subr.bf16.mxu0 0
        %1585 = vmatpush1.bf16.msra.mxu0 0
        %1586 = vmatprep.subr.bf16.mxu0 0
        %1587 = vmatpush1.bf16.msra.mxu0 0
        %1588 = vmatprep.subr.bf16.mxu0 0
        %1589 = vmatpush1.bf16.msra.mxu0 0
        %1590 = vmatprep.mubr.bf16.mxu0 0
        %1591 = vmatmul.mubr.bf16.gmra.mrb[0].mxu0 %v1556
        %v1592 = vpop.f32.mrb[0].mxu0
        %v1593 = vadd.f32 0.0, %v1592
        %v1594 = vpop.f32.mrb[0].mxu0
        %v1595 = vpop.f32.mrb[0].mxu0
        %v1596 = vadd.f32 0.0, %v1595
        %v1597 = vpop.f32.mrb[0].mxu0
        %1598 = vdwg.mxu0
        %v1600 = vsel %vm1374, %v1466, 0
        %1602 = vmatprep.subr.bf16.mxu0 0
        %1603 = vmatpush1.bf16.msra.mxu0 %v1184
        %1604 = vmatprep.subr.bf16.mxu0 0
        %1605 = vmatpush1.bf16.msra.mxu0 0
        %1606 = vmatprep.subr.bf16.mxu0 0
        %1607 = vmatpush1.bf16.msra.mxu0 0
        %1608 = vmatprep.subr.bf16.mxu0 0
        %1609 = vmatpush1.bf16.msra.mxu0 0
        %1610 = vmatprep.subr.bf16.mxu0 0
        %1611 = vmatpush1.bf16.msra.mxu0 0
        %1612 = vmatprep.subr.bf16.mxu0 0
        %1613 = vmatpush1.bf16.msra.mxu0 0
        %1614 = vmatprep.subr.bf16.mxu0 0
        %1615 = vmatpush1.bf16.msra.mxu0 0
        %1616 = vmatprep.subr.bf16.mxu0 0
        %1617 = vmatpush1.bf16.msra.mxu0 0
        %1618 = vmatprep.subr.bf16.mxu0 0
        %1619 = vmatpush1.bf16.msra.mxu0 0
        %1620 = vmatprep.subr.bf16.mxu0 0
        %1621 = vmatpush1.bf16.msra.mxu0 0
        %1622 = vmatprep.subr.bf16.mxu0 0
        %1623 = vmatpush1.bf16.msra.mxu0 0
        %1624 = vmatprep.subr.bf16.mxu0 0
        %1625 = vmatpush1.bf16.msra.mxu0 0
        %1626 = vmatprep.subr.bf16.mxu0 0
        %1627 = vmatpush1.bf16.msra.mxu0 0
        %1628 = vmatprep.subr.bf16.mxu0 0
        %1629 = vmatpush1.bf16.msra.mxu0 0
        %1630 = vmatprep.subr.bf16.mxu0 0
        %1631 = vmatpush1.bf16.msra.mxu0 0
        %1632 = vmatprep.subr.bf16.mxu0 0
        %1633 = vmatpush1.bf16.msra.mxu0 0
        %1634 = vmatprep.mubr.bf16.mxu0 0
        %1635 = vmatmul.mubr.bf16.gmra.mrb[0].mxu0 %v1600
        %v1636 = vpop.f32.mrb[0].mxu0
        %v1637 = vadd.f32 0.0, %v1636
        %v1638 = vpop.f32.mrb[0].mxu0
        %v1639 = vpop.f32.mrb[0].mxu0
        %v1640 = vadd.f32 0.0, %v1639
        %v1641 = vpop.f32.mrb[0].mxu0
        %1642 = vdwg.mxu0
        %1644 = vrot.lane.b32.xlu0 %v1173, 64
        %v1645 = vpop.permute.xlu0 %1644
        %1647 = vrot.lane.b32.xlu0 %v1177, 64
        %v1648 = vpop.permute.xlu0 %1647
        %v1650 = vsel %vm1185, %v1645, 0
        %v1653 = vsel %vm1185, %v1648, 0
        %1655 = vmatprep.subr.bf16.mxu0 0
        %1656 = vmatpush1.bf16.xpose.msra.mxu0 %v1653
        %1657 = vmatprep.subr.bf16.mxu0 0
        %1658 = vmatpush1.bf16.xpose.msra.mxu0 0
        %1659 = vmatprep.subr.bf16.mxu0 0
        %1660 = vmatpush1.bf16.xpose.msra.mxu0 0
        %1661 = vmatprep.subr.bf16.mxu0 0
        %1662 = vmatpush1.bf16.xpose.msra.mxu0 0
        %1663 = vmatprep.subr.bf16.mxu0 0
        %1664 = vmatpush1.bf16.xpose.msra.mxu0 0
        %1665 = vmatprep.subr.bf16.mxu0 0
        %1666 = vmatpush1.bf16.xpose.msra.mxu0 0
        %1667 = vmatprep.subr.bf16.mxu0 0
        %1668 = vmatpush1.bf16.xpose.msra.mxu0 0
        %1669 = vmatprep.subr.bf16.mxu0 0
        %1670 = vmatpush1.bf16.xpose.msra.mxu0 0
        %1671 = vmatprep.subr.bf16.mxu0 0
        %1672 = vmatpush1.bf16.xpose.msra.mxu0 0
        %1673 = vmatprep.subr.bf16.mxu0 0
        %1674 = vmatpush1.bf16.xpose.msra.mxu0 0
        %1675 = vmatprep.subr.bf16.mxu0 0
        %1676 = vmatpush1.bf16.xpose.msra.mxu0 0
        %1677 = vmatprep.subr.bf16.mxu0 0
        %1678 = vmatpush1.bf16.xpose.msra.mxu0 0
        %1679 = vmatprep.subr.bf16.mxu0 0
        %1680 = vmatpush1.bf16.xpose.msra.mxu0 0
        %1681 = vmatprep.subr.bf16.mxu0 0
        %1682 = vmatpush1.bf16.xpose.msra.mxu0 0
        %1683 = vmatprep.subr.bf16.mxu0 0
        %1684 = vmatpush1.bf16.xpose.msra.mxu0 0
        %1685 = vmatprep.subr.bf16.mxu0 0
        %1686 = vmatpush1.bf16.xpose.msra.mxu0 0
        %1687 = vmatprep.mubr.bf16.mxu0 0
        %1688 = vmatmul.mubr.bf16.gmra.mrb[0].mxu0 %v1650
        %v1689 = vpop.f32.mrb[0].mxu0
        %v1690 = vadd.f32 %v1171, %v1689
        %v1691 = vpop.f32.mrb[0].mxu0
        %v1692 = vpop.f32.mrb[0].mxu0
        %v1693 = vadd.f32 %v1172, %v1692
        %v1694 = vpop.f32.mrb[0].mxu0
        %1695 = vdwg.mxu0
        %1697 = vrot.lane.b32.xlu0 %v1174, 64
        %v1698 = vpop.permute.xlu0 %1697
        %1700 = vrot.lane.b32.xlu0 %v1178, 64
        %v1701 = vpop.permute.xlu0 %1700
        %v1703 = vsel %vm1185, %v1698, 0
        %v1706 = vsel %vm1185, %v1701, 0
        %1708 = vmatprep.subr.bf16.mxu0 0
        %1709 = vmatpush1.bf16.xpose.msra.mxu0 %v1706
        %1710 = vmatprep.subr.bf16.mxu0 0
        %1711 = vmatpush1.bf16.xpose.msra.mxu0 0
        %1712 = vmatprep.subr.bf16.mxu0 0
        %1713 = vmatpush1.bf16.xpose.msra.mxu0 0
        %1714 = vmatprep.subr.bf16.mxu0 0
        %1715 = vmatpush1.bf16.xpose.msra.mxu0 0
        %1716 = vmatprep.subr.bf16.mxu0 0
        %1717 = vmatpush1.bf16.xpose.msra.mxu0 0
        %1718 = vmatprep.subr.bf16.mxu0 0
        %1719 = vmatpush1.bf16.xpose.msra.mxu0 0
        %1720 = vmatprep.subr.bf16.mxu0 0
        %1721 = vmatpush1.bf16.xpose.msra.mxu0 0
        %1722 = vmatprep.subr.bf16.mxu0 0
        %1723 = vmatpush1.bf16.xpose.msra.mxu0 0
        %1724 = vmatprep.subr.bf16.mxu0 0
        %1725 = vmatpush1.bf16.xpose.msra.mxu0 0
        %1726 = vmatprep.subr.bf16.mxu0 0
        %1727 = vmatpush1.bf16.xpose.msra.mxu0 0
        %1728 = vmatprep.subr.bf16.mxu0 0
        %1729 = vmatpush1.bf16.xpose.msra.mxu0 0
        %1730 = vmatprep.subr.bf16.mxu0 0
        %1731 = vmatpush1.bf16.xpose.msra.mxu0 0
        %1732 = vmatprep.subr.bf16.mxu0 0
        %1733 = vmatpush1.bf16.xpose.msra.mxu0 0
        %1734 = vmatprep.subr.bf16.mxu0 0
        %1735 = vmatpush1.bf16.xpose.msra.mxu0 0
        %1736 = vmatprep.subr.bf16.mxu0 0
        %1737 = vmatpush1.bf16.xpose.msra.mxu0 0
        %1738 = vmatprep.subr.bf16.mxu0 0
        %1739 = vmatpush1.bf16.xpose.msra.mxu0 0
        %1740 = vmatprep.mubr.bf16.mxu0 0
        %1741 = vmatmul.mubr.bf16.gmra.mrb[0].mxu0 %v1703
        %v1742 = vpop.f32.mrb[0].mxu0
        %v1743 = vadd.f32 %v1171, %v1742
        %v1744 = vpop.f32.mrb[0].mxu0
        %v1745 = vpop.f32.mrb[0].mxu0
        %v1746 = vadd.f32 %v1172, %v1745
        %v1747 = vpop.f32.mrb[0].mxu0
        %1748 = vdwg.mxu0
        %1750 = vrot.lane.b32.xlu0 %v1175, 64
        %v1751 = vpop.permute.xlu0 %1750
        %1753 = vrot.lane.b32.xlu0 %v1179, 64
        %v1754 = vpop.permute.xlu0 %1753
        %v1756 = vsel %vm1185, %v1751, 0
        %v1759 = vsel %vm1185, %v1754, 0
        %1761 = vmatprep.subr.bf16.mxu0 0
        %1762 = vmatpush1.bf16.xpose.msra.mxu0 %v1759
        %1763 = vmatprep.subr.bf16.mxu0 0
        %1764 = vmatpush1.bf16.xpose.msra.mxu0 0
        %1765 = vmatprep.subr.bf16.mxu0 0
        %1766 = vmatpush1.bf16.xpose.msra.mxu0 0
        %1767 = vmatprep.subr.bf16.mxu0 0
        %1768 = vmatpush1.bf16.xpose.msra.mxu0 0
        %1769 = vmatprep.subr.bf16.mxu0 0
        %1770 = vmatpush1.bf16.xpose.msra.mxu0 0
        %1771 = vmatprep.subr.bf16.mxu0 0
        %1772 = vmatpush1.bf16.xpose.msra.mxu0 0
        %1773 = vmatprep.subr.bf16.mxu0 0
        %1774 = vmatpush1.bf16.xpose.msra.mxu0 0
        %1775 = vmatprep.subr.bf16.mxu0 0
        %1776 = vmatpush1.bf16.xpose.msra.mxu0 0
        %1777 = vmatprep.subr.bf16.mxu0 0
        %1778 = vmatpush1.bf16.xpose.msra.mxu0 0
        %1779 = vmatprep.subr.bf16.mxu0 0
        %1780 = vmatpush1.bf16.xpose.msra.mxu0 0
        %1781 = vmatprep.subr.bf16.mxu0 0
        %1782 = vmatpush1.bf16.xpose.msra.mxu0 0
        %1783 = vmatprep.subr.bf16.mxu0 0
        %1784 = vmatpush1.bf16.xpose.msra.mxu0 0
        %1785 = vmatprep.subr.bf16.mxu0 0
        %1786 = vmatpush1.bf16.xpose.msra.mxu0 0
        %1787 = vmatprep.subr.bf16.mxu0 0
        %1788 = vmatpush1.bf16.xpose.msra.mxu0 0
        %1789 = vmatprep.subr.bf16.mxu0 0
        %1790 = vmatpush1.bf16.xpose.msra.mxu0 0
        %1791 = vmatprep.subr.bf16.mxu0 0
        %1792 = vmatpush1.bf16.xpose.msra.mxu0 0
        %1793 = vmatprep.mubr.bf16.mxu0 0
        %1794 = vmatmul.mubr.bf16.gmra.mrb[0].mxu0 %v1756
        %v1795 = vpop.f32.mrb[0].mxu0
        %v1796 = vadd.f32 %v1171, %v1795
        %v1797 = vpop.f32.mrb[0].mxu0
        %v1798 = vpop.f32.mrb[0].mxu0
        %v1799 = vadd.f32 %v1172, %v1798
        %v1800 = vpop.f32.mrb[0].mxu0
        %1801 = vdwg.mxu0
        %1803 = vrot.lane.b32.xlu0 %v1176, 64
        %v1804 = vpop.permute.xlu0 %1803
        %1806 = vrot.lane.b32.xlu0 %v1180, 64
        %v1807 = vpop.permute.xlu0 %1806
        %v1809 = vsel %vm1185, %v1804, 0
        %v1812 = vsel %vm1185, %v1807, 0
        %1814 = vmatprep.subr.bf16.mxu0 0
        %1815 = vmatpush1.bf16.xpose.msra.mxu0 %v1812
        %1816 = vmatprep.subr.bf16.mxu0 0
        %1817 = vmatpush1.bf16.xpose.msra.mxu0 0
        %1818 = vmatprep.subr.bf16.mxu0 0
        %1819 = vmatpush1.bf16.xpose.msra.mxu0 0
        %1820 = vmatprep.subr.bf16.mxu0 0
        %1821 = vmatpush1.bf16.xpose.msra.mxu0 0
        %1822 = vmatprep.subr.bf16.mxu0 0
        %1823 = vmatpush1.bf16.xpose.msra.mxu0 0
        %1824 = vmatprep.subr.bf16.mxu0 0
        %1825 = vmatpush1.bf16.xpose.msra.mxu0 0
        %1826 = vmatprep.subr.bf16.mxu0 0
        %1827 = vmatpush1.bf16.xpose.msra.mxu0 0
        %1828 = vmatprep.subr.bf16.mxu0 0
        %1829 = vmatpush1.bf16.xpose.msra.mxu0 0
        %1830 = vmatprep.subr.bf16.mxu0 0
        %1831 = vmatpush1.bf16.xpose.msra.mxu0 0
        %1832 = vmatprep.subr.bf16.mxu0 0
        %1833 = vmatpush1.bf16.xpose.msra.mxu0 0
        %1834 = vmatprep.subr.bf16.mxu0 0
        %1835 = vmatpush1.bf16.xpose.msra.mxu0 0
        %1836 = vmatprep.subr.bf16.mxu0 0
        %1837 = vmatpush1.bf16.xpose.msra.mxu0 0
        %1838 = vmatprep.subr.bf16.mxu0 0
        %1839 = vmatpush1.bf16.xpose.msra.mxu0 0
        %1840 = vmatprep.subr.bf16.mxu0 0
        %1841 = vmatpush1.bf16.xpose.msra.mxu0 0
        %1842 = vmatprep.subr.bf16.mxu0 0
        %1843 = vmatpush1.bf16.xpose.msra.mxu0 0
        %1844 = vmatprep.subr.bf16.mxu0 0
        %1845 = vmatpush1.bf16.xpose.msra.mxu0 0
        %1846 = vmatprep.mubr.bf16.mxu0 0
        %1847 = vmatmul.mubr.bf16.gmra.mrb[0].mxu0 %v1809
        %v1848 = vpop.f32.mrb[0].mxu0
        %v1849 = vadd.f32 %v1171, %v1848
        %v1850 = vpop.f32.mrb[0].mxu0
        %v1851 = vpop.f32.mrb[0].mxu0
        %v1852 = vadd.f32 %v1172, %v1851
        %v1853 = vpop.f32.mrb[0].mxu0
        %1854 = vdwg.mxu0
        %v1855 = vsel %vm1374, %v1690, -inf
        %1856 = vmax.xlane.f32.xlu0 %v1855
        %v1857 = vpop.xlane.xlu0 %1856
        %v1858 = vsel %vm1374, %v1693, -inf
        %1859 = vmax.xlane.f32.xlu0 %v1858
        %v1860 = vpop.xlane.xlu0 %1859
        %v1861 = vsel %vm1374, %v1743, -inf
        %1862 = vmax.xlane.f32.xlu0 %v1861
        %v1863 = vpop.xlane.xlu0 %1862
        %v1864 = vsel %vm1374, %v1746, -inf
        %1865 = vmax.xlane.f32.xlu0 %v1864
        %v1866 = vpop.xlane.xlu0 %1865
        %v1867 = vsel %vm1374, %v1796, -inf
        %1868 = vmax.xlane.f32.xlu0 %v1867
        %v1869 = vpop.xlane.xlu0 %1868
        %v1870 = vsel %vm1374, %v1799, -inf
        %1871 = vmax.xlane.f32.xlu0 %v1870
        %v1872 = vpop.xlane.xlu0 %1871
        %v1873 = vsel %vm1374, %v1849, -inf
        %1874 = vmax.xlane.f32.xlu0 %v1873
        %v1875 = vpop.xlane.xlu0 %1874
        %v1876 = vsel %vm1374, %v1852, -inf
        %1877 = vmax.xlane.f32.xlu0 %v1876
        %v1878 = vpop.xlane.xlu0 %1877
        %v1879 = vsub.f32 %v1690, %v1857
        %v1880 = vsub.f32 %v1693, %v1860
        %v1881 = vsub.f32 %v1743, %v1863
        %v1882 = vsub.f32 %v1746, %v1866
        %v1883 = vsub.f32 %v1796, %v1869
        %v1884 = vsub.f32 %v1799, %v1872
        %v1885 = vsub.f32 %v1849, %v1875
        %v1886 = vsub.f32 %v1852, %v1878
        %v1887 = vmul.f32 %v1879, 1.442695
        %v1888 = vpow.pop %v1887
        %v1889 = vmul.f32 %v1880, 1.442695
        %v1890 = vpow.pop %v1889
        %v1891 = vmul.f32 %v1881, 1.442695
        %v1892 = vpow.pop %v1891
        %v1893 = vmul.f32 %v1882, 1.442695
        %v1894 = vpow.pop %v1893
        %v1895 = vmul.f32 %v1883, 1.442695
        %v1896 = vpow.pop %v1895
        %v1897 = vmul.f32 %v1884, 1.442695
        %v1898 = vpow.pop %v1897
        %v1899 = vmul.f32 %v1885, 1.442695
        %v1900 = vpow.pop %v1899
        %v1901 = vmul.f32 %v1886, 1.442695
        %v1902 = vpow.pop %v1901
        %v1903 = vsel %vm1374, %v1888, 0.0
        %1904 = vadd.xlane.f32.xlu0 %v1903
        %v1905 = vpop.xlane.xlu0 %1904
        %v1906 = vsel %vm1374, %v1890, 0.0
        %1907 = vadd.xlane.f32.xlu0 %v1906
        %v1908 = vpop.xlane.xlu0 %1907
        %v1909 = vsel %vm1374, %v1892, 0.0
        %1910 = vadd.xlane.f32.xlu0 %v1909
        %v1911 = vpop.xlane.xlu0 %1910
        %v1912 = vsel %vm1374, %v1894, 0.0
        %1913 = vadd.xlane.f32.xlu0 %v1912
        %v1914 = vpop.xlane.xlu0 %1913
        %v1915 = vsel %vm1374, %v1896, 0.0
        %1916 = vadd.xlane.f32.xlu0 %v1915
        %v1917 = vpop.xlane.xlu0 %1916
        %v1918 = vsel %vm1374, %v1898, 0.0
        %1919 = vadd.xlane.f32.xlu0 %v1918
        %v1920 = vpop.xlane.xlu0 %1919
        %v1921 = vsel %vm1374, %v1900, 0.0
        %1922 = vadd.xlane.f32.xlu0 %v1921
        %v1923 = vpop.xlane.xlu0 %1922
        %v1924 = vsel %vm1374, %v1902, 0.0
        %1925 = vadd.xlane.f32.xlu0 %v1924
        %v1926 = vpop.xlane.xlu0 %1925
        %v1927 = vrcp.pop %v1905
        %v1928 = vrcp.pop %v1908
        %v1929 = vrcp.pop %v1911
        %v1930 = vrcp.pop %v1914
        %v1931 = vrcp.pop %v1917
        %v1932 = vrcp.pop %v1920
        %v1933 = vrcp.pop %v1923
        %v1934 = vrcp.pop %v1926
        %v1935 = vmul.f32 %v1888, %v1927
        %v1936 = vmul.f32 %v1890, %v1928
        %v1937 = vmul.f32 %v1892, %v1929
        %v1938 = vmul.f32 %v1894, %v1930
        %v1939 = vmul.f32 %v1896, %v1931
        %v1940 = vmul.f32 %v1898, %v1932
        %v1941 = vmul.f32 %v1900, %v1933
        %v1942 = vmul.f32 %v1902, %v1934
        %v1943 = vpack.c.bf16 %v1936, %v1935
        %v1944 = vpack.c.bf16 %v1938, %v1937
        %v1945 = vpack.c.bf16 %v1940, %v1939
        %v1946 = vpack.c.bf16 %v1942, %v1941
        %1948 = vrot.lane.b32.xlu0 %v1181, 64
        %v1949 = vpop.permute.xlu0 %1948
        %v1952 = vsel %vm1374, %v1943, 0
        %1954 = vmatprep.subr.bf16.mxu0 0
        %1955 = vmatpush1.bf16.msra.mxu0 %v1949
        %1956 = vmatprep.subr.bf16.mxu0 0
        %1957 = vmatpush1.bf16.msra.mxu0 0
        %1958 = vmatprep.subr.bf16.mxu0 0
        %1959 = vmatpush1.bf16.msra.mxu0 0
        %1960 = vmatprep.subr.bf16.mxu0 0
        %1961 = vmatpush1.bf16.msra.mxu0 0
        %1962 = vmatprep.subr.bf16.mxu0 0
        %1963 = vmatpush1.bf16.msra.mxu0 0
        %1964 = vmatprep.subr.bf16.mxu0 0
        %1965 = vmatpush1.bf16.msra.mxu0 0
        %1966 = vmatprep.subr.bf16.mxu0 0
        %1967 = vmatpush1.bf16.msra.mxu0 0
        %1968 = vmatprep.subr.bf16.mxu0 0
        %1969 = vmatpush1.bf16.msra.mxu0 0
        %1970 = vmatprep.subr.bf16.mxu0 0
        %1971 = vmatpush1.bf16.msra.mxu0 0
        %1972 = vmatprep.subr.bf16.mxu0 0
        %1973 = vmatpush1.bf16.msra.mxu0 0
        %1974 = vmatprep.subr.bf16.mxu0 0
        %1975 = vmatpush1.bf16.msra.mxu0 0
        %1976 = vmatprep.subr.bf16.mxu0 0
        %1977 = vmatpush1.bf16.msra.mxu0 0
        %1978 = vmatprep.subr.bf16.mxu0 0
        %1979 = vmatpush1.bf16.msra.mxu0 0
        %1980 = vmatprep.subr.bf16.mxu0 0
        %1981 = vmatpush1.bf16.msra.mxu0 0
        %1982 = vmatprep.subr.bf16.mxu0 0
        %1983 = vmatpush1.bf16.msra.mxu0 0
        %1984 = vmatprep.subr.bf16.mxu0 0
        %1985 = vmatpush1.bf16.msra.mxu0 0
        %1986 = vmatprep.mubr.bf16.mxu0 0
        %1987 = vmatmul.mubr.bf16.gmra.mrb[0].mxu0 %v1952
        %v1988 = vpop.f32.mrb[0].mxu0
        %v1989 = vadd.f32 0.0, %v1988
        %v1990 = vpop.f32.mrb[0].mxu0
        %v1991 = vpop.f32.mrb[0].mxu0
        %v1992 = vadd.f32 0.0, %v1991
        %v1993 = vpop.f32.mrb[0].mxu0
        %1994 = vdwg.mxu0
        %1996 = vrot.lane.b32.xlu0 %v1182, 64
        %v1997 = vpop.permute.xlu0 %1996
        %v2000 = vsel %vm1374, %v1944, 0
        %2002 = vmatprep.subr.bf16.mxu0 0
        %2003 = vmatpush1.bf16.msra.mxu0 %v1997
        %2004 = vmatprep.subr.bf16.mxu0 0
        %2005 = vmatpush1.bf16.msra.mxu0 0
        %2006 = vmatprep.subr.bf16.mxu0 0
        %2007 = vmatpush1.bf16.msra.mxu0 0
        %2008 = vmatprep.subr.bf16.mxu0 0
        %2009 = vmatpush1.bf16.msra.mxu0 0
        %2010 = vmatprep.subr.bf16.mxu0 0
        %2011 = vmatpush1.bf16.msra.mxu0 0
        %2012 = vmatprep.subr.bf16.mxu0 0
        %2013 = vmatpush1.bf16.msra.mxu0 0
        %2014 = vmatprep.subr.bf16.mxu0 0
        %2015 = vmatpush1.bf16.msra.mxu0 0
        %2016 = vmatprep.subr.bf16.mxu0 0
        %2017 = vmatpush1.bf16.msra.mxu0 0
        %2018 = vmatprep.subr.bf16.mxu0 0
        %2019 = vmatpush1.bf16.msra.mxu0 0
        %2020 = vmatprep.subr.bf16.mxu0 0
        %2021 = vmatpush1.bf16.msra.mxu0 0
        %2022 = vmatprep.subr.bf16.mxu0 0
        %2023 = vmatpush1.bf16.msra.mxu0 0
        %2024 = vmatprep.subr.bf16.mxu0 0
        %2025 = vmatpush1.bf16.msra.mxu0 0
        %2026 = vmatprep.subr.bf16.mxu0 0
        %2027 = vmatpush1.bf16.msra.mxu0 0
        %2028 = vmatprep.subr.bf16.mxu0 0
        %2029 = vmatpush1.bf16.msra.mxu0 0
        %2030 = vmatprep.subr.bf16.mxu0 0
        %2031 = vmatpush1.bf16.msra.mxu0 0
        %2032 = vmatprep.subr.bf16.mxu0 0
        %2033 = vmatpush1.bf16.msra.mxu0 0
        %2034 = vmatprep.mubr.bf16.mxu0 0
        %2035 = vmatmul.mubr.bf16.gmra.mrb[0].mxu0 %v2000
        %v2036 = vpop.f32.mrb[0].mxu0
        %v2037 = vadd.f32 0.0, %v2036
        %v2038 = vpop.f32.mrb[0].mxu0
        %v2039 = vpop.f32.mrb[0].mxu0
        %v2040 = vadd.f32 0.0, %v2039
        %v2041 = vpop.f32.mrb[0].mxu0
        %2042 = vdwg.mxu0
        %2044 = vrot.lane.b32.xlu0 %v1183, 64
        %v2045 = vpop.permute.xlu0 %2044
        %v2048 = vsel %vm1374, %v1945, 0
        %2050 = vmatprep.subr.bf16.mxu0 0
        %2051 = vmatpush1.bf16.msra.mxu0 %v2045
        %2052 = vmatprep.subr.bf16.mxu0 0
        %2053 = vmatpush1.bf16.msra.mxu0 0
        %2054 = vmatprep.subr.bf16.mxu0 0
        %2055 = vmatpush1.bf16.msra.mxu0 0
        %2056 = vmatprep.subr.bf16.mxu0 0
        %2057 = vmatpush1.bf16.msra.mxu0 0
        %2058 = vmatprep.subr.bf16.mxu0 0
        %2059 = vmatpush1.bf16.msra.mxu0 0
        %2060 = vmatprep.subr.bf16.mxu0 0
        %2061 = vmatpush1.bf16.msra.mxu0 0
        %2062 = vmatprep.subr.bf16.mxu0 0
        %2063 = vmatpush1.bf16.msra.mxu0 0
        %2064 = vmatprep.subr.bf16.mxu0 0
        %2065 = vmatpush1.bf16.msra.mxu0 0
        %2066 = vmatprep.subr.bf16.mxu0 0
        %2067 = vmatpush1.bf16.msra.mxu0 0
        %2068 = vmatprep.subr.bf16.mxu0 0
        %2069 = vmatpush1.bf16.msra.mxu0 0
        %2070 = vmatprep.subr.bf16.mxu0 0
        %2071 = vmatpush1.bf16.msra.mxu0 0
        %2072 = vmatprep.subr.bf16.mxu0 0
        %2073 = vmatpush1.bf16.msra.mxu0 0
        %2074 = vmatprep.subr.bf16.mxu0 0
        %2075 = vmatpush1.bf16.msra.mxu0 0
        %2076 = vmatprep.subr.bf16.mxu0 0
        %2077 = vmatpush1.bf16.msra.mxu0 0
        %2078 = vmatprep.subr.bf16.mxu0 0
        %2079 = vmatpush1.bf16.msra.mxu0 0
        %2080 = vmatprep.subr.bf16.mxu0 0
        %2081 = vmatpush1.bf16.msra.mxu0 0
        %2082 = vmatprep.mubr.bf16.mxu0 0
        %2083 = vmatmul.mubr.bf16.gmra.mrb[0].mxu0 %v2048
        %v2084 = vpop.f32.mrb[0].mxu0
        %v2085 = vadd.f32 0.0, %v2084
        %v2086 = vpop.f32.mrb[0].mxu0
        %v2087 = vpop.f32.mrb[0].mxu0
        %v2088 = vadd.f32 0.0, %v2087
        %v2089 = vpop.f32.mrb[0].mxu0
        %2090 = vdwg.mxu0
        %2092 = vrot.lane.b32.xlu0 %v1184, 64
        %v2093 = vpop.permute.xlu0 %2092
        %v2096 = vsel %vm1374, %v1946, 0
        %2098 = vmatprep.subr.bf16.mxu0 0
        %2099 = vmatpush1.bf16.msra.mxu0 %v2093
        %2100 = vmatprep.subr.bf16.mxu0 0
        %2101 = vmatpush1.bf16.msra.mxu0 0
        %2102 = vmatprep.subr.bf16.mxu0 0
        %2103 = vmatpush1.bf16.msra.mxu0 0
        %2104 = vmatprep.subr.bf16.mxu0 0
        %2105 = vmatpush1.bf16.msra.mxu0 0
        %2106 = vmatprep.subr.bf16.mxu0 0
        %2107 = vmatpush1.bf16.msra.mxu0 0
        %2108 = vmatprep.subr.bf16.mxu0 0
        %2109 = vmatpush1.bf16.msra.mxu0 0
        %2110 = vmatprep.subr.bf16.mxu0 0
        %2111 = vmatpush1.bf16.msra.mxu0 0
        %2112 = vmatprep.subr.bf16.mxu0 0
        %2113 = vmatpush1.bf16.msra.mxu0 0
        %2114 = vmatprep.subr.bf16.mxu0 0
        %2115 = vmatpush1.bf16.msra.mxu0 0
        %2116 = vmatprep.subr.bf16.mxu0 0
        %2117 = vmatpush1.bf16.msra.mxu0 0
        %2118 = vmatprep.subr.bf16.mxu0 0
        %2119 = vmatpush1.bf16.msra.mxu0 0
        %2120 = vmatprep.subr.bf16.mxu0 0
        %2121 = vmatpush1.bf16.msra.mxu0 0
        %2122 = vmatprep.subr.bf16.mxu0 0
        %2123 = vmatpush1.bf16.msra.mxu0 0
        %2124 = vmatprep.subr.bf16.mxu0 0
        %2125 = vmatpush1.bf16.msra.mxu0 0
        %2126 = vmatprep.subr.bf16.mxu0 0
        %2127 = vmatpush1.bf16.msra.mxu0 0
        %2128 = vmatprep.subr.bf16.mxu0 0
        %2129 = vmatpush1.bf16.msra.mxu0 0
        %2130 = vmatprep.mubr.bf16.mxu0 0
        %2131 = vmatmul.mubr.bf16.gmra.mrb[0].mxu0 %v2096
        %v2132 = vpop.f32.mrb[0].mxu0
        %v2133 = vadd.f32 0.0, %v2132
        %v2134 = vpop.f32.mrb[0].mxu0
        %v2135 = vpop.f32.mrb[0].mxu0
        %v2136 = vadd.f32 0.0, %v2135
        %v2137 = vpop.f32.mrb[0].mxu0
        %2138 = vdwg.mxu0
        %2147 = vrot.lane.b32.xlu0 %v1989, 64
        %v2148 = vpop.permute.xlu0 %2147
        %2149 = vrot.lane.b32.xlu0 %v1992, 64
        %v2150 = vpop.permute.xlu0 %2149
        %2151 = vrot.lane.b32.xlu0 %v2037, 64
        %v2152 = vpop.permute.xlu0 %2151
        %2153 = vrot.lane.b32.xlu0 %v2040, 64
        %v2154 = vpop.permute.xlu0 %2153
        %2155 = vrot.lane.b32.xlu0 %v2085, 64
        %v2156 = vpop.permute.xlu0 %2155
        %2157 = vrot.lane.b32.xlu0 %v2088, 64
        %v2158 = vpop.permute.xlu0 %2157
        %2159 = vrot.lane.b32.xlu0 %v2133, 64
        %v2160 = vpop.permute.xlu0 %2159
        %2161 = vrot.lane.b32.xlu0 %v2136, 64
        %v2162 = vpop.permute.xlu0 %2161
        %v2171 = vsel %vm1185, %v1505, %v2148
        %v2172 = vsel %vm1185, %v1508, %v2150
        %v2173 = vsel %vm1185, %v1549, %v2152
        %v2174 = vsel %vm1185, %v1552, %v2154
        %v2175 = vsel %vm1185, %v1593, %v2156
        %v2176 = vsel %vm1185, %v1596, %v2158
        %v2177 = vsel %vm1185, %v1637, %v2160
        %v2178 = vsel %vm1185, %v1640, %v2162
        %v2179 = vpack.c.bf16 %v2172, %v2171
        %v2180 = vpack.c.bf16 %v2174, %v2173
        %v2181 = vpack.c.bf16 %v2176, %v2175
        %v2182 = vpack.c.bf16 %v2178, %v2177
        %v2183 = vld [vmem:[%s676] sm:$0xf]
        %v2184 = vld [vmem:[%s676 + $0x4] sm:$0xf]
        %v2185 = vld [vmem:[%s676 + $0x8] sm:$0xf]
        %v2186 = vld [vmem:[%s676 + $0xc] sm:$0xf]
        %v2187 = vld [vmem:[%s676 + $0x10] sm:$0xf]
        %v2188 = vld [vmem:[%s676 + $0x14] sm:$0xf]
        %v2189 = vld [vmem:[%s676 + $0x18] sm:$0xf]
        %v2190 = vld [vmem:[%s676 + $0x1c] sm:$0xf]
        %v2191 = vld [vmem:[%s676 + $0x20] sm:$0xf]
        %v2192 = vld [vmem:[%s676 + $0x24] sm:$0xf]
        %v2193 = vld [vmem:[%s676 + $0x28] sm:$0xf]
        %v2194 = vld [vmem:[%s676 + $0x2c] sm:$0xf]
        %v2195 = vld [vmem:[%s676 + $0x30] sm:$0xf]
        %v2196 = vld [vmem:[%s676 + $0x34] sm:$0xf]
        %v2197 = vld [vmem:[%s676 + $0x38] sm:$0xf]
        %v2198 = vld [vmem:[%s676 + $0x3c] sm:$0xf]
        %v2199 = vld [vmem:[%s799] sm:$0x1]
        %v2201 = vlaneseq
        %v2202 = vshrl.u32 %v2201, 7
        %v2203 = vsub.s32 0, %v2202
        %v2204 = vrot.slane %v2199, %v2203
        %v2222 = vunpack.c.l.b16 %v2183
        %v2223 = vunpack.c.l.b16 %v2184
        %v2224 = vunpack.c.l.b16 %v2185
        %v2225 = vunpack.c.l.b16 %v2186
        %v2226 = vunpack.c.l.b16 %v2187
        %v2227 = vunpack.c.l.b16 %v2188
        %v2228 = vunpack.c.l.b16 %v2189
        %v2229 = vunpack.c.l.b16 %v2190
        %v2230 = vunpack.c.l.b16 %v2191
        %v2231 = vunpack.c.l.b16 %v2192
        %v2232 = vunpack.c.l.b16 %v2193
        %v2233 = vunpack.c.l.b16 %v2194
        %v2234 = vunpack.c.l.b16 %v2195
        %v2235 = vunpack.c.l.b16 %v2196
        %v2236 = vunpack.c.l.b16 %v2197
        %v2237 = vunpack.c.l.b16 %v2198
        %v2238 = vpack.c.b16 %v2223, %v2222
        %v2239 = vpack.c.b16 %v2225, %v2224
        %v2240 = vpack.c.b16 %v2227, %v2226
        %v2241 = vpack.c.b16 %v2229, %v2228
        %v2242 = vpack.c.b16 %v2231, %v2230
        %v2243 = vpack.c.b16 %v2233, %v2232
        %v2244 = vpack.c.b16 %v2235, %v2234
        %v2245 = vpack.c.b16 %v2237, %v2236
        %2254 = vmatprep.subr.bf16.mxu0 0
        %2255 = vmatpush1.bf16.msra.mxu0 %v2238
        %2256 = vmatprep.subr.bf16.mxu0 0
        %2257 = vmatpush1.bf16.msra.mxu0 %v2239
        %2258 = vmatprep.subr.bf16.mxu0 0
        %2259 = vmatpush1.bf16.msra.mxu0 %v2240
        %2260 = vmatprep.subr.bf16.mxu0 0
        %2261 = vmatpush1.bf16.msra.mxu0 %v2241
        %2262 = vmatprep.subr.bf16.mxu0 0
        %2263 = vmatpush1.bf16.msra.mxu0 %v2242
        %2264 = vmatprep.subr.bf16.mxu0 0
        %2265 = vmatpush1.bf16.msra.mxu0 %v2243
        %2266 = vmatprep.subr.bf16.mxu0 0
        %2267 = vmatpush1.bf16.msra.mxu0 %v2244
        %2268 = vmatprep.subr.bf16.mxu0 0
        %2269 = vmatpush1.bf16.msra.mxu0 %v2245
        %2270 = vmatprep.subr.bf16.mxu0 0
        %2271 = vmatpush1.bf16.msra.mxu0 0
        %2272 = vmatprep.subr.bf16.mxu0 0
        %2273 = vmatpush1.bf16.msra.mxu0 0
        %2274 = vmatprep.subr.bf16.mxu0 0
        %2275 = vmatpush1.bf16.msra.mxu0 0
        %2276 = vmatprep.subr.bf16.mxu0 0
        %2277 = vmatpush1.bf16.msra.mxu0 0
        %2278 = vmatprep.subr.bf16.mxu0 0
        %2279 = vmatpush1.bf16.msra.mxu0 0
        %2280 = vmatprep.subr.bf16.mxu0 0
        %2281 = vmatpush1.bf16.msra.mxu0 0
        %2282 = vmatprep.subr.bf16.mxu0 0
        %2283 = vmatpush1.bf16.msra.mxu0 0
        %2284 = vmatprep.subr.bf16.mxu0 0
        %2285 = vmatpush1.bf16.msra.mxu0 0
        %2286 = vmatprep.mubr.bf16.mxu0 0
        %2287 = vmatmul.mubr.bf16.gmra.mrb[0].mxu0 %v2179
        %v2288 = vpop.f32.mrb[0].mxu0
        %v2289 = vadd.f32 %v2204, %v2288
        %v2290 = vpop.f32.mrb[0].mxu0
        %v2291 = vpop.f32.mrb[0].mxu0
        %v2292 = vadd.f32 %v2204, %v2291
        %v2293 = vpop.f32.mrb[0].mxu0
        %2294 = vmatprep.mubr.bf16.mxu0 0
        %2295 = vmatmul.mubr.bf16.gmra.mrb[0].mxu0 %v2180
        %v2296 = vpop.f32.mrb[0].mxu0
        %v2297 = vadd.f32 %v2204, %v2296
        %v2298 = vpop.f32.mrb[0].mxu0
        %v2299 = vpop.f32.mrb[0].mxu0
        %v2300 = vadd.f32 %v2204, %v2299
        %v2301 = vpop.f32.mrb[0].mxu0
        %2302 = vmatprep.mubr.bf16.mxu0 0
        %2303 = vmatmul.mubr.bf16.gmra.mrb[0].mxu0 %v2181
        %v2304 = vpop.f32.mrb[0].mxu0
        %v2305 = vadd.f32 %v2204, %v2304
        %v2306 = vpop.f32.mrb[0].mxu0
        %v2307 = vpop.f32.mrb[0].mxu0
        %v2308 = vadd.f32 %v2204, %v2307
        %v2309 = vpop.f32.mrb[0].mxu0
        %2310 = vmatprep.mubr.bf16.mxu0 0
        %2311 = vmatmul.mubr.bf16.gmra.mrb[0].mxu0 %v2182
        %v2312 = vpop.f32.mrb[0].mxu0
        %v2313 = vadd.f32 %v2204, %v2312
        %v2314 = vpop.f32.mrb[0].mxu0
        %v2315 = vpop.f32.mrb[0].mxu0
        %v2316 = vadd.f32 %v2204, %v2315
        %v2317 = vpop.f32.mrb[0].mxu0
        %2318 = vdwg.mxu0
        %v2319 = vadd.f32 %v842, %v2289
        %v2320 = vadd.f32 %v843, %v2292
        %v2321 = vadd.f32 %v844, %v2297
        %v2322 = vadd.f32 %v845, %v2300
        %v2323 = vadd.f32 %v846, %v2305
        %v2324 = vadd.f32 %v847, %v2308
        %v2325 = vadd.f32 %v848, %v2313
        %v2326 = vadd.f32 %v849, %v2316
        %v2327 = vld [vmem:[%s802] sm:$0x1]
        %v2328 = vld [vmem:[%s805] sm:$0x1]
        %2329 = vadd.xlane.f32.xlu0 %v2319
        %v2330 = vpop.xlane.xlu0 %2329
        %2331 = vadd.xlane.f32.xlu0 %v2320
        %v2332 = vpop.xlane.xlu0 %2331
        %2333 = vadd.xlane.f32.xlu0 %v2321
        %v2334 = vpop.xlane.xlu0 %2333
        %2335 = vadd.xlane.f32.xlu0 %v2322
        %v2336 = vpop.xlane.xlu0 %2335
        %2337 = vadd.xlane.f32.xlu0 %v2323
        %v2338 = vpop.xlane.xlu0 %2337
        %2339 = vadd.xlane.f32.xlu0 %v2324
        %v2340 = vpop.xlane.xlu0 %2339
        %2341 = vadd.xlane.f32.xlu0 %v2325
        %v2342 = vpop.xlane.xlu0 %2341
        %2343 = vadd.xlane.f32.xlu0 %v2326
        %v2344 = vpop.xlane.xlu0 %2343
        %v2345 = vrcp.pop 128.0
        %v2346 = vmul.f32 %v2330, %v2345
        %v2347 = vmul.f32 %v2332, %v2345
        %v2348 = vmul.f32 %v2334, %v2345
        %v2349 = vmul.f32 %v2336, %v2345
        %v2350 = vmul.f32 %v2338, %v2345
        %v2351 = vmul.f32 %v2340, %v2345
        %v2352 = vmul.f32 %v2342, %v2345
        %v2353 = vmul.f32 %v2344, %v2345
        %v2354 = vsub.f32 %v2319, %v2346
        %v2355 = vsub.f32 %v2320, %v2347
        %v2356 = vsub.f32 %v2321, %v2348
        %v2357 = vsub.f32 %v2322, %v2349
        %v2358 = vsub.f32 %v2323, %v2350
        %v2359 = vsub.f32 %v2324, %v2351
        %v2360 = vsub.f32 %v2325, %v2352
        %v2361 = vsub.f32 %v2326, %v2353
        %v2362 = vmul.f32 %v2354, %v2354
        %v2363 = vmul.f32 %v2355, %v2355
        %v2364 = vmul.f32 %v2356, %v2356
        %v2365 = vmul.f32 %v2357, %v2357
        %v2366 = vmul.f32 %v2358, %v2358
        %v2367 = vmul.f32 %v2359, %v2359
        %v2368 = vmul.f32 %v2360, %v2360
        %v2369 = vmul.f32 %v2361, %v2361
        %2370 = vadd.xlane.f32.xlu0 %v2362
        %v2371 = vpop.xlane.xlu0 %2370
        %2372 = vadd.xlane.f32.xlu0 %v2363
        %v2373 = vpop.xlane.xlu0 %2372
        %2374 = vadd.xlane.f32.xlu0 %v2364
        %v2375 = vpop.xlane.xlu0 %2374
        %2376 = vadd.xlane.f32.xlu0 %v2365
        %v2377 = vpop.xlane.xlu0 %2376
        %2378 = vadd.xlane.f32.xlu0 %v2366
        %v2379 = vpop.xlane.xlu0 %2378
        %2380 = vadd.xlane.f32.xlu0 %v2367
        %v2381 = vpop.xlane.xlu0 %2380
        %2382 = vadd.xlane.f32.xlu0 %v2368
        %v2383 = vpop.xlane.xlu0 %2382
        %2384 = vadd.xlane.f32.xlu0 %v2369
        %v2385 = vpop.xlane.xlu0 %2384
        %v2386 = vmul.f32 %v2371, %v2345
        %v2387 = vmul.f32 %v2373, %v2345
        %v2388 = vmul.f32 %v2375, %v2345
        %v2389 = vmul.f32 %v2377, %v2345
        %v2390 = vmul.f32 %v2379, %v2345
        %v2391 = vmul.f32 %v2381, %v2345
        %v2392 = vmul.f32 %v2383, %v2345
        %v2393 = vmul.f32 %v2385, %v2345
        %v2394 = vadd.f32 %v2386, 1e-12
        %v2395 = vadd.f32 %v2387, 1e-12
        %v2396 = vadd.f32 %v2388, 1e-12
        %v2397 = vadd.f32 %v2389, 1e-12
        %v2398 = vadd.f32 %v2390, 1e-12
        %v2399 = vadd.f32 %v2391, 1e-12
        %v2400 = vadd.f32 %v2392, 1e-12
        %v2401 = vadd.f32 %v2393, 1e-12
        %v2402 = vrsqrt.pop %v2394
        %v2403 = vrsqrt.pop %v2395
        %v2404 = vrsqrt.pop %v2396
        %v2405 = vrsqrt.pop %v2397
        %v2406 = vrsqrt.pop %v2398
        %v2407 = vrsqrt.pop %v2399
        %v2408 = vrsqrt.pop %v2400
        %v2409 = vrsqrt.pop %v2401
        %v2410 = vmul.f32 %v2354, %v2402
        %v2411 = vmul.f32 %v2355, %v2403
        %v2412 = vmul.f32 %v2356, %v2404
        %v2413 = vmul.f32 %v2357, %v2405
        %v2414 = vmul.f32 %v2358, %v2406
        %v2415 = vmul.f32 %v2359, %v2407
        %v2416 = vmul.f32 %v2360, %v2408
        %v2417 = vmul.f32 %v2361, %v2409
        %v2419 = vlaneseq
        %v2420 = vshrl.u32 %v2419, 7
        %v2421 = vsub.s32 0, %v2420
        %v2422 = vrot.slane %v2327, %v2421
        %v2424 = vmul.f32 %v2410, %v2422
        %v2425 = vmul.f32 %v2411, %v2422
        %v2426 = vmul.f32 %v2412, %v2422
        %v2427 = vmul.f32 %v2413, %v2422
        %v2428 = vmul.f32 %v2414, %v2422
        %v2429 = vmul.f32 %v2415, %v2422
        %v2430 = vmul.f32 %v2416, %v2422
        %v2431 = vmul.f32 %v2417, %v2422
        %v2433 = vlaneseq
        %v2434 = vshrl.u32 %v2433, 7
        %v2435 = vsub.s32 0, %v2434
        %v2436 = vrot.slane %v2328, %v2435
        %v2438 = vadd.f32 %v2424, %v2436
        %v2439 = vadd.f32 %v2425, %v2436
        %v2440 = vadd.f32 %v2426, %v2436
        %v2441 = vadd.f32 %v2427, %v2436
        %v2442 = vadd.f32 %v2428, %v2436
        %v2443 = vadd.f32 %v2429, %v2436
        %v2444 = vadd.f32 %v2430, %v2436
        %v2445 = vadd.f32 %v2431, %v2436
        %v2446 = vpack.c.bf16 %v2439, %v2438
        %v2447 = vpack.c.bf16 %v2441, %v2440
        %v2448 = vpack.c.bf16 %v2443, %v2442
        %v2449 = vpack.c.bf16 %v2445, %v2444
        %v2450 = vld [vmem:[%s685] sm:$0xff]
        %v2451 = vld [vmem:[%s685 + $0x8] sm:$0xff]
        %v2452 = vld [vmem:[%s685 + $0x10] sm:$0xff]
        %v2453 = vld [vmem:[%s685 + $0x18] sm:$0xff]
        %v2454 = vld [vmem:[%s685 + $0x20] sm:$0xff]
        %v2455 = vld [vmem:[%s685 + $0x28] sm:$0xff]
        %v2456 = vld [vmem:[%s685 + $0x30] sm:$0xff]
        %v2457 = vld [vmem:[%s685 + $0x38] sm:$0xff]
        %v2458 = vld [vmem:[%s685 + $0x40] sm:$0xff]
        %v2459 = vld [vmem:[%s685 + $0x48] sm:$0xff]
        %v2460 = vld [vmem:[%s685 + $0x50] sm:$0xff]
        %v2461 = vld [vmem:[%s685 + $0x58] sm:$0xff]
        %v2462 = vld [vmem:[%s685 + $0x60] sm:$0xff]
        %v2463 = vld [vmem:[%s685 + $0x68] sm:$0xff]
        %v2464 = vld [vmem:[%s685 + $0x70] sm:$0xff]
        %v2465 = vld [vmem:[%s685 + $0x78] sm:$0xff]
        %v2466 = vld [vmem:[%s685 + $0x80] sm:$0xff]
        %v2467 = vld [vmem:[%s685 + $0x88] sm:$0xff]
        %v2468 = vld [vmem:[%s685 + $0x90] sm:$0xff]
        %v2469 = vld [vmem:[%s685 + $0x98] sm:$0xff]
        %v2470 = vld [vmem:[%s685 + $0xa0] sm:$0xff]
        %v2471 = vld [vmem:[%s685 + $0xa8] sm:$0xff]
        %v2472 = vld [vmem:[%s685 + $0xb0] sm:$0xff]
        %v2473 = vld [vmem:[%s685 + $0xb8] sm:$0xff]
        %v2474 = vld [vmem:[%s685 + $0xc0] sm:$0xff]
        %v2475 = vld [vmem:[%s685 + $0xc8] sm:$0xff]
        %v2476 = vld [vmem:[%s685 + $0xd0] sm:$0xff]
        %v2477 = vld [vmem:[%s685 + $0xd8] sm:$0xff]
        %v2478 = vld [vmem:[%s685 + $0xe0] sm:$0xff]
        %v2479 = vld [vmem:[%s685 + $0xe8] sm:$0xff]
        %v2480 = vld [vmem:[%s685 + $0xf0] sm:$0xff]
        %v2481 = vld [vmem:[%s685 + $0xf8] sm:$0xff]
        %v2482 = vld [vmem:[%s809] sm:$0xf]
        %v2484 = vlaneseq
        %v2485 = vshrl.u32 %v2484, 7
        %v2486 = vsub.s32 0, %v2485
        %v2487 = vrot.slane %v2482, %v2486
        %v2488 = vlaneseq
        %v2489 = vshrl.u32 %v2488, 7
        %v2490 = vsub.s32 1, %v2489
        %v2491 = vrot.slane %v2482, %v2490
        %v2492 = vlaneseq
        %v2493 = vshrl.u32 %v2492, 7
        %v2494 = vsub.s32 2, %v2493
        %v2495 = vrot.slane %v2482, %v2494
        %v2496 = vlaneseq
        %v2497 = vshrl.u32 %v2496, 7
        %v2498 = vsub.s32 3, %v2497
        %v2499 = vrot.slane %v2482, %v2498
        %v2536 = vunpack.c.l.b16 %v2450
        %v2537 = vunpack.c.h.b16 %v2450
        %v2538 = vunpack.c.l.b16 %v2451
        %v2539 = vunpack.c.h.b16 %v2451
        %v2540 = vunpack.c.l.b16 %v2452
        %v2541 = vunpack.c.h.b16 %v2452
        %v2542 = vunpack.c.l.b16 %v2453
        %v2543 = vunpack.c.h.b16 %v2453
        %v2544 = vunpack.c.l.b16 %v2454
        %v2545 = vunpack.c.h.b16 %v2454
        %v2546 = vunpack.c.l.b16 %v2455
        %v2547 = vunpack.c.h.b16 %v2455
        %v2548 = vunpack.c.l.b16 %v2456
        %v2549 = vunpack.c.h.b16 %v2456
        %v2550 = vunpack.c.l.b16 %v2457
        %v2551 = vunpack.c.h.b16 %v2457
        %v2552 = vunpack.c.l.b16 %v2458
        %v2553 = vunpack.c.h.b16 %v2458
        %v2554 = vunpack.c.l.b16 %v2459
        %v2555 = vunpack.c.h.b16 %v2459
        %v2556 = vunpack.c.l.b16 %v2460
        %v2557 = vunpack.c.h.b16 %v2460
        %v2558 = vunpack.c.l.b16 %v2461
        %v2559 = vunpack.c.h.b16 %v2461
        %v2560 = vunpack.c.l.b16 %v2462
        %v2561 = vunpack.c.h.b16 %v2462
        %v2562 = vunpack.c.l.b16 %v2463
        %v2563 = vunpack.c.h.b16 %v2463
        %v2564 = vunpack.c.l.b16 %v2464
        %v2565 = vunpack.c.h.b16 %v2464
        %v2566 = vunpack.c.l.b16 %v2465
        %v2567 = vunpack.c.h.b16 %v2465
        %v2568 = vunpack.c.l.b16 %v2466
        %v2569 = vunpack.c.h.b16 %v2466
        %v2570 = vunpack.c.l.b16 %v2467
        %v2571 = vunpack.c.h.b16 %v2467
        %v2572 = vunpack.c.l.b16 %v2468
        %v2573 = vunpack.c.h.b16 %v2468
        %v2574 = vunpack.c.l.b16 %v2469
        %v2575 = vunpack.c.h.b16 %v2469
        %v2576 = vunpack.c.l.b16 %v2470
        %v2577 = vunpack.c.h.b16 %v2470
        %v2578 = vunpack.c.l.b16 %v2471
        %v2579 = vunpack.c.h.b16 %v2471
        %v2580 = vunpack.c.l.b16 %v2472
        %v2581 = vunpack.c.h.b16 %v2472
        %v2582 = vunpack.c.l.b16 %v2473
        %v2583 = vunpack.c.h.b16 %v2473
        %v2584 = vunpack.c.l.b16 %v2474
        %v2585 = vunpack.c.h.b16 %v2474
        %v2586 = vunpack.c.l.b16 %v2475
        %v2587 = vunpack.c.h.b16 %v2475
        %v2588 = vunpack.c.l.b16 %v2476
        %v2589 = vunpack.c.h.b16 %v2476
        %v2590 = vunpack.c.l.b16 %v2477
        %v2591 = vunpack.c.h.b16 %v2477
        %v2592 = vunpack.c.l.b16 %v2478
        %v2593 = vunpack.c.h.b16 %v2478
        %v2594 = vunpack.c.l.b16 %v2479
        %v2595 = vunpack.c.h.b16 %v2479
        %v2596 = vunpack.c.l.b16 %v2480
        %v2597 = vunpack.c.h.b16 %v2480
        %v2598 = vunpack.c.l.b16 %v2481
        %v2599 = vunpack.c.h.b16 %v2481
        %v2600 = vpack.c.b16 %v2540, %v2536
        %v2601 = vpack.c.b16 %v2541, %v2537
        %v2602 = vpack.c.b16 %v2542, %v2538
        %v2603 = vpack.c.b16 %v2543, %v2539
        %v2604 = vpack.c.b16 %v2548, %v2544
        %v2605 = vpack.c.b16 %v2549, %v2545
        %v2606 = vpack.c.b16 %v2550, %v2546
        %v2607 = vpack.c.b16 %v2551, %v2547
        %v2608 = vpack.c.b16 %v2556, %v2552
        %v2609 = vpack.c.b16 %v2557, %v2553
        %v2610 = vpack.c.b16 %v2558, %v2554
        %v2611 = vpack.c.b16 %v2559, %v2555
        %v2612 = vpack.c.b16 %v2564, %v2560
        %v2613 = vpack.c.b16 %v2565, %v2561
        %v2614 = vpack.c.b16 %v2566, %v2562
        %v2615 = vpack.c.b16 %v2567, %v2563
        %v2616 = vpack.c.b16 %v2572, %v2568
        %v2617 = vpack.c.b16 %v2573, %v2569
        %v2618 = vpack.c.b16 %v2574, %v2570
        %v2619 = vpack.c.b16 %v2575, %v2571
        %v2620 = vpack.c.b16 %v2580, %v2576
        %v2621 = vpack.c.b16 %v2581, %v2577
        %v2622 = vpack.c.b16 %v2582, %v2578
        %v2623 = vpack.c.b16 %v2583, %v2579
        %v2624 = vpack.c.b16 %v2588, %v2584
        %v2625 = vpack.c.b16 %v2589, %v2585
        %v2626 = vpack.c.b16 %v2590, %v2586
        %v2627 = vpack.c.b16 %v2591, %v2587
        %v2628 = vpack.c.b16 %v2596, %v2592
        %v2629 = vpack.c.b16 %v2597, %v2593
        %v2630 = vpack.c.b16 %v2598, %v2594
        %v2631 = vpack.c.b16 %v2599, %v2595
        %2664 = vmatprep.subr.bf16.mxu0 %v2601
        %2665 = vmatpush1.bf16.msra.mxu0 %v2600
        %2666 = vmatprep.subr.bf16.mxu0 %v2605
        %2667 = vmatpush1.bf16.msra.mxu0 %v2604
        %2668 = vmatprep.subr.bf16.mxu0 %v2609
        %2669 = vmatpush1.bf16.msra.mxu0 %v2608
        %2670 = vmatprep.subr.bf16.mxu0 %v2613
        %2671 = vmatpush1.bf16.msra.mxu0 %v2612
        %2672 = vmatprep.subr.bf16.mxu0 %v2617
        %2673 = vmatpush1.bf16.msra.mxu0 %v2616
        %2674 = vmatprep.subr.bf16.mxu0 %v2621
        %2675 = vmatpush1.bf16.msra.mxu0 %v2620
        %2676 = vmatprep.subr.bf16.mxu0 %v2625
        %2677 = vmatpush1.bf16.msra.mxu0 %v2624
        %2678 = vmatprep.subr.bf16.mxu0 %v2629
        %2679 = vmatpush1.bf16.msra.mxu0 %v2628
        %2680 = vmatprep.subr.bf16.mxu0 0
        %2681 = vmatpush1.bf16.msra.mxu0 0
        %2682 = vmatprep.subr.bf16.mxu0 0
        %2683 = vmatpush1.bf16.msra.mxu0 0
        %2684 = vmatprep.subr.bf16.mxu0 0
        %2685 = vmatpush1.bf16.msra.mxu0 0
        %2686 = vmatprep.subr.bf16.mxu0 0
        %2687 = vmatpush1.bf16.msra.mxu0 0
        %2688 = vmatprep.subr.bf16.mxu0 0
        %2689 = vmatpush1.bf16.msra.mxu0 0
        %2690 = vmatprep.subr.bf16.mxu0 0
        %2691 = vmatpush1.bf16.msra.mxu0 0
        %2692 = vmatprep.subr.bf16.mxu0 0
        %2693 = vmatpush1.bf16.msra.mxu0 0
        %2694 = vmatprep.subr.bf16.mxu0 0
        %2695 = vmatpush1.bf16.msra.mxu0 0
        %2696 = vmatprep.mubr.bf16.mxu0 0
        %2697 = vmatmul.mubr.bf16.gmra.mrb[0].mxu0 %v2446
        %v2698 = vpop.f32.mrb[0].mxu0
        %v2699 = vadd.f32 %v2487, %v2698
        %v2700 = vpop.f32.mrb[0].mxu0
        %v2701 = vadd.f32 %v2491, %v2700
        %v2702 = vpop.f32.mrb[0].mxu0
        %v2703 = vadd.f32 %v2487, %v2702
        %v2704 = vpop.f32.mrb[0].mxu0
        %v2705 = vadd.f32 %v2491, %v2704
        %2706 = vmatprep.mubr.bf16.mxu0 0
        %2707 = vmatmul.mubr.bf16.gmra.mrb[0].mxu0 %v2447
        %v2708 = vpop.f32.mrb[0].mxu0
        %v2709 = vadd.f32 %v2487, %v2708
        %v2710 = vpop.f32.mrb[0].mxu0
        %v2711 = vadd.f32 %v2491, %v2710
        %v2712 = vpop.f32.mrb[0].mxu0
        %v2713 = vadd.f32 %v2487, %v2712
        %v2714 = vpop.f32.mrb[0].mxu0
        %v2715 = vadd.f32 %v2491, %v2714
        %2716 = vmatprep.mubr.bf16.mxu0 0
        %2717 = vmatmul.mubr.bf16.gmra.mrb[0].mxu0 %v2448
        %v2718 = vpop.f32.mrb[0].mxu0
        %v2719 = vadd.f32 %v2487, %v2718
        %v2720 = vpop.f32.mrb[0].mxu0
        %v2721 = vadd.f32 %v2491, %v2720
        %v2722 = vpop.f32.mrb[0].mxu0
        %v2723 = vadd.f32 %v2487, %v2722
        %v2724 = vpop.f32.mrb[0].mxu0
        %v2725 = vadd.f32 %v2491, %v2724
        %2726 = vmatprep.mubr.bf16.mxu0 0
        %2727 = vmatmul.mubr.bf16.gmra.mrb[0].mxu0 %v2449
        %v2728 = vpop.f32.mrb[0].mxu0
        %v2729 = vadd.f32 %v2487, %v2728
        %v2730 = vpop.f32.mrb[0].mxu0
        %v2731 = vadd.f32 %v2491, %v2730
        %v2732 = vpop.f32.mrb[0].mxu0
        %v2733 = vadd.f32 %v2487, %v2732
        %v2734 = vpop.f32.mrb[0].mxu0
        %v2735 = vadd.f32 %v2491, %v2734
        %2736 = vdwg.mxu0
        %2737 = vmatprep.subr.bf16.mxu0 %v2603
        %2738 = vmatpush1.bf16.msra.mxu0 %v2602
        %2739 = vmatprep.subr.bf16.mxu0 %v2607
        %2740 = vmatpush1.bf16.msra.mxu0 %v2606
        %2741 = vmatprep.subr.bf16.mxu0 %v2611
        %2742 = vmatpush1.bf16.msra.mxu0 %v2610
        %2743 = vmatprep.subr.bf16.mxu0 %v2615
        %2744 = vmatpush1.bf16.msra.mxu0 %v2614
        %2745 = vmatprep.subr.bf16.mxu0 %v2619
        %2746 = vmatpush1.bf16.msra.mxu0 %v2618
        %2747 = vmatprep.subr.bf16.mxu0 %v2623
        %2748 = vmatpush1.bf16.msra.mxu0 %v2622
        %2749 = vmatprep.subr.bf16.mxu0 %v2627
        %2750 = vmatpush1.bf16.msra.mxu0 %v2626
        %2751 = vmatprep.subr.bf16.mxu0 %v2631
        %2752 = vmatpush1.bf16.msra.mxu0 %v2630
        %2753 = vmatprep.subr.bf16.mxu0 0
        %2754 = vmatpush1.bf16.msra.mxu0 0
        %2755 = vmatprep.subr.bf16.mxu0 0
        %2756 = vmatpush1.bf16.msra.mxu0 0
        %2757 = vmatprep.subr.bf16.mxu0 0
        %2758 = vmatpush1.bf16.msra.mxu0 0
        %2759 = vmatprep.subr.bf16.mxu0 0
        %2760 = vmatpush1.bf16.msra.mxu0 0
        %2761 = vmatprep.subr.bf16.mxu0 0
        %2762 = vmatpush1.bf16.msra.mxu0 0
        %2763 = vmatprep.subr.bf16.mxu0 0
        %2764 = vmatpush1.bf16.msra.mxu0 0
        %2765 = vmatprep.subr.bf16.mxu0 0
        %2766 = vmatpush1.bf16.msra.mxu0 0
        %2767 = vmatprep.subr.bf16.mxu0 0
        %2768 = vmatpush1.bf16.msra.mxu0 0
        %2769 = vmatprep.mubr.bf16.mxu0 0
        %2770 = vmatmul.mubr.bf16.gmra.mrb[0].mxu0 %v2446
        %v2771 = vpop.f32.mrb[0].mxu0
        %v2772 = vadd.f32 %v2495, %v2771
        %v2773 = vpop.f32.mrb[0].mxu0
        %v2774 = vadd.f32 %v2499, %v2773
        %v2775 = vpop.f32.mrb[0].mxu0
        %v2776 = vadd.f32 %v2495, %v2775
        %v2777 = vpop.f32.mrb[0].mxu0
        %v2778 = vadd.f32 %v2499, %v2777
        %2779 = vmatprep.mubr.bf16.mxu0 0
        %2780 = vmatmul.mubr.bf16.gmra.mrb[0].mxu0 %v2447
        %v2781 = vpop.f32.mrb[0].mxu0
        %v2782 = vadd.f32 %v2495, %v2781
        %v2783 = vpop.f32.mrb[0].mxu0
        %v2784 = vadd.f32 %v2499, %v2783
        %v2785 = vpop.f32.mrb[0].mxu0
        %v2786 = vadd.f32 %v2495, %v2785
        %v2787 = vpop.f32.mrb[0].mxu0
        %v2788 = vadd.f32 %v2499, %v2787
        %2789 = vmatprep.mubr.bf16.mxu0 0
        %2790 = vmatmul.mubr.bf16.gmra.mrb[0].mxu0 %v2448
        %v2791 = vpop.f32.mrb[0].mxu0
        %v2792 = vadd.f32 %v2495, %v2791
        %v2793 = vpop.f32.mrb[0].mxu0
        %v2794 = vadd.f32 %v2499, %v2793
        %v2795 = vpop.f32.mrb[0].mxu0
        %v2796 = vadd.f32 %v2495, %v2795
        %v2797 = vpop.f32.mrb[0].mxu0
        %v2798 = vadd.f32 %v2499, %v2797
        %2799 = vmatprep.mubr.bf16.mxu0 0
        %2800 = vmatmul.mubr.bf16.gmra.mrb[0].mxu0 %v2449
        %v2801 = vpop.f32.mrb[0].mxu0
        %v2802 = vadd.f32 %v2495, %v2801
        %v2803 = vpop.f32.mrb[0].mxu0
        %v2804 = vadd.f32 %v2499, %v2803
        %v2805 = vpop.f32.mrb[0].mxu0
        %v2806 = vadd.f32 %v2495, %v2805
        %v2807 = vpop.f32.mrb[0].mxu0
        %v2808 = vadd.f32 %v2499, %v2807
        %2809 = vdwg.mxu0
        %v2810 = vmul.f32 %v2699, %v2699
        %v2811 = vmul.f32 %v2701, %v2701
        %v2812 = vmul.f32 %v2772, %v2772
        %v2813 = vmul.f32 %v2774, %v2774
        %v2814 = vmul.f32 %v2703, %v2703
        %v2815 = vmul.f32 %v2705, %v2705
        %v2816 = vmul.f32 %v2776, %v2776
        %v2817 = vmul.f32 %v2778, %v2778
        %v2818 = vmul.f32 %v2709, %v2709
        %v2819 = vmul.f32 %v2711, %v2711
        %v2820 = vmul.f32 %v2782, %v2782
        %v2821 = vmul.f32 %v2784, %v2784
        %v2822 = vmul.f32 %v2713, %v2713
        %v2823 = vmul.f32 %v2715, %v2715
        %v2824 = vmul.f32 %v2786, %v2786
        %v2825 = vmul.f32 %v2788, %v2788
        %v2826 = vmul.f32 %v2719, %v2719
        %v2827 = vmul.f32 %v2721, %v2721
        %v2828 = vmul.f32 %v2792, %v2792
        %v2829 = vmul.f32 %v2794, %v2794
        %v2830 = vmul.f32 %v2723, %v2723
        %v2831 = vmul.f32 %v2725, %v2725
        %v2832 = vmul.f32 %v2796, %v2796
        %v2833 = vmul.f32 %v2798, %v2798
        %v2834 = vmul.f32 %v2729, %v2729
        %v2835 = vmul.f32 %v2731, %v2731
        %v2836 = vmul.f32 %v2802, %v2802
        %v2837 = vmul.f32 %v2804, %v2804
        %v2838 = vmul.f32 %v2733, %v2733
        %v2839 = vmul.f32 %v2735, %v2735
        %v2840 = vmul.f32 %v2806, %v2806
        %v2841 = vmul.f32 %v2808, %v2808
        %v2842 = vmul.f32 %v2699, %v2810
        %v2843 = vmul.f32 %v2701, %v2811
        %v2844 = vmul.f32 %v2772, %v2812
        %v2845 = vmul.f32 %v2774, %v2813
        %v2846 = vmul.f32 %v2703, %v2814
        %v2847 = vmul.f32 %v2705, %v2815
        %v2848 = vmul.f32 %v2776, %v2816
        %v2849 = vmul.f32 %v2778, %v2817
        %v2850 = vmul.f32 %v2709, %v2818
        %v2851 = vmul.f32 %v2711, %v2819
        %v2852 = vmul.f32 %v2782, %v2820
        %v2853 = vmul.f32 %v2784, %v2821
        %v2854 = vmul.f32 %v2713, %v2822
        %v2855 = vmul.f32 %v2715, %v2823
        %v2856 = vmul.f32 %v2786, %v2824
        %v2857 = vmul.f32 %v2788, %v2825
        %v2858 = vmul.f32 %v2719, %v2826
        %v2859 = vmul.f32 %v2721, %v2827
        %v2860 = vmul.f32 %v2792, %v2828
        %v2861 = vmul.f32 %v2794, %v2829
        %v2862 = vmul.f32 %v2723, %v2830
        %v2863 = vmul.f32 %v2725, %v2831
        %v2864 = vmul.f32 %v2796, %v2832
        %v2865 = vmul.f32 %v2798, %v2833
        %v2866 = vmul.f32 %v2729, %v2834
        %v2867 = vmul.f32 %v2731, %v2835
        %v2868 = vmul.f32 %v2802, %v2836
        %v2869 = vmul.f32 %v2804, %v2837
        %v2870 = vmul.f32 %v2733, %v2838
        %v2871 = vmul.f32 %v2735, %v2839
        %v2872 = vmul.f32 %v2806, %v2840
        %v2873 = vmul.f32 %v2808, %v2841
        %v2874 = vmul.f32 %v2842, 0.044715
        %v2875 = vmul.f32 %v2843, 0.044715
        %v2876 = vmul.f32 %v2844, 0.044715
        %v2877 = vmul.f32 %v2845, 0.044715
        %v2878 = vmul.f32 %v2846, 0.044715
        %v2879 = vmul.f32 %v2847, 0.044715
        %v2880 = vmul.f32 %v2848, 0.044715
        %v2881 = vmul.f32 %v2849, 0.044715
        %v2882 = vmul.f32 %v2850, 0.044715
        %v2883 = vmul.f32 %v2851, 0.044715
        %v2884 = vmul.f32 %v2852, 0.044715
        %v2885 = vmul.f32 %v2853, 0.044715
        %v2886 = vmul.f32 %v2854, 0.044715
        %v2887 = vmul.f32 %v2855, 0.044715
        %v2888 = vmul.f32 %v2856, 0.044715
        %v2889 = vmul.f32 %v2857, 0.044715
        %v2890 = vmul.f32 %v2858, 0.044715
        %v2891 = vmul.f32 %v2859, 0.044715
        %v2892 = vmul.f32 %v2860, 0.044715
        %v2893 = vmul.f32 %v2861, 0.044715
        %v2894 = vmul.f32 %v2862, 0.044715
        %v2895 = vmul.f32 %v2863, 0.044715
        %v2896 = vmul.f32 %v2864, 0.044715
        %v2897 = vmul.f32 %v2865, 0.044715
        %v2898 = vmul.f32 %v2866, 0.044715
        %v2899 = vmul.f32 %v2867, 0.044715
        %v2900 = vmul.f32 %v2868, 0.044715
        %v2901 = vmul.f32 %v2869, 0.044715
        %v2902 = vmul.f32 %v2870, 0.044715
        %v2903 = vmul.f32 %v2871, 0.044715
        %v2904 = vmul.f32 %v2872, 0.044715
        %v2905 = vmul.f32 %v2873, 0.044715
        %v2906 = vadd.f32 %v2699, %v2874
        %v2907 = vadd.f32 %v2701, %v2875
        %v2908 = vadd.f32 %v2772, %v2876
        %v2909 = vadd.f32 %v2774, %v2877
        %v2910 = vadd.f32 %v2703, %v2878
        %v2911 = vadd.f32 %v2705, %v2879
        %v2912 = vadd.f32 %v2776, %v2880
        %v2913 = vadd.f32 %v2778, %v2881
        %v2914 = vadd.f32 %v2709, %v2882
        %v2915 = vadd.f32 %v2711, %v2883
        %v2916 = vadd.f32 %v2782, %v2884
        %v2917 = vadd.f32 %v2784, %v2885
        %v2918 = vadd.f32 %v2713, %v2886
        %v2919 = vadd.f32 %v2715, %v2887
        %v2920 = vadd.f32 %v2786, %v2888
        %v2921 = vadd.f32 %v2788, %v2889
        %v2922 = vadd.f32 %v2719, %v2890
        %v2923 = vadd.f32 %v2721, %v2891
        %v2924 = vadd.f32 %v2792, %v2892
        %v2925 = vadd.f32 %v2794, %v2893
        %v2926 = vadd.f32 %v2723, %v2894
        %v2927 = vadd.f32 %v2725, %v2895
        %v2928 = vadd.f32 %v2796, %v2896
        %v2929 = vadd.f32 %v2798, %v2897
        %v2930 = vadd.f32 %v2729, %v2898
        %v2931 = vadd.f32 %v2731, %v2899
        %v2932 = vadd.f32 %v2802, %v2900
        %v2933 = vadd.f32 %v2804, %v2901
        %v2934 = vadd.f32 %v2733, %v2902
        %v2935 = vadd.f32 %v2735, %v2903
        %v2936 = vadd.f32 %v2806, %v2904
        %v2937 = vadd.f32 %v2808, %v2905
        %v2938 = vmul.f32 %v2906, 0.7978846
        %v2939 = vmul.f32 %v2907, 0.7978846
        %v2940 = vmul.f32 %v2908, 0.7978846
        %v2941 = vmul.f32 %v2909, 0.7978846
        %v2942 = vmul.f32 %v2910, 0.7978846
        %v2943 = vmul.f32 %v2911, 0.7978846
        %v2944 = vmul.f32 %v2912, 0.7978846
        %v2945 = vmul.f32 %v2913, 0.7978846
        %v2946 = vmul.f32 %v2914, 0.7978846
        %v2947 = vmul.f32 %v2915, 0.7978846
        %v2948 = vmul.f32 %v2916, 0.7978846
        %v2949 = vmul.f32 %v2917, 0.7978846
        %v2950 = vmul.f32 %v2918, 0.7978846
        %v2951 = vmul.f32 %v2919, 0.7978846
        %v2952 = vmul.f32 %v2920, 0.7978846
        %v2953 = vmul.f32 %v2921, 0.7978846
        %v2954 = vmul.f32 %v2922, 0.7978846
        %v2955 = vmul.f32 %v2923, 0.7978846
        %v2956 = vmul.f32 %v2924, 0.7978846
        %v2957 = vmul.f32 %v2925, 0.7978846
        %v2958 = vmul.f32 %v2926, 0.7978846
        %v2959 = vmul.f32 %v2927, 0.7978846
        %v2960 = vmul.f32 %v2928, 0.7978846
        %v2961 = vmul.f32 %v2929, 0.7978846
        %v2962 = vmul.f32 %v2930, 0.7978846
        %v2963 = vmul.f32 %v2931, 0.7978846
        %v2964 = vmul.f32 %v2932, 0.7978846
        %v2965 = vmul.f32 %v2933, 0.7978846
        %v2966 = vmul.f32 %v2934, 0.7978846
        %v2967 = vmul.f32 %v2935, 0.7978846
        %v2968 = vmul.f32 %v2936, 0.7978846
        %v2969 = vmul.f32 %v2937, 0.7978846
        %v2970 = vtanh.pop %v2938
        %v2971 = vtanh.pop %v2939
        %v2972 = vtanh.pop %v2940
        %v2973 = vtanh.pop %v2941
        %v2974 = vtanh.pop %v2942
        %v2975 = vtanh.pop %v2943
        %v2976 = vtanh.pop %v2944
        %v2977 = vtanh.pop %v2945
        %v2978 = vtanh.pop %v2946
        %v2979 = vtanh.pop %v2947
        %v2980 = vtanh.pop %v2948
        %v2981 = vtanh.pop %v2949
        %v2982 = vtanh.pop %v2950
        %v2983 = vtanh.pop %v2951
        %v2984 = vtanh.pop %v2952
        %v2985 = vtanh.pop %v2953
        %v2986 = vtanh.pop %v2954
        %v2987 = vtanh.pop %v2955
        %v2988 = vtanh.pop %v2956
        %v2989 = vtanh.pop %v2957
        %v2990 = vtanh.pop %v2958
        %v2991 = vtanh.pop %v2959
        %v2992 = vtanh.pop %v2960
        %v2993 = vtanh.pop %v2961
        %v2994 = vtanh.pop %v2962
        %v2995 = vtanh.pop %v2963
        %v2996 = vtanh.pop %v2964
        %v2997 = vtanh.pop %v2965
        %v2998 = vtanh.pop %v2966
        %v2999 = vtanh.pop %v2967
        %v3000 = vtanh.pop %v2968
        %v3001 = vtanh.pop %v2969
        %v3002 = vadd.f32 %v2970, 1.0
        %v3003 = vadd.f32 %v2971, 1.0
        %v3004 = vadd.f32 %v2972, 1.0
        %v3005 = vadd.f32 %v2973, 1.0
        %v3006 = vadd.f32 %v2974, 1.0
        %v3007 = vadd.f32 %v2975, 1.0
        %v3008 = vadd.f32 %v2976, 1.0
        %v3009 = vadd.f32 %v2977, 1.0
        %v3010 = vadd.f32 %v2978, 1.0
        %v3011 = vadd.f32 %v2979, 1.0
        %v3012 = vadd.f32 %v2980, 1.0
        %v3013 = vadd.f32 %v2981, 1.0
        %v3014 = vadd.f32 %v2982, 1.0
        %v3015 = vadd.f32 %v2983, 1.0
        %v3016 = vadd.f32 %v2984, 1.0
        %v3017 = vadd.f32 %v2985, 1.0
        %v3018 = vadd.f32 %v2986, 1.0
        %v3019 = vadd.f32 %v2987, 1.0
        %v3020 = vadd.f32 %v2988, 1.0
        %v3021 = vadd.f32 %v2989, 1.0
        %v3022 = vadd.f32 %v2990, 1.0
        %v3023 = vadd.f32 %v2991, 1.0
        %v3024 = vadd.f32 %v2992, 1.0
        %v3025 = vadd.f32 %v2993, 1.0
        %v3026 = vadd.f32 %v2994, 1.0
        %v3027 = vadd.f32 %v2995, 1.0
        %v3028 = vadd.f32 %v2996, 1.0
        %v3029 = vadd.f32 %v2997, 1.0
        %v3030 = vadd.f32 %v2998, 1.0
        %v3031 = vadd.f32 %v2999, 1.0
        %v3032 = vadd.f32 %v3000, 1.0
        %v3033 = vadd.f32 %v3001, 1.0
        %v3034 = vmul.f32 %v3002, 0.5
        %v3035 = vmul.f32 %v3003, 0.5
        %v3036 = vmul.f32 %v3004, 0.5
        %v3037 = vmul.f32 %v3005, 0.5
        %v3038 = vmul.f32 %v3006, 0.5
        %v3039 = vmul.f32 %v3007, 0.5
        %v3040 = vmul.f32 %v3008, 0.5
        %v3041 = vmul.f32 %v3009, 0.5
        %v3042 = vmul.f32 %v3010, 0.5
        %v3043 = vmul.f32 %v3011, 0.5
        %v3044 = vmul.f32 %v3012, 0.5
        %v3045 = vmul.f32 %v3013, 0.5
        %v3046 = vmul.f32 %v3014, 0.5
        %v3047 = vmul.f32 %v3015, 0.5
        %v3048 = vmul.f32 %v3016, 0.5
        %v3049 = vmul.f32 %v3017, 0.5
        %v3050 = vmul.f32 %v3018, 0.5
        %v3051 = vmul.f32 %v3019, 0.5
        %v3052 = vmul.f32 %v3020, 0.5
        %v3053 = vmul.f32 %v3021, 0.5
        %v3054 = vmul.f32 %v3022, 0.5
        %v3055 = vmul.f32 %v3023, 0.5
        %v3056 = vmul.f32 %v3024, 0.5
        %v3057 = vmul.f32 %v3025, 0.5
        %v3058 = vmul.f32 %v3026, 0.5
        %v3059 = vmul.f32 %v3027, 0.5
        %v3060 = vmul.f32 %v3028, 0.5
        %v3061 = vmul.f32 %v3029, 0.5
        %v3062 = vmul.f32 %v3030, 0.5
        %v3063 = vmul.f32 %v3031, 0.5
        %v3064 = vmul.f32 %v3032, 0.5
        %v3065 = vmul.f32 %v3033, 0.5
        %v3066 = vmul.f32 %v2699, %v3034
        %v3067 = vmul.f32 %v2701, %v3035
        %v3068 = vmul.f32 %v2772, %v3036
        %v3069 = vmul.f32 %v2774, %v3037
        %v3070 = vmul.f32 %v2703, %v3038
        %v3071 = vmul.f32 %v2705, %v3039
        %v3072 = vmul.f32 %v2776, %v3040
        %v3073 = vmul.f32 %v2778, %v3041
        %v3074 = vmul.f32 %v2709, %v3042
        %v3075 = vmul.f32 %v2711, %v3043
        %v3076 = vmul.f32 %v2782, %v3044
        %v3077 = vmul.f32 %v2784, %v3045
        %v3078 = vmul.f32 %v2713, %v3046
        %v3079 = vmul.f32 %v2715, %v3047
        %v3080 = vmul.f32 %v2786, %v3048
        %v3081 = vmul.f32 %v2788, %v3049
        %v3082 = vmul.f32 %v2719, %v3050
        %v3083 = vmul.f32 %v2721, %v3051
        %v3084 = vmul.f32 %v2792, %v3052
        %v3085 = vmul.f32 %v2794, %v3053
        %v3086 = vmul.f32 %v2723, %v3054
        %v3087 = vmul.f32 %v2725, %v3055
        %v3088 = vmul.f32 %v2796, %v3056
        %v3089 = vmul.f32 %v2798, %v3057
        %v3090 = vmul.f32 %v2729, %v3058
        %v3091 = vmul.f32 %v2731, %v3059
        %v3092 = vmul.f32 %v2802, %v3060
        %v3093 = vmul.f32 %v2804, %v3061
        %v3094 = vmul.f32 %v2733, %v3062
        %v3095 = vmul.f32 %v2735, %v3063
        %v3096 = vmul.f32 %v2806, %v3064
        %v3097 = vmul.f32 %v2808, %v3065
        %v3098 = vpack.c.bf16 %v3070, %v3066
        %v3099 = vpack.c.bf16 %v3071, %v3067
        %v3100 = vpack.c.bf16 %v3072, %v3068
        %v3101 = vpack.c.bf16 %v3073, %v3069
        %v3102 = vpack.c.bf16 %v3078, %v3074
        %v3103 = vpack.c.bf16 %v3079, %v3075
        %v3104 = vpack.c.bf16 %v3080, %v3076
        %v3105 = vpack.c.bf16 %v3081, %v3077
        %v3106 = vpack.c.bf16 %v3086, %v3082
        %v3107 = vpack.c.bf16 %v3087, %v3083
        %v3108 = vpack.c.bf16 %v3088, %v3084
        %v3109 = vpack.c.bf16 %v3089, %v3085
        %v3110 = vpack.c.bf16 %v3094, %v3090
        %v3111 = vpack.c.bf16 %v3095, %v3091
        %v3112 = vpack.c.bf16 %v3096, %v3092
        %v3113 = vpack.c.bf16 %v3097, %v3093
        %v3114 = vld [vmem:[%s694] sm:$0xf]
        %v3115 = vld [vmem:[%s694 + $0x4] sm:$0xf]
        %v3116 = vld [vmem:[%s694 + $0x8] sm:$0xf]
        %v3117 = vld [vmem:[%s694 + $0xc] sm:$0xf]
        %v3118 = vld [vmem:[%s694 + $0x10] sm:$0xf]
        %v3119 = vld [vmem:[%s694 + $0x14] sm:$0xf]
        %v3120 = vld [vmem:[%s694 + $0x18] sm:$0xf]
        %v3121 = vld [vmem:[%s694 + $0x1c] sm:$0xf]
        %v3122 = vld [vmem:[%s694 + $0x20] sm:$0xf]
        %v3123 = vld [vmem:[%s694 + $0x24] sm:$0xf]
        %v3124 = vld [vmem:[%s694 + $0x28] sm:$0xf]
        %v3125 = vld [vmem:[%s694 + $0x2c] sm:$0xf]
        %v3126 = vld [vmem:[%s694 + $0x30] sm:$0xf]
        %v3127 = vld [vmem:[%s694 + $0x34] sm:$0xf]
        %v3128 = vld [vmem:[%s694 + $0x38] sm:$0xf]
        %v3129 = vld [vmem:[%s694 + $0x3c] sm:$0xf]
        %v3130 = vld [vmem:[%s694 + $0x40] sm:$0xf]
        %v3131 = vld [vmem:[%s694 + $0x44] sm:$0xf]
        %v3132 = vld [vmem:[%s694 + $0x48] sm:$0xf]
        %v3133 = vld [vmem:[%s694 + $0x4c] sm:$0xf]
        %v3134 = vld [vmem:[%s694 + $0x50] sm:$0xf]
        %v3135 = vld [vmem:[%s694 + $0x54] sm:$0xf]
        %v3136 = vld [vmem:[%s694 + $0x58] sm:$0xf]
        %v3137 = vld [vmem:[%s694 + $0x5c] sm:$0xf]
        %v3138 = vld [vmem:[%s694 + $0x60] sm:$0xf]
        %v3139 = vld [vmem:[%s694 + $0x64] sm:$0xf]
        %v3140 = vld [vmem:[%s694 + $0x68] sm:$0xf]
        %v3141 = vld [vmem:[%s694 + $0x6c] sm:$0xf]
        %v3142 = vld [vmem:[%s694 + $0x70] sm:$0xf]
        %v3143 = vld [vmem:[%s694 + $0x74] sm:$0xf]
        %v3144 = vld [vmem:[%s694 + $0x78] sm:$0xf]
        %v3145 = vld [vmem:[%s694 + $0x7c] sm:$0xf]
        %v3146 = vld [vmem:[%s694 + $0x80] sm:$0xf]
        %v3147 = vld [vmem:[%s694 + $0x84] sm:$0xf]
        %v3148 = vld [vmem:[%s694 + $0x88] sm:$0xf]
        %v3149 = vld [vmem:[%s694 + $0x8c] sm:$0xf]
        %v3150 = vld [vmem:[%s694 + $0x90] sm:$0xf]
        %v3151 = vld [vmem:[%s694 + $0x94] sm:$0xf]
        %v3152 = vld [vmem:[%s694 + $0x98] sm:$0xf]
        %v3153 = vld [vmem:[%s694 + $0x9c] sm:$0xf]
        %v3154 = vld [vmem:[%s694 + $0xa0] sm:$0xf]
        %v3155 = vld [vmem:[%s694 + $0xa4] sm:$0xf]
        %v3156 = vld [vmem:[%s694 + $0xa8] sm:$0xf]
        %v3157 = vld [vmem:[%s694 + $0xac] sm:$0xf]
        %v3158 = vld [vmem:[%s694 + $0xb0] sm:$0xf]
        %v3159 = vld [vmem:[%s694 + $0xb4] sm:$0xf]
        %v3160 = vld [vmem:[%s694 + $0xb8] sm:$0xf]
        %v3161 = vld [vmem:[%s694 + $0xbc] sm:$0xf]
        %v3162 = vld [vmem:[%s694 + $0xc0] sm:$0xf]
        %v3163 = vld [vmem:[%s694 + $0xc4] sm:$0xf]
        %v3164 = vld [vmem:[%s694 + $0xc8] sm:$0xf]
        %v3165 = vld [vmem:[%s694 + $0xcc] sm:$0xf]
        %v3166 = vld [vmem:[%s694 + $0xd0] sm:$0xf]
        %v3167 = vld [vmem:[%s694 + $0xd4] sm:$0xf]
        %v3168 = vld [vmem:[%s694 + $0xd8] sm:$0xf]
        %v3169 = vld [vmem:[%s694 + $0xdc] sm:$0xf]
        %v3170 = vld [vmem:[%s694 + $0xe0] sm:$0xf]
        %v3171 = vld [vmem:[%s694 + $0xe4] sm:$0xf]
        %v3172 = vld [vmem:[%s694 + $0xe8] sm:$0xf]
        %v3173 = vld [vmem:[%s694 + $0xec] sm:$0xf]
        %v3174 = vld [vmem:[%s694 + $0xf0] sm:$0xf]
        %v3175 = vld [vmem:[%s694 + $0xf4] sm:$0xf]
        %v3176 = vld [vmem:[%s694 + $0xf8] sm:$0xf]
        %v3177 = vld [vmem:[%s694 + $0xfc] sm:$0xf]
        %v3178 = vld [vmem:[%s812] sm:$0x1]
        %v3180 = vlaneseq
        %v3181 = vshrl.u32 %v3180, 7
        %v3182 = vsub.s32 0, %v3181
        %v3183 = vrot.slane %v3178, %v3182
        %v3249 = vunpack.c.l.b16 %v3114
        %v3250 = vunpack.c.l.b16 %v3115
        %v3251 = vunpack.c.l.b16 %v3116
        %v3252 = vunpack.c.l.b16 %v3117
        %v3253 = vunpack.c.l.b16 %v3118
        %v3254 = vunpack.c.l.b16 %v3119
        %v3255 = vunpack.c.l.b16 %v3120
        %v3256 = vunpack.c.l.b16 %v3121
        %v3257 = vunpack.c.l.b16 %v3122
        %v3258 = vunpack.c.l.b16 %v3123
        %v3259 = vunpack.c.l.b16 %v3124
        %v3260 = vunpack.c.l.b16 %v3125
        %v3261 = vunpack.c.l.b16 %v3126
        %v3262 = vunpack.c.l.b16 %v3127
        %v3263 = vunpack.c.l.b16 %v3128
        %v3264 = vunpack.c.l.b16 %v3129
        %v3265 = vunpack.c.l.b16 %v3130
        %v3266 = vunpack.c.l.b16 %v3131
        %v3267 = vunpack.c.l.b16 %v3132
        %v3268 = vunpack.c.l.b16 %v3133
        %v3269 = vunpack.c.l.b16 %v3134
        %v3270 = vunpack.c.l.b16 %v3135
        %v3271 = vunpack.c.l.b16 %v3136
        %v3272 = vunpack.c.l.b16 %v3137
        %v3273 = vunpack.c.l.b16 %v3138
        %v3274 = vunpack.c.l.b16 %v3139
        %v3275 = vunpack.c.l.b16 %v3140
        %v3276 = vunpack.c.l.b16 %v3141
        %v3277 = vunpack.c.l.b16 %v3142
        %v3278 = vunpack.c.l.b16 %v3143
        %v3279 = vunpack.c.l.b16 %v3144
        %v3280 = vunpack.c.l.b16 %v3145
        %v3281 = vunpack.c.l.b16 %v3146
        %v3282 = vunpack.c.l.b16 %v3147
        %v3283 = vunpack.c.l.b16 %v3148
        %v3284 = vunpack.c.l.b16 %v3149
        %v3285 = vunpack.c.l.b16 %v3150
        %v3286 = vunpack.c.l.b16 %v3151
        %v3287 = vunpack.c.l.b16 %v3152
        %v3288 = vunpack.c.l.b16 %v3153
        %v3289 = vunpack.c.l.b16 %v3154
        %v3290 = vunpack.c.l.b16 %v3155
        %v3291 = vunpack.c.l.b16 %v3156
        %v3292 = vunpack.c.l.b16 %v3157
        %v3293 = vunpack.c.l.b16 %v3158
        %v3294 = vunpack.c.l.b16 %v3159
        %v3295 = vunpack.c.l.b16 %v3160
        %v3296 = vunpack.c.l.b16 %v3161
        %v3297 = vunpack.c.l.b16 %v3162
        %v3298 = vunpack.c.l.b16 %v3163
        %v3299 = vunpack.c.l.b16 %v3164
        %v3300 = vunpack.c.l.b16 %v3165
        %v3301 = vunpack.c.l.b16 %v3166
        %v3302 = vunpack.c.l.b16 %v3167
        %v3303 = vunpack.c.l.b16 %v3168
        %v3304 = vunpack.c.l.b16 %v3169
        %v3305 = vunpack.c.l.b16 %v3170
        %v3306 = vunpack.c.l.b16 %v3171
        %v3307 = vunpack.c.l.b16 %v3172
        %v3308 = vunpack.c.l.b16 %v3173
        %v3309 = vunpack.c.l.b16 %v3174
        %v3310 = vunpack.c.l.b16 %v3175
        %v3311 = vunpack.c.l.b16 %v3176
        %v3312 = vunpack.c.l.b16 %v3177
        %v3313 = vpack.c.b16 %v3250, %v3249
        %v3314 = vpack.c.b16 %v3252, %v3251
        %v3315 = vpack.c.b16 %v3254, %v3253
        %v3316 = vpack.c.b16 %v3256, %v3255
        %v3317 = vpack.c.b16 %v3258, %v3257
        %v3318 = vpack.c.b16 %v3260, %v3259
        %v3319 = vpack.c.b16 %v3262, %v3261
        %v3320 = vpack.c.b16 %v3264, %v3263
        %v3321 = vpack.c.b16 %v3266, %v3265
        %v3322 = vpack.c.b16 %v3268, %v3267
        %v3323 = vpack.c.b16 %v3270, %v3269
        %v3324 = vpack.c.b16 %v3272, %v3271
        %v3325 = vpack.c.b16 %v3274, %v3273
        %v3326 = vpack.c.b16 %v3276, %v3275
        %v3327 = vpack.c.b16 %v3278, %v3277
        %v3328 = vpack.c.b16 %v3280, %v3279
        %v3329 = vpack.c.b16 %v3282, %v3281
        %v3330 = vpack.c.b16 %v3284, %v3283
        %v3331 = vpack.c.b16 %v3286, %v3285
        %v3332 = vpack.c.b16 %v3288, %v3287
        %v3333 = vpack.c.b16 %v3290, %v3289
        %v3334 = vpack.c.b16 %v3292, %v3291
        %v3335 = vpack.c.b16 %v3294, %v3293
        %v3336 = vpack.c.b16 %v3296, %v3295
        %v3337 = vpack.c.b16 %v3298, %v3297
        %v3338 = vpack.c.b16 %v3300, %v3299
        %v3339 = vpack.c.b16 %v3302, %v3301
        %v3340 = vpack.c.b16 %v3304, %v3303
        %v3341 = vpack.c.b16 %v3306, %v3305
        %v3342 = vpack.c.b16 %v3308, %v3307
        %v3343 = vpack.c.b16 %v3310, %v3309
        %v3344 = vpack.c.b16 %v3312, %v3311
        %3377 = vmatprep.subr.bf16.mxu0 0
        %3378 = vmatpush1.bf16.msra.mxu0 %v3313
        %3379 = vmatprep.subr.bf16.mxu0 0
        %3380 = vmatpush1.bf16.msra.mxu0 %v3314
        %3381 = vmatprep.subr.bf16.mxu0 0
        %3382 = vmatpush1.bf16.msra.mxu0 %v3315
        %3383 = vmatprep.subr.bf16.mxu0 0
        %3384 = vmatpush1.bf16.msra.mxu0 %v3316
        %3385 = vmatprep.subr.bf16.mxu0 0
        %3386 = vmatpush1.bf16.msra.mxu0 %v3317
        %3387 = vmatprep.subr.bf16.mxu0 0
        %3388 = vmatpush1.bf16.msra.mxu0 %v3318
        %3389 = vmatprep.subr.bf16.mxu0 0
        %3390 = vmatpush1.bf16.msra.mxu0 %v3319
        %3391 = vmatprep.subr.bf16.mxu0 0
        %3392 = vmatpush1.bf16.msra.mxu0 %v3320
        %3393 = vmatprep.subr.bf16.mxu0 0
        %3394 = vmatpush1.bf16.msra.mxu0 %v3321
        %3395 = vmatprep.subr.bf16.mxu0 0
        %3396 = vmatpush1.bf16.msra.mxu0 %v3322
        %3397 = vmatprep.subr.bf16.mxu0 0
        %3398 = vmatpush1.bf16.msra.mxu0 %v3323
        %3399 = vmatprep.subr.bf16.mxu0 0
        %3400 = vmatpush1.bf16.msra.mxu0 %v3324
        %3401 = vmatprep.subr.bf16.mxu0 0
        %3402 = vmatpush1.bf16.msra.mxu0 %v3325
        %3403 = vmatprep.subr.bf16.mxu0 0
        %3404 = vmatpush1.bf16.msra.mxu0 %v3326
        %3405 = vmatprep.subr.bf16.mxu0 0
        %3406 = vmatpush1.bf16.msra.mxu0 %v3327
        %3407 = vmatprep.subr.bf16.mxu0 0
        %3408 = vmatpush1.bf16.msra.mxu0 %v3328
        %3409 = vmatprep.mubr.bf16.mxu0 %v3099
        %3410 = vmatmul.mubr.bf16.gmra.mrb[0].mxu0 %v3098
        %v3411 = vpop.f32.mrb[0].mxu0
        %v3412 = vadd.f32 %v3183, %v3411
        %v3413 = vpop.f32.mrb[0].mxu0
        %v3414 = vpop.f32.mrb[0].mxu0
        %v3415 = vadd.f32 %v3183, %v3414
        %v3416 = vpop.f32.mrb[0].mxu0
        %3417 = vmatprep.mubr.bf16.mxu0 %v3103
        %3418 = vmatmul.mubr.bf16.gmra.mrb[0].mxu0 %v3102
        %v3419 = vpop.f32.mrb[0].mxu0
        %v3420 = vadd.f32 %v3183, %v3419
        %v3421 = vpop.f32.mrb[0].mxu0
        %v3422 = vpop.f32.mrb[0].mxu0
        %v3423 = vadd.f32 %v3183, %v3422
        %v3424 = vpop.f32.mrb[0].mxu0
        %3425 = vmatprep.mubr.bf16.mxu0 %v3107
        %3426 = vmatmul.mubr.bf16.gmra.mrb[0].mxu0 %v3106
        %v3427 = vpop.f32.mrb[0].mxu0
        %v3428 = vadd.f32 %v3183, %v3427
        %v3429 = vpop.f32.mrb[0].mxu0
        %v3430 = vpop.f32.mrb[0].mxu0
        %v3431 = vadd.f32 %v3183, %v3430
        %v3432 = vpop.f32.mrb[0].mxu0
        %3433 = vmatprep.mubr.bf16.mxu0 %v3111
        %3434 = vmatmul.mubr.bf16.gmra.mrb[0].mxu0 %v3110
        %v3435 = vpop.f32.mrb[0].mxu0
        %v3436 = vadd.f32 %v3183, %v3435
        %v3437 = vpop.f32.mrb[0].mxu0
        %v3438 = vpop.f32.mrb[0].mxu0
        %v3439 = vadd.f32 %v3183, %v3438
        %v3440 = vpop.f32.mrb[0].mxu0
        %3441 = vdwg.mxu0
        %3442 = vmatprep.subr.bf16.mxu0 0
        %3443 = vmatpush1.bf16.msra.mxu0 %v3329
        %3444 = vmatprep.subr.bf16.mxu0 0
        %3445 = vmatpush1.bf16.msra.mxu0 %v3330
        %3446 = vmatprep.subr.bf16.mxu0 0
        %3447 = vmatpush1.bf16.msra.mxu0 %v3331
        %3448 = vmatprep.subr.bf16.mxu0 0
        %3449 = vmatpush1.bf16.msra.mxu0 %v3332
        %3450 = vmatprep.subr.bf16.mxu0 0
        %3451 = vmatpush1.bf16.msra.mxu0 %v3333
        %3452 = vmatprep.subr.bf16.mxu0 0
        %3453 = vmatpush1.bf16.msra.mxu0 %v3334
        %3454 = vmatprep.subr.bf16.mxu0 0
        %3455 = vmatpush1.bf16.msra.mxu0 %v3335
        %3456 = vmatprep.subr.bf16.mxu0 0
        %3457 = vmatpush1.bf16.msra.mxu0 %v3336
        %3458 = vmatprep.subr.bf16.mxu0 0
        %3459 = vmatpush1.bf16.msra.mxu0 %v3337
        %3460 = vmatprep.subr.bf16.mxu0 0
        %3461 = vmatpush1.bf16.msra.mxu0 %v3338
        %3462 = vmatprep.subr.bf16.mxu0 0
        %3463 = vmatpush1.bf16.msra.mxu0 %v3339
        %3464 = vmatprep.subr.bf16.mxu0 0
        %3465 = vmatpush1.bf16.msra.mxu0 %v3340
        %3466 = vmatprep.subr.bf16.mxu0 0
        %3467 = vmatpush1.bf16.msra.mxu0 %v3341
        %3468 = vmatprep.subr.bf16.mxu0 0
        %3469 = vmatpush1.bf16.msra.mxu0 %v3342
        %3470 = vmatprep.subr.bf16.mxu0 0
        %3471 = vmatpush1.bf16.msra.mxu0 %v3343
        %3472 = vmatprep.subr.bf16.mxu0 0
        %3473 = vmatpush1.bf16.msra.mxu0 %v3344
        %3474 = vmatprep.mubr.bf16.mxu0 %v3101
        %3475 = vmatmul.mubr.bf16.gmra.mrb[0].mxu0 %v3100
        %v3476 = vpop.f32.mrb[0].mxu0
        %v3477 = vadd.f32 %v3412, %v3476
        %v3478 = vpop.f32.mrb[0].mxu0
        %v3479 = vpop.f32.mrb[0].mxu0
        %v3480 = vadd.f32 %v3415, %v3479
        %v3481 = vpop.f32.mrb[0].mxu0
        %3482 = vmatprep.mubr.bf16.mxu0 %v3105
        %3483 = vmatmul.mubr.bf16.gmra.mrb[0].mxu0 %v3104
        %v3484 = vpop.f32.mrb[0].mxu0
        %v3485 = vadd.f32 %v3420, %v3484
        %v3486 = vpop.f32.mrb[0].mxu0
        %v3487 = vpop.f32.mrb[0].mxu0
        %v3488 = vadd.f32 %v3423, %v3487
        %v3489 = vpop.f32.mrb[0].mxu0
        %3490 = vmatprep.mubr.bf16.mxu0 %v3109
        %3491 = vmatmul.mubr.bf16.gmra.mrb[0].mxu0 %v3108
        %v3492 = vpop.f32.mrb[0].mxu0
        %v3493 = vadd.f32 %v3428, %v3492
        %v3494 = vpop.f32.mrb[0].mxu0
        %v3495 = vpop.f32.mrb[0].mxu0
        %v3496 = vadd.f32 %v3431, %v3495
        %v3497 = vpop.f32.mrb[0].mxu0
        %3498 = vmatprep.mubr.bf16.mxu0 %v3113
        %3499 = vmatmul.mubr.bf16.gmra.mrb[0].mxu0 %v3112
        %v3500 = vpop.f32.mrb[0].mxu0
        %v3501 = vadd.f32 %v3436, %v3500
        %v3502 = vpop.f32.mrb[0].mxu0
        %v3503 = vpop.f32.mrb[0].mxu0
        %v3504 = vadd.f32 %v3439, %v3503
        %v3505 = vpop.f32.mrb[0].mxu0
        %3506 = vdwg.mxu0
        %v3507 = vadd.f32 %v2438, %v3477
        %v3508 = vadd.f32 %v2439, %v3480
        %v3509 = vadd.f32 %v2440, %v3485
        %v3510 = vadd.f32 %v2441, %v3488
        %v3511 = vadd.f32 %v2442, %v3493
        %v3512 = vadd.f32 %v2443, %v3496
        %v3513 = vadd.f32 %v2444, %v3501
        %v3514 = vadd.f32 %v2445, %v3504
        %v3515 = vld [vmem:[%s815] sm:$0x1]
        %v3516 = vld [vmem:[%s818] sm:$0x1]
        %3517 = vadd.xlane.f32.xlu0 %v3507
        %v3518 = vpop.xlane.xlu0 %3517
        %3519 = vadd.xlane.f32.xlu0 %v3508
        %v3520 = vpop.xlane.xlu0 %3519
        %3521 = vadd.xlane.f32.xlu0 %v3509
        %v3522 = vpop.xlane.xlu0 %3521
        %3523 = vadd.xlane.f32.xlu0 %v3510
        %v3524 = vpop.xlane.xlu0 %3523
        %3525 = vadd.xlane.f32.xlu0 %v3511
        %v3526 = vpop.xlane.xlu0 %3525
        %3527 = vadd.xlane.f32.xlu0 %v3512
        %v3528 = vpop.xlane.xlu0 %3527
        %3529 = vadd.xlane.f32.xlu0 %v3513
        %v3530 = vpop.xlane.xlu0 %3529
        %3531 = vadd.xlane.f32.xlu0 %v3514
        %v3532 = vpop.xlane.xlu0 %3531
        %v3533 = vmul.f32 %v3518, %v2345
        %v3534 = vmul.f32 %v3520, %v2345
        %v3535 = vmul.f32 %v3522, %v2345
        %v3536 = vmul.f32 %v3524, %v2345
        %v3537 = vmul.f32 %v3526, %v2345
        %v3538 = vmul.f32 %v3528, %v2345
        %v3539 = vmul.f32 %v3530, %v2345
        %v3540 = vmul.f32 %v3532, %v2345
        %v3541 = vsub.f32 %v3507, %v3533
        %v3542 = vsub.f32 %v3508, %v3534
        %v3543 = vsub.f32 %v3509, %v3535
        %v3544 = vsub.f32 %v3510, %v3536
        %v3545 = vsub.f32 %v3511, %v3537
        %v3546 = vsub.f32 %v3512, %v3538
        %v3547 = vsub.f32 %v3513, %v3539
        %v3548 = vsub.f32 %v3514, %v3540
        %v3549 = vmul.f32 %v3541, %v3541
        %v3550 = vmul.f32 %v3542, %v3542
        %v3551 = vmul.f32 %v3543, %v3543
        %v3552 = vmul.f32 %v3544, %v3544
        %v3553 = vmul.f32 %v3545, %v3545
        %v3554 = vmul.f32 %v3546, %v3546
        %v3555 = vmul.f32 %v3547, %v3547
        %v3556 = vmul.f32 %v3548, %v3548
        %3557 = vadd.xlane.f32.xlu0 %v3549
        %v3558 = vpop.xlane.xlu0 %3557
        %3559 = vadd.xlane.f32.xlu0 %v3550
        %v3560 = vpop.xlane.xlu0 %3559
        %3561 = vadd.xlane.f32.xlu0 %v3551
        %v3562 = vpop.xlane.xlu0 %3561
        %3563 = vadd.xlane.f32.xlu0 %v3552
        %v3564 = vpop.xlane.xlu0 %3563
        %3565 = vadd.xlane.f32.xlu0 %v3553
        %v3566 = vpop.xlane.xlu0 %3565
        %3567 = vadd.xlane.f32.xlu0 %v3554
        %v3568 = vpop.xlane.xlu0 %3567
        %3569 = vadd.xlane.f32.xlu0 %v3555
        %v3570 = vpop.xlane.xlu0 %3569
        %3571 = vadd.xlane.f32.xlu0 %v3556
        %v3572 = vpop.xlane.xlu0 %3571
        %v3573 = vmul.f32 %v3558, %v2345
        %v3574 = vmul.f32 %v3560, %v2345
        %v3575 = vmul.f32 %v3562, %v2345
        %v3576 = vmul.f32 %v3564, %v2345
        %v3577 = vmul.f32 %v3566, %v2345
        %v3578 = vmul.f32 %v3568, %v2345
        %v3579 = vmul.f32 %v3570, %v2345
        %v3580 = vmul.f32 %v3572, %v2345
        %v3581 = vadd.f32 %v3573, 1e-12
        %v3582 = vadd.f32 %v3574, 1e-12
        %v3583 = vadd.f32 %v3575, 1e-12
        %v3584 = vadd.f32 %v3576, 1e-12
        %v3585 = vadd.f32 %v3577, 1e-12
        %v3586 = vadd.f32 %v3578, 1e-12
        %v3587 = vadd.f32 %v3579, 1e-12
        %v3588 = vadd.f32 %v3580, 1e-12
        %v3589 = vrsqrt.pop %v3581
        %v3590 = vrsqrt.pop %v3582
        %v3591 = vrsqrt.pop %v3583
        %v3592 = vrsqrt.pop %v3584
        %v3593 = vrsqrt.pop %v3585
        %v3594 = vrsqrt.pop %v3586
        %v3595 = vrsqrt.pop %v3587
        %v3596 = vrsqrt.pop %v3588
        %v3597 = vmul.f32 %v3541, %v3589
        %v3598 = vmul.f32 %v3542, %v3590
        %v3599 = vmul.f32 %v3543, %v3591
        %v3600 = vmul.f32 %v3544, %v3592
        %v3601 = vmul.f32 %v3545, %v3593
        %v3602 = vmul.f32 %v3546, %v3594
        %v3603 = vmul.f32 %v3547, %v3595
        %v3604 = vmul.f32 %v3548, %v3596
        %v3606 = vlaneseq
        %v3607 = vshrl.u32 %v3606, 7
        %v3608 = vsub.s32 0, %v3607
        %v3609 = vrot.slane %v3515, %v3608
        %v3611 = vmul.f32 %v3597, %v3609
        %v3612 = vmul.f32 %v3598, %v3609
        %v3613 = vmul.f32 %v3599, %v3609
        %v3614 = vmul.f32 %v3600, %v3609
        %v3615 = vmul.f32 %v3601, %v3609
        %v3616 = vmul.f32 %v3602, %v3609
        %v3617 = vmul.f32 %v3603, %v3609
        %v3618 = vmul.f32 %v3604, %v3609
        %v3620 = vlaneseq
        %v3621 = vshrl.u32 %v3620, 7
        %v3622 = vsub.s32 0, %v3621
        %v3623 = vrot.slane %v3516, %v3622
        %v3625 = vadd.f32 %v3611, %v3623
        %v3626 = vadd.f32 %v3612, %v3623
        %v3627 = vadd.f32 %v3613, %v3623
        %v3628 = vadd.f32 %v3614, %v3623
        %v3629 = vadd.f32 %v3615, %v3623
        %v3630 = vadd.f32 %v3616, %v3623
        %v3631 = vadd.f32 %v3617, %v3623
        %v3632 = vadd.f32 %v3618, %v3623
        %3633 = vst [vmem:[%s784] sm:$0xff] %v3625
        %3634 = vst [vmem:[%s784 + $0x8] sm:$0xff] %v3626
        %3635 = vst [vmem:[%s784 + $0x10] sm:$0xff] %v3627
        %3636 = vst [vmem:[%s784 + $0x18] sm:$0xff] %v3628
        %3637 = vst [vmem:[%s784 + $0x20] sm:$0xff] %v3629
        %3638 = vst [vmem:[%s784 + $0x28] sm:$0xff] %v3630
        %3639 = vst [vmem:[%s784 + $0x30] sm:$0xff] %v3631
        %3640 = vst [vmem:[%s784 + $0x38] sm:$0xff] %v3632
        %p3641 = scmp.eq.s32.totalorder %s42, 1
        // Predicated region
        $region105: #{tpu_custom_call.1} parent=75 // pred_check
          %p3642 = pneg %p3641
        $region106: #{tpu_custom_call.1} parent=75 // pred_check_branch
          %3644 = sbr.rel (%p3642) target = $region108
        $region107: #{tpu_custom_call.1} parent=75 // pred_region
          %v3645 = vadd.f32 %v3625, %v3626
          %v3646 = vrot.slane %v3645, 4
          %v3647 = vadd.f32 %v3645, %v3646
          %v3648 = vrot.slane %v3647, 2
          %v3649 = vadd.f32 %v3647, %v3648
          %v3650 = vrot.slane %v3649, 1
          %v3651 = vadd.f32 %v3649, %v3650
          %v3652 = vadd.f32 %v3627, %v3628
          %v3653 = vrot.slane %v3652, 4
          %v3654 = vadd.f32 %v3652, %v3653
          %v3655 = vrot.slane %v3654, 2
          %v3656 = vadd.f32 %v3654, %v3655
          %v3657 = vrot.slane %v3656, 1
          %v3658 = vadd.f32 %v3656, %v3657
          %v3659 = vadd.f32 %v3629, %v3630
          %v3660 = vrot.slane %v3659, 4
          %v3661 = vadd.f32 %v3659, %v3660
          %v3662 = vrot.slane %v3661, 2
          %v3663 = vadd.f32 %v3661, %v3662
          %v3664 = vrot.slane %v3663, 1
          %v3665 = vadd.f32 %v3663, %v3664
          %v3666 = vadd.f32 %v3631, %v3632
          %v3667 = vrot.slane %v3666, 4
          %v3668 = vadd.f32 %v3666, %v3667
          %v3669 = vrot.slane %v3668, 2
          %v3670 = vadd.f32 %v3668, %v3669
          %v3671 = vrot.slane %v3670, 1
          %v3672 = vadd.f32 %v3670, %v3671
          %v3673 = vrcp.pop 16.0
          %v3674 = vmul.f32 %v3651, %v3673
          %v3675 = vmul.f32 %v3658, %v3673
          %v3676 = vmul.f32 %v3665, %v3673
          %v3677 = vmul.f32 %v3672, %v3673
          %3678 = vst [vmem:[%s791] sm:$0x1] %v3674
          %3679 = vst [vmem:[%s791 + $0x1] sm:$0x1] %v3675
          %3680 = vst [vmem:[%s791 + $0x2] sm:$0x1] %v3676
          %3681 = vst [vmem:[%s791 + $0x3] sm:$0x1] %v3677
        $region108: #{tpu_custom_call.1} parent=75 // pred_fallthru
          _
        %s3682 = sand.u32 %s416, 1
        %s3683 = scalar_lea.sflag [#allocation4], %s3682
        %s3684 = sand.u32 %s416, 1
        %s3685 = smul.addr %s3684, 64
        %s3686 = scalar_lea.vmem [#allocation11], %s3685
        %s3687 = sand.u32 %s442, 1
        %s3688 = scalar_lea.sflag [#allocation13], %s3687
        %s3689 = sand.u32 %s442, 1
        %s3690 = smul.addr %s3689, 4
        %s3691 = scalar_lea.vmem [#allocation12], %s3690
        // Predicated region
        $region109: #{tpu_custom_call.1} parent=75 // pred_check
          %p3692 = pneg %p426
        $region110: #{tpu_custom_call.1} parent=75 // pred_check_branch
          %3694 = sbr.rel (%p3692) target = $region112
        $region111: #{tpu_custom_call.1} parent=75 // pred_region
          %s3695 = smul.u32 4, %s41
          %s3697 = ssub.s32 1024, 1024
          %3698 = vsyncadd %s3683, %s3697
          %s3699 = smul.addr %s3695, 2
          %s3700 = smul.addr %s3699, 128
          %s3701 = scalar_lea.hbm %s14, %s3700
          %s3702 = sshll.u32 %s3686, 4
          %s3703 = int_to_ptr.vmem [resolvable:$true] %s3702
          %3708 = dma.vmem_to_hbm [thread:$0]  %s3703, 1024, %s3701, %s3683, 128, 128, 8
        $region112: #{tpu_custom_call.1} parent=75 // pred_fallthru
          _
        // Predicated region
        $region113: #{tpu_custom_call.1} parent=75 // pred_check
          %p3709 = pneg %p452
        $region114: #{tpu_custom_call.1} parent=75 // pred_check_branch
          %3711 = sbr.rel (%p3709) target = $region116
        $region115: #{tpu_custom_call.1} parent=75 // pred_region
          %s3712 = smul.u32 4, %s41
          %s3714 = ssub.s32 64, 64
          %3715 = vsyncadd %s3688, %s3714
          %s3716 = smul.addr %s3712, 16
          %s3717 = scalar_lea.hbm %s15, %s3716
          %s3718 = sshll.u32 %s3691, 4
          %s3719 = int_to_ptr.vmem [resolvable:$true] %s3718
          %3724 = dma.vmem_to_hbm [thread:$0]  %s3719, 64, %s3717, %s3688, 16, 16, 1
        $region116: #{tpu_custom_call.1} parent=75 // pred_fallthru
          _
      $region76: #{tpu_custom_call.1} parent=5 // pred_fallthru
        _
      %p3725 = scmp.le.s32.totalorder 2, %s32
      // Predicated region
      $region117: #{tpu_custom_call.1} parent=5 // pred_check
        %p3726 = pneg %p3725
      $region118: #{tpu_custom_call.1} parent=5 // pred_check_branch
        %3728 = sbr.rel (%p3726) target = $region120
      $region119: #{tpu_custom_call.1} parent=5 // pred_region
        %s3729 = ssub.s32 %s32, 2
        // Predicated region
        $region121: #{tpu_custom_call.1} parent=119 // pred_check
          %p3730 = pneg %p432
        $region122: #{tpu_custom_call.1} parent=119 // pred_check_branch
          %3732 = sbr.rel (%p3730) target = $region124
        $region123: #{tpu_custom_call.1} parent=119 // pred_region
          %s3733 = sand.u32 %s417, 1
          %s3734 = scalar_lea.sflag [#allocation4], %s3733
          %s3735 = sand.u32 %s417, 1
          %s3736 = smul.addr %s3735, 64
          %s3737 = scalar_lea.vmem [#allocation11], %s3736
          %3738 = dma.done %s3734, 1024
        $region124: #{tpu_custom_call.1} parent=119 // pred_fallthru
          _
        // Predicated region
        $region125: #{tpu_custom_call.1} parent=119 // pred_check
          %p3739 = pneg %p458
        $region126: #{tpu_custom_call.1} parent=119 // pred_check_branch
          %3741 = sbr.rel (%p3739) target = $region128
        $region127: #{tpu_custom_call.1} parent=119 // pred_region
          %s3742 = sand.u32 %s443, 1
          %s3743 = scalar_lea.sflag [#allocation13], %s3742
          %s3744 = sand.u32 %s443, 1
          %s3745 = smul.addr %s3744, 4
          %s3746 = scalar_lea.vmem [#allocation12], %s3745
          %3747 = dma.done %s3743, 64
        $region128: #{tpu_custom_call.1} parent=119 // pred_fallthru
          _
      $region120: #{tpu_custom_call.1} parent=5 // pred_fallthru
        _
    $region6: #{tpu_custom_call.1} parent=1 // loop_footer
      %s36 = sadd.s32 1, %s32
    $region7: #{tpu_custom_call.1} parent=1 // loop_footer_branch
      %31 = sbr.rel target = $region3
    $region8: #{tpu_custom_call.1} parent=1 // loop_exit
      _
    %3748 = vsyncpa [#allocation3], 1
    %s3749 = scalar_lea.sflag [#allocation3], 1
    %3750 = vsyncpa %s3749, 1
    %3751 = vsyncpa [#allocation6], 1
    %3752 = vsyncpa [#allocation4], 1
    %s3753 = scalar_lea.sflag [#allocation4], 1
    %3754 = vsyncpa %s3753, 1
    %3755 = vsyncpa [#allocation13], 1
    %s3756 = scalar_lea.sflag [#allocation13], 1
    %3757 = vsyncpa %s3756, 1

</llo_original>
